<compile_context>
chip_gen: v5e
topology: v5e:2x2
jax: 0.10.0
libtpu: 0.0.40
codegen_flags: <defaults>
</compile_context>

<pallas_src>
import functools

import jax
import jax.numpy as jnp
from jax import lax
from jax.experimental import pallas as pl
from jax.experimental.pallas import tpu as pltpu


def _basic_block_kernel(x_ref, w_ref, scale_ref, shift_ref, o_ref, col_ref,
                        *, D, H, W, C, Cout):
    """One grid step processes one batch element.

    x_ref     : (D, H, W, C)  f32      input (NDHWC, batch dim squeezed); also the residual
    w_ref     : (3, 3, 3*C, Cout) bf16 conv2 weight; w_ref[kd, kh] is the (3C, Cout)
                                       matrix for the 3 fused kw taps (kw-major, then Cin)
    scale_ref : (1, C) f32             folded BN scale = gamma / sqrt(var + eps)
    shift_ref : (1, C) f32             folded BN shift = beta - mean * scale
    o_ref     : (D, H, W, Cout) f32    output
    col_ref   : (D+2, H+2, W, 3*C)     kw-fused im2col of the padded activation (bf16)
    """
    f32 = jnp.float32
    cdt = col_ref.dtype
    scale = scale_ref[...]                       # (1, C), broadcasts over the lane dim
    shift = shift_ref[...]

    # Depth-halo rows of the im2col.  The interior rows (1..D) are fully rewritten
    # below and carry their own H-halo zeros, so this is the only standalone halo
    # store.  Done per grid step (not gated on program_id==0) so it stays correct
    # when the "parallel" batch axis is sharded across TensorCores.
    zslab = jnp.zeros((H + 2, W, 3 * C), cdt)
    col_ref[0] = zslab
    col_ref[D + 1] = zslab

    # ---- phase 1: inference BN + ReLU one depth row at a time (f32 on the VPU),
    #      cast to bf16, build the 3 kw taps in registers (sublane shifts on the
    #      XLU, zero boundary columns), and store one contiguous (H+2, W, 3C)
    #      slab per depth row (H-halo zeros folded into the same store). ----
    def build_row(i, carry):
        a = jnp.maximum(x_ref[i] * scale + shift, 0.0)            # (H, W, C) f32
        a16 = a.astype(cdt)
        zc = jnp.zeros((H, 1, C), cdt)
        tap0 = jnp.concatenate([zc, a16[:, :W - 1, :]], axis=1)   # kw=0: a_pad[., w]
        tap2 = jnp.concatenate([a16[:, 1:, :], zc], axis=1)       # kw=2: a_pad[., w+2]
        slab = jnp.concatenate([tap0, a16, tap2], axis=-1)        # (H, W, 3C)
        zrow = jnp.zeros((1, W, 3 * C), cdt)
        col_ref[i + 1] = jnp.concatenate([zrow, slab, zrow], axis=0)   # (H+2, W, 3C)
        return carry

    lax.fori_loop(0, D, build_row, 0)

    # ---- phase 2: output-stationary conv, 2 output depth slabs per pass:
    #      9 MXU dots with M = nd*H*W (=128), K = 3*C, bf16 operands, f32
    #      register accumulator (16 vregs); residual add + store fused. ----
    def compute_slab(d, nd):
        acc = jnp.zeros((nd * H * W, Cout), f32)
        for kd in range(3):
            for kh in range(3):
                lhs = col_ref[pl.ds(d + kd, nd), kh:kh + H].reshape(nd * H * W, 3 * C)
                acc = acc + jnp.dot(lhs, w_ref[kd, kh], preferred_element_type=f32)
        # identity shortcut: residual is the pre-BN input (f32)
        res = x_ref[pl.ds(d, nd)].reshape(nd * H * W, C)
        out = (acc + res).reshape(nd, H, W, Cout)
        o_ref[pl.ds(d, nd)] = out.astype(o_ref.dtype)

    def compute_pair(p, carry):
        compute_slab(p * 2, 2)
        return carry

    lax.fori_loop(0, D // 2, compute_pair, 0)
    if D % 2 == 1:                                # static tail for odd D
        compute_slab(D - 1, 1)


def basic_block_forward(x_ncdhw, conv2_w, gamma, beta, run_mean, run_var,
                        eps=1e-5, mxu_dtype=jnp.bfloat16):
    """x_ncdhw: (N, C, D, H, W) float32 (PyTorch convention). Returns same layout.

    mxu_dtype: MXU operand / im2col dtype (bf16 recommended on v5e/v6e/v7x;
               accumulation and the residual add are always f32).
    """
    N, C, D, H, W = x_ncdhw.shape
    Cout = conv2_w.shape[0]
    assert C == Cout, "literal reference forward requires in_ch == out_ch"
    assert conv2_w.shape[2:] == (3, 3, 3), "kernel fixed to 3x3x3 (module default)"
    # Fast-path layout guards (lane-dense minor dims, tile-preserving reshapes).
    assert C % 128 == 0, "C must be a multiple of 128 (lane-dense channel dim)"
    assert W % 8 == 0, "W must be a multiple of 8 (sublane-tile-preserving reshape)"

    # glue: layout conversion + parameter folding (plain JAX, outside the kernel)
    x = jnp.transpose(x_ncdhw, (0, 2, 3, 4, 1)).astype(jnp.float32)        # NDHWC
    # (Cout, Cin, kD, kH, kW) -> (kD, kH, kW, Cin, Cout) -> (3, 3, 3*C, Cout)
    # Cast to the MXU dtype HERE (hoisted out of the kernel loops).
    w = jnp.transpose(conv2_w, (2, 3, 4, 1, 0)).reshape(3, 3, 3 * C, Cout)
    w = w.astype(mxu_dtype)
    inv_std = 1.0 / jnp.sqrt(run_var + eps)
    scale = (gamma * inv_std).reshape(1, C).astype(jnp.float32)
    shift = (beta - run_mean * gamma * inv_std).reshape(1, C).astype(jnp.float32)

    kernel = functools.partial(_basic_block_kernel, D=D, H=H, W=W, C=C, Cout=Cout)
    out_ndhwc = pl.pallas_call(
        kernel,
        out_shape=jax.ShapeDtypeStruct((N, D, H, W, Cout), jnp.float32),
        grid=(N,),                                     # one batch element per step
        in_specs=[
            pl.BlockSpec((None, D, H, W, C), lambda n: (n, 0, 0, 0, 0)),
            pl.BlockSpec((3, 3, 3 * C, Cout), lambda n: (0, 0, 0, 0)),
            pl.BlockSpec((1, C), lambda n: (0, 0)),
            pl.BlockSpec((1, C), lambda n: (0, 0)),
        ],
        out_specs=pl.BlockSpec((None, D, H, W, Cout), lambda n: (n, 0, 0, 0, 0)),
        scratch_shapes=[
            pltpu.VMEM((D + 2, H + 2, W, 3 * C), mxu_dtype),   # kw-fused im2col
        ],
        compiler_params=pltpu.CompilerParams(
            dimension_semantics=("parallel",)),                # batch is independent
    )(x, w, scale, shift)

    return jnp.transpose(out_ndhwc, (0, 4, 1, 2, 3))                       # NCDHW


def basic_block_reference(x, conv2_w, gamma, beta, run_mean, run_var,
                          eps=1e-5, operand_dtype=None):
    """Pure-JAX reference (same semantics). If operand_dtype is set, the conv
    operands (activation after BN+ReLU, and the weight) are rounded to that dtype
    to match the kernel's MXU operand precision (accumulation stays f32)."""
    inv_std = 1.0 / jnp.sqrt(run_var + eps)
    scale = (gamma * inv_std)[None, :, None, None, None]
    shift = (beta - run_mean * gamma * inv_std)[None, :, None, None, None]
    a = jnp.maximum(x * scale + shift, 0.0)
    w = conv2_w
    if operand_dtype is not None:
        a = a.astype(operand_dtype).astype(jnp.float32)
        w = w.astype(operand_dtype).astype(jnp.float32)
    y = lax.conv_general_dilated(
        a, w, window_strides=(1, 1, 1),
        padding=((1, 1), (1, 1), (1, 1)),
        dimension_numbers=("NCDHW", "OIDHW", "NCDHW"),
        precision=lax.Precision.HIGHEST)
    return y + x


if __name__ == "__main__":
    key = jax.random.PRNGKey(0)
    k1, k2, k3, k4, k5 = jax.random.split(key, 5)

    # batch=4 (>=2 grid steps per TensorCore), channels=128 (lane-dense), spatial 8^3
    N, C, D, H, W = 4, 128, 8, 8, 8
    x = jax.random.normal(k1, (N, C, D, H, W), jnp.float32)

    # conv2 weight (out_ch, in_ch, kD, kH, kW), bias=False
    conv2_w = 0.1 * jax.random.normal(k2, (C, C, 3, 3, 3), jnp.float32)
    # BatchNorm3d(in_ch) params + running stats (inference form)
    gamma = 1.0 + 0.1 * jax.random.normal(k3, (C,), jnp.float32)
    beta = 0.1 * jax.random.normal(k4, (C,), jnp.float32)
    run_mean = 0.1 * jax.random.normal(k5, (C,), jnp.float32)
    run_var = jnp.ones((C,), jnp.float32)

    out = basic_block_forward(x, conv2_w, gamma, beta, run_mean, run_var)
    out = jax.block_until_ready(out)

    # Compare against a reference whose conv operands are rounded to bf16 (same
    # as the kernel's MXU operands; accumulation is f32 in both).
    ref = basic_block_reference(x, conv2_w, gamma, beta, run_mean, run_var,
                                operand_dtype=jnp.bfloat16)
    assert out.shape == (N, C, D, H, W)
    max_err = float(jnp.max(jnp.abs(out - ref)))
    assert jnp.allclose(out, ref, rtol=5e-3, atol=5e-3), f"max_err={max_err}"

    print("KERNEL_OK")
</pallas_src>

<mosaic_0001>
module attributes {stable_mosaic.version = 11 : i64} {
  func.func @_basic_block_kernel(%arg0: i32, %arg1: memref<1x8x8x8x128xf32, #tpu.memory_space<vmem>>, %arg2: memref<3x3x384x128xbf16, #tpu.memory_space<vmem>>, %arg3: memref<1x128xf32, #tpu.memory_space<vmem>>, %arg4: memref<1x128xf32, #tpu.memory_space<vmem>>, %arg5: memref<1x8x8x8x128xf32, #tpu.memory_space<vmem>>, %arg6: memref<10x10x8x384xbf16, #tpu.memory_space<vmem>>) attributes {dimension_semantics = [#tpu.dimension_semantics<parallel>], iteration_bounds = array<i64: 4>, scalar_prefetch = 0 : i64, scratch_operands = 1 : i64, tpu.core_type = #tpu.core_type<tc>, window_params = [{transform_indices = @transform_0, window_bounds = array<i64: 1, 8, 8, 8, 128>}, {pipeline_mode = #tpu.pipeline_mode<synchronous>, transform_indices = @transform_1, window_bounds = array<i64: 3, 3, 384, 128>}, {pipeline_mode = #tpu.pipeline_mode<synchronous>, transform_indices = @transform_2, window_bounds = array<i64: 1, 128>}, {pipeline_mode = #tpu.pipeline_mode<synchronous>, transform_indices = @transform_3, window_bounds = array<i64: 1, 128>}, {transform_indices = @transform_4, window_bounds = array<i64: 1, 8, 8, 8, 128>}]} {
    %c0 = arith.constant 0 : index
    %c0_0 = arith.constant 0 : index
    %0 = vector.load %arg3[%c0, %c0_0] : memref<1x128xf32, #tpu.memory_space<vmem>>, vector<1x128xf32>
    %c0_1 = arith.constant 0 : index
    %c0_2 = arith.constant 0 : index
    %1 = vector.load %arg4[%c0_1, %c0_2] : memref<1x128xf32, #tpu.memory_space<vmem>>, vector<1x128xf32>
    %cst = arith.constant 0.000000e+00 : bf16
    %2 = vector.broadcast %cst : bf16 to vector<10x8x384xbf16>
    %c0_3 = arith.constant 0 : index
    %c0_4 = arith.constant 0 : index
    %c0_5 = arith.constant 0 : index
    %c0_6 = arith.constant 0 : index
    %3 = vector.load %arg6[%c0_3, %c0_4, %c0_5, %c0_6] : memref<10x10x8x384xbf16, #tpu.memory_space<vmem>>, vector<1x10x8x384xbf16>
    %4 = vector.shape_cast %3 : vector<1x10x8x384xbf16> to vector<10x8x384xbf16>
    %5 = vector.shape_cast %2 : vector<10x8x384xbf16> to vector<1x10x8x384xbf16>
    tpu.vector_store %arg6[%c0_3, %c0_4, %c0_5, %c0_6], %5 {strides = array<i32>} : memref<10x10x8x384xbf16, #tpu.memory_space<vmem>>, vector<1x10x8x384xbf16>,
    %c9 = arith.constant 9 : index
    %c0_7 = arith.constant 0 : index
    %c0_8 = arith.constant 0 : index
    %c0_9 = arith.constant 0 : index
    %6 = vector.load %arg6[%c9, %c0_7, %c0_8, %c0_9] : memref<10x10x8x384xbf16, #tpu.memory_space<vmem>>, vector<1x10x8x384xbf16>
    %7 = vector.shape_cast %6 : vector<1x10x8x384xbf16> to vector<10x8x384xbf16>
    %8 = vector.shape_cast %2 : vector<10x8x384xbf16> to vector<1x10x8x384xbf16>
    tpu.vector_store %arg6[%c9, %c0_7, %c0_8, %c0_9], %8 {strides = array<i32>} : memref<10x10x8x384xbf16, #tpu.memory_space<vmem>>, vector<1x10x8x384xbf16>,
    %c0_i32 = arith.constant 0 : i32
    %c8_i32 = arith.constant 8 : i32
    %9 = arith.addi %c0_i32, %c8_i32 : i32
    %c1_i32 = arith.constant 1 : i32
    scf.for %arg7 = %c0_i32 to %9 step %c1_i32  : i32 {
      %c0_14 = arith.constant 0 : index
      %11 = arith.index_cast %arg7 : i32 to index
      %c0_15 = arith.constant 0 : index
      %c0_16 = arith.constant 0 : index
      %c0_17 = arith.constant 0 : index
      %12 = vector.load %arg1[%c0_14, %11, %c0_15, %c0_16, %c0_17] : memref<1x8x8x8x128xf32, #tpu.memory_space<vmem>>, vector<1x1x8x8x128xf32>
      %13 = vector.shape_cast %12 : vector<1x1x8x8x128xf32> to vector<8x8x128xf32>
      %14 = vector.shape_cast %0 : vector<1x128xf32> to vector<1x1x128xf32>
      %15 = vector.broadcast %14 : vector<1x1x128xf32> to vector<8x8x128xf32>
      %16 = arith.mulf %13, %15 : vector<8x8x128xf32>
      %17 = vector.shape_cast %1 : vector<1x128xf32> to vector<1x1x128xf32>
      %18 = vector.broadcast %17 : vector<1x1x128xf32> to vector<8x8x128xf32>
      %19 = arith.addf %16, %18 : vector<8x8x128xf32>
      %cst_18 = arith.constant 0.000000e+00 : f32
      %20 = vector.broadcast %cst_18 : f32 to vector<8x8x128xf32>
      %21 = arith.maximumf %19, %20 : vector<8x8x128xf32>
      %22 = arith.truncf %21 : vector<8x8x128xf32> to vector<8x8x128xbf16>
      %cst_19 = arith.constant 0.000000e+00 : bf16
      %23 = vector.broadcast %cst_19 : bf16 to vector<8x1x128xbf16>
      %24 = vector.extract_strided_slice %22 {offsets = [0, 0, 0], sizes = [8, 7, 128], strides = [1, 1, 1]} : vector<8x8x128xbf16> to vector<8x7x128xbf16>
      %25 = tpu.concatenate %23, %24 in 1 : vector<8x1x128xbf16>, vector<8x7x128xbf16> -> vector<8x8x128xbf16>
      %26 = vector.extract_strided_slice %22 {offsets = [0, 1, 0], sizes = [8, 7, 128], strides = [1, 1, 1]} : vector<8x8x128xbf16> to vector<8x7x128xbf16>
      %27 = tpu.concatenate %26, %23 in 1 : vector<8x7x128xbf16>, vector<8x1x128xbf16> -> vector<8x8x128xbf16>
      %28 = tpu.concatenate %25, %22, %27 in 2 : vector<8x8x128xbf16>, vector<8x8x128xbf16>, vector<8x8x128xbf16> -> vector<8x8x384xbf16>
      %cst_20 = arith.constant 0.000000e+00 : bf16
      %29 = vector.broadcast %cst_20 : bf16 to vector<1x8x384xbf16>
      %30 = tpu.concatenate %29, %28, %29 in 0 : vector<1x8x384xbf16>, vector<8x8x384xbf16>, vector<1x8x384xbf16> -> vector<10x8x384xbf16>
      %c1_i32_21 = arith.constant 1 : i32
      %31 = arith.addi %arg7, %c1_i32_21 : i32
      %32 = arith.index_cast %31 : i32 to index
      %c0_22 = arith.constant 0 : index
      %c0_23 = arith.constant 0 : index
      %c0_24 = arith.constant 0 : index
      %33 = vector.load %arg6[%32, %c0_22, %c0_23, %c0_24] : memref<10x10x8x384xbf16, #tpu.memory_space<vmem>>, vector<1x10x8x384xbf16>
      %34 = vector.shape_cast %33 : vector<1x10x8x384xbf16> to vector<10x8x384xbf16>
      %35 = vector.shape_cast %30 : vector<10x8x384xbf16> to vector<1x10x8x384xbf16>
      tpu.vector_store %arg6[%32, %c0_22, %c0_23, %c0_24], %35 {strides = array<i32>} : memref<10x10x8x384xbf16, #tpu.memory_space<vmem>>, vector<1x10x8x384xbf16>,
    }
    %c8_i32_10 = arith.constant 8 : i32
    %c0_i32_11 = arith.constant 0 : i32
    %c4_i32 = arith.constant 4 : i32
    %10 = arith.addi %c0_i32_11, %c4_i32 : i32
    %c1_i32_12 = arith.constant 1 : i32
    scf.for %arg7 = %c0_i32_11 to %10 step %c1_i32_12  : i32 {
      %c2_i32 = arith.constant 2 : i32
      %11 = arith.muli %arg7, %c2_i32 : i32
      %cst_14 = arith.constant 0.000000e+00 : f32
      %12 = vector.broadcast %cst_14 : f32 to vector<128x128xf32>
      %c0_i32_15 = arith.constant 0 : i32
      %13 = arith.addi %11, %c0_i32_15 : i32
      %14 = arith.index_cast %13 : i32 to index
      %c0_16 = arith.constant 0 : index
      %c0_17 = arith.constant 0 : index
      %c0_18 = arith.constant 0 : index
      %15 = vector.load %arg6[%14, %c0_16, %c0_17, %c0_18] : memref<10x10x8x384xbf16, #tpu.memory_space<vmem>>, vector<2x8x8x384xbf16>
      %16 = vector.shape_cast %15 : vector<2x8x8x384xbf16> to vector<128x384xbf16>
      %c0_19 = arith.constant 0 : index
      %c0_20 = arith.constant 0 : index
      %c0_21 = arith.constant 0 : index
      %c0_22 = arith.constant 0 : index
      %17 = vector.load %arg2[%c0_19, %c0_20, %c0_21, %c0_22] : memref<3x3x384x128xbf16, #tpu.memory_space<vmem>>, vector<1x1x384x128xbf16>
      %18 = vector.shape_cast %17 : vector<1x1x384x128xbf16> to vector<384x128xbf16>
      %cst_23 = arith.constant dense<0.000000e+00> : vector<128x128xf32>
      %19 = tpu.matmul %16, %18, %cst_23 {dimension_numbers = #tpu.dot_dimension_numbers<[1], [0], [0], [1], [0, 0, 1, 1], [], []>} : vector<128x384xbf16>, vector<384x128xbf16>, vector<128x128xf32> -> vector<128x128xf32>
      %20 = arith.addf %12, %19 : vector<128x128xf32>
      %c0_i32_24 = arith.constant 0 : i32
      %21 = arith.addi %11, %c0_i32_24 : i32
      %22 = arith.index_cast %21 : i32 to index
      %c1 = arith.constant 1 : index
      %c0_25 = arith.constant 0 : index
      %c0_26 = arith.constant 0 : index
      %23 = vector.load %arg6[%22, %c1, %c0_25, %c0_26] : memref<10x10x8x384xbf16, #tpu.memory_space<vmem>>, vector<2x8x8x384xbf16>
      %24 = vector.shape_cast %23 : vector<2x8x8x384xbf16> to vector<128x384xbf16>
      %c0_27 = arith.constant 0 : index
      %c1_28 = arith.constant 1 : index
      %c0_29 = arith.constant 0 : index
      %c0_30 = arith.constant 0 : index
      %25 = vector.load %arg2[%c0_27, %c1_28, %c0_29, %c0_30] : memref<3x3x384x128xbf16, #tpu.memory_space<vmem>>, vector<1x1x384x128xbf16>
      %26 = vector.shape_cast %25 : vector<1x1x384x128xbf16> to vector<384x128xbf16>
      %cst_31 = arith.constant dense<0.000000e+00> : vector<128x128xf32>
      %27 = tpu.matmul %24, %26, %cst_31 {dimension_numbers = #tpu.dot_dimension_numbers<[1], [0], [0], [1], [0, 0, 1, 1], [], []>} : vector<128x384xbf16>, vector<384x128xbf16>, vector<128x128xf32> -> vector<128x128xf32>
      %28 = arith.addf %20, %27 : vector<128x128xf32>
      %c0_i32_32 = arith.constant 0 : i32
      %29 = arith.addi %11, %c0_i32_32 : i32
      %30 = arith.index_cast %29 : i32 to index
      %c2 = arith.constant 2 : index
      %c0_33 = arith.constant 0 : index
      %c0_34 = arith.constant 0 : index
      %31 = vector.load %arg6[%30, %c2, %c0_33, %c0_34] : memref<10x10x8x384xbf16, #tpu.memory_space<vmem>>, vector<2x8x8x384xbf16>
      %32 = vector.shape_cast %31 : vector<2x8x8x384xbf16> to vector<128x384xbf16>
      %c0_35 = arith.constant 0 : index
      %c2_36 = arith.constant 2 : index
      %c0_37 = arith.constant 0 : index
      %c0_38 = arith.constant 0 : index
      %33 = vector.load %arg2[%c0_35, %c2_36, %c0_37, %c0_38] : memref<3x3x384x128xbf16, #tpu.memory_space<vmem>>, vector<1x1x384x128xbf16>
      %34 = vector.shape_cast %33 : vector<1x1x384x128xbf16> to vector<384x128xbf16>
      %cst_39 = arith.constant dense<0.000000e+00> : vector<128x128xf32>
      %35 = tpu.matmul %32, %34, %cst_39 {dimension_numbers = #tpu.dot_dimension_numbers<[1], [0], [0], [1], [0, 0, 1, 1], [], []>} : vector<128x384xbf16>, vector<384x128xbf16>, vector<128x128xf32> -> vector<128x128xf32>
      %36 = arith.addf %28, %35 : vector<128x128xf32>
      %c1_i32_40 = arith.constant 1 : i32
      %37 = arith.addi %11, %c1_i32_40 : i32
      %38 = arith.index_cast %37 : i32 to index
      %c0_41 = arith.constant 0 : index
      %c0_42 = arith.constant 0 : index
      %c0_43 = arith.constant 0 : index
      %39 = vector.load %arg6[%38, %c0_41, %c0_42, %c0_43] : memref<10x10x8x384xbf16, #tpu.memory_space<vmem>>, vector<2x8x8x384xbf16>
      %40 = vector.shape_cast %39 : vector<2x8x8x384xbf16> to vector<128x384xbf16>
      %c1_44 = arith.constant 1 : index
      %c0_45 = arith.constant 0 : index
      %c0_46 = arith.constant 0 : index
      %c0_47 = arith.constant 0 : index
      %41 = vector.load %arg2[%c1_44, %c0_45, %c0_46, %c0_47] : memref<3x3x384x128xbf16, #tpu.memory_space<vmem>>, vector<1x1x384x128xbf16>
      %42 = vector.shape_cast %41 : vector<1x1x384x128xbf16> to vector<384x128xbf16>
      %cst_48 = arith.constant dense<0.000000e+00> : vector<128x128xf32>
      %43 = tpu.matmul %40, %42, %cst_48 {dimension_numbers = #tpu.dot_dimension_numbers<[1], [0], [0], [1], [0, 0, 1, 1], [], []>} : vector<128x384xbf16>, vector<384x128xbf16>, vector<128x128xf32> -> vector<128x128xf32>
      %44 = arith.addf %36, %43 : vector<128x128xf32>
      %c1_i32_49 = arith.constant 1 : i32
      %45 = arith.addi %11, %c1_i32_49 : i32
      %46 = arith.index_cast %45 : i32 to index
      %c1_50 = arith.constant 1 : index
      %c0_51 = arith.constant 0 : index
      %c0_52 = arith.constant 0 : index
      %47 = vector.load %arg6[%46, %c1_50, %c0_51, %c0_52] : memref<10x10x8x384xbf16, #tpu.memory_space<vmem>>, vector<2x8x8x384xbf16>
      %48 = vector.shape_cast %47 : vector<2x8x8x384xbf16> to vector<128x384xbf16>
      %c1_53 = arith.constant 1 : index
      %c1_54 = arith.constant 1 : index
      %c0_55 = arith.constant 0 : index
      %c0_56 = arith.constant 0 : index
      %49 = vector.load %arg2[%c1_53, %c1_54, %c0_55, %c0_56] : memref<3x3x384x128xbf16, #tpu.memory_space<vmem>>, vector<1x1x384x128xbf16>
      %50 = vector.shape_cast %49 : vector<1x1x384x128xbf16> to vector<384x128xbf16>
      %cst_57 = arith.constant dense<0.000000e+00> : vector<128x128xf32>
      %51 = tpu.matmul %48, %50, %cst_57 {dimension_numbers = #tpu.dot_dimension_numbers<[1], [0], [0], [1], [0, 0, 1, 1], [], []>} : vector<128x384xbf16>, vector<384x128xbf16>, vector<128x128xf32> -> vector<128x128xf32>
      %52 = arith.addf %44, %51 : vector<128x128xf32>
      %c1_i32_58 = arith.constant 1 : i32
      %53 = arith.addi %11, %c1_i32_58 : i32
      %54 = arith.index_cast %53 : i32 to index
      %c2_59 = arith.constant 2 : index
      %c0_60 = arith.constant 0 : index
      %c0_61 = arith.constant 0 : index
      %55 = vector.load %arg6[%54, %c2_59, %c0_60, %c0_61] : memref<10x10x8x384xbf16, #tpu.memory_space<vmem>>, vector<2x8x8x384xbf16>
      %56 = vector.shape_cast %55 : vector<2x8x8x384xbf16> to vector<128x384xbf16>
      %c1_62 = arith.constant 1 : index
      %c2_63 = arith.constant 2 : index
      %c0_64 = arith.constant 0 : index
      %c0_65 = arith.constant 0 : index
      %57 = vector.load %arg2[%c1_62, %c2_63, %c0_64, %c0_65] : memref<3x3x384x128xbf16, #tpu.memory_space<vmem>>, vector<1x1x384x128xbf16>
      %58 = vector.shape_cast %57 : vector<1x1x384x128xbf16> to vector<384x128xbf16>
      %cst_66 = arith.constant dense<0.000000e+00> : vector<128x128xf32>
      %59 = tpu.matmul %56, %58, %cst_66 {dimension_numbers = #tpu.dot_dimension_numbers<[1], [0], [0], [1], [0, 0, 1, 1], [], []>} : vector<128x384xbf16>, vector<384x128xbf16>, vector<128x128xf32> -> vector<128x128xf32>
      %60 = arith.addf %52, %59 : vector<128x128xf32>
      %c2_i32_67 = arith.constant 2 : i32
      %61 = arith.addi %11, %c2_i32_67 : i32
      %62 = arith.index_cast %61 : i32 to index
      %c0_68 = arith.constant 0 : index
      %c0_69 = arith.constant 0 : index
      %c0_70 = arith.constant 0 : index
      %63 = vector.load %arg6[%62, %c0_68, %c0_69, %c0_70] : memref<10x10x8x384xbf16, #tpu.memory_space<vmem>>, vector<2x8x8x384xbf16>
      %64 = vector.shape_cast %63 : vector<2x8x8x384xbf16> to vector<128x384xbf16>
      %c2_71 = arith.constant 2 : index
      %c0_72 = arith.constant 0 : index
      %c0_73 = arith.constant 0 : index
      %c0_74 = arith.constant 0 : index
      %65 = vector.load %arg2[%c2_71, %c0_72, %c0_73, %c0_74] : memref<3x3x384x128xbf16, #tpu.memory_space<vmem>>, vector<1x1x384x128xbf16>
      %66 = vector.shape_cast %65 : vector<1x1x384x128xbf16> to vector<384x128xbf16>
      %cst_75 = arith.constant dense<0.000000e+00> : vector<128x128xf32>
      %67 = tpu.matmul %64, %66, %cst_75 {dimension_numbers = #tpu.dot_dimension_numbers<[1], [0], [0], [1], [0, 0, 1, 1], [], []>} : vector<128x384xbf16>, vector<384x128xbf16>, vector<128x128xf32> -> vector<128x128xf32>
      %68 = arith.addf %60, %67 : vector<128x128xf32>
      %c2_i32_76 = arith.constant 2 : i32
      %69 = arith.addi %11, %c2_i32_76 : i32
      %70 = arith.index_cast %69 : i32 to index
      %c1_77 = arith.constant 1 : index
      %c0_78 = arith.constant 0 : index
      %c0_79 = arith.constant 0 : index
      %71 = vector.load %arg6[%70, %c1_77, %c0_78, %c0_79] : memref<10x10x8x384xbf16, #tpu.memory_space<vmem>>, vector<2x8x8x384xbf16>
      %72 = vector.shape_cast %71 : vector<2x8x8x384xbf16> to vector<128x384xbf16>
      %c2_80 = arith.constant 2 : index
      %c1_81 = arith.constant 1 : index
      %c0_82 = arith.constant 0 : index
      %c0_83 = arith.constant 0 : index
      %73 = vector.load %arg2[%c2_80, %c1_81, %c0_82, %c0_83] : memref<3x3x384x128xbf16, #tpu.memory_space<vmem>>, vector<1x1x384x128xbf16>
      %74 = vector.shape_cast %73 : vector<1x1x384x128xbf16> to vector<384x128xbf16>
      %cst_84 = arith.constant dense<0.000000e+00> : vector<128x128xf32>
      %75 = tpu.matmul %72, %74, %cst_84 {dimension_numbers = #tpu.dot_dimension_numbers<[1], [0], [0], [1], [0, 0, 1, 1], [], []>} : vector<128x384xbf16>, vector<384x128xbf16>, vector<128x128xf32> -> vector<128x128xf32>
      %76 = arith.addf %68, %75 : vector<128x128xf32>
      %c2_i32_85 = arith.constant 2 : i32
      %77 = arith.addi %11, %c2_i32_85 : i32
      %78 = arith.index_cast %77 : i32 to index
      %c2_86 = arith.constant 2 : index
      %c0_87 = arith.constant 0 : index
      %c0_88 = arith.constant 0 : index
      %79 = vector.load %arg6[%78, %c2_86, %c0_87, %c0_88] : memref<10x10x8x384xbf16, #tpu.memory_space<vmem>>, vector<2x8x8x384xbf16>
      %80 = vector.shape_cast %79 : vector<2x8x8x384xbf16> to vector<128x384xbf16>
      %c2_89 = arith.constant 2 : index
      %c2_90 = arith.constant 2 : index
      %c0_91 = arith.constant 0 : index
      %c0_92 = arith.constant 0 : index
      %81 = vector.load %arg2[%c2_89, %c2_90, %c0_91, %c0_92] : memref<3x3x384x128xbf16, #tpu.memory_space<vmem>>, vector<1x1x384x128xbf16>
      %82 = vector.shape_cast %81 : vector<1x1x384x128xbf16> to vector<384x128xbf16>
      %cst_93 = arith.constant dense<0.000000e+00> : vector<128x128xf32>
      %83 = tpu.matmul %80, %82, %cst_93 {dimension_numbers = #tpu.dot_dimension_numbers<[1], [0], [0], [1], [0, 0, 1, 1], [], []>} : vector<128x384xbf16>, vector<384x128xbf16>, vector<128x128xf32> -> vector<128x128xf32>
      %84 = arith.addf %76, %83 : vector<128x128xf32>
      %c0_94 = arith.constant 0 : index
      %85 = arith.index_cast %11 : i32 to index
      %c0_95 = arith.constant 0 : index
      %c0_96 = arith.constant 0 : index
      %c0_97 = arith.constant 0 : index
      %86 = vector.load %arg1[%c0_94, %85, %c0_95, %c0_96, %c0_97] : memref<1x8x8x8x128xf32, #tpu.memory_space<vmem>>, vector<1x2x8x8x128xf32>
      %87 = vector.shape_cast %86 : vector<1x2x8x8x128xf32> to vector<2x8x8x128xf32>
      %88 = vector.shape_cast %87 : vector<2x8x8x128xf32> to vector<128x128xf32>
      %89 = arith.addf %84, %88 : vector<128x128xf32>
      %90 = vector.shape_cast %89 : vector<128x128xf32> to vector<2x8x8x128xf32>
      %c0_98 = arith.constant 0 : index
      %91 = arith.index_cast %11 : i32 to index
      %c0_99 = arith.constant 0 : index
      %c0_100 = arith.constant 0 : index
      %c0_101 = arith.constant 0 : index
      %92 = vector.load %arg5[%c0_98, %91, %c0_99, %c0_100, %c0_101] : memref<1x8x8x8x128xf32, #tpu.memory_space<vmem>>, vector<1x2x8x8x128xf32>
      %93 = vector.shape_cast %92 : vector<1x2x8x8x128xf32> to vector<2x8x8x128xf32>
      %94 = vector.shape_cast %90 : vector<2x8x8x128xf32> to vector<1x2x8x8x128xf32>
      tpu.vector_store %arg5[%c0_98, %91, %c0_99, %c0_100, %c0_101], %94 {strides = array<i32>} : memref<1x8x8x8x128xf32, #tpu.memory_space<vmem>>, vector<1x2x8x8x128xf32>,
    }
    %c4_i32_13 = arith.constant 4 : i32
    return
  }
  func.func @transform_0(%arg0: i32) -> (i32, i32, i32, i32, i32) {
    %c0_i32 = arith.constant 0 : i32
    %c0_i32_0 = arith.constant 0 : i32
    %c0_i32_1 = arith.constant 0 : i32
    %c0_i32_2 = arith.constant 0 : i32
    %c0_i32_3 = arith.constant 0 : i32
    return %arg0, %c0_i32, %c0_i32_0, %c0_i32_1, %c0_i32_2 : i32, i32, i32, i32, i32
  }
  func.func @transform_1(%arg0: i32) -> (i32, i32, i32, i32) {
    %c0_i32 = arith.constant 0 : i32
    %c0_i32_0 = arith.constant 0 : i32
    %c0_i32_1 = arith.constant 0 : i32
    %c0_i32_2 = arith.constant 0 : i32
    %c0_i32_3 = arith.constant 0 : i32
    return %c0_i32, %c0_i32_0, %c0_i32_1, %c0_i32_2 : i32, i32, i32, i32
  }
  func.func @transform_2(%arg0: i32) -> (i32, i32) {
    %c0_i32 = arith.constant 0 : i32
    %c0_i32_0 = arith.constant 0 : i32
    %c0_i32_1 = arith.constant 0 : i32
    return %c0_i32, %c0_i32_0 : i32, i32
  }
  func.func @transform_3(%arg0: i32) -> (i32, i32) {
    %c0_i32 = arith.constant 0 : i32
    %c0_i32_0 = arith.constant 0 : i32
    %c0_i32_1 = arith.constant 0 : i32
    return %c0_i32, %c0_i32_0 : i32, i32
  }
  func.func @transform_4(%arg0: i32) -> (i32, i32, i32, i32, i32) {
    %c0_i32 = arith.constant 0 : i32
    %c0_i32_0 = arith.constant 0 : i32
    %c0_i32_1 = arith.constant 0 : i32
    %c0_i32_2 = arith.constant 0 : i32
    %c0_i32_3 = arith.constant 0 : i32
    return %arg0, %c0_i32, %c0_i32_0, %c0_i32_1, %c0_i32_2 : i32, i32, i32, i32, i32
  }
}

</mosaic_0001>

<llo_original>
// kernel: tpu_custom_call.1
$region0: #{tpu_custom_call.1}
  #allocation0 [shape = 'u32[]', space=smem, size = 0x4, offset = 0x4, fixed_abs, tag = 'smem constant byte address 0x4 - core index']
  #allocation1 [shape = 'u32[72,128]{1,0:T(1,128)}', space=vmem, size = 0x9000, scoped, tag = 'internal scratch']
  #allocation2 [shape = 'bf16[10,10,8,384]{3,2,1,0:T(8,128)(2,1)}', space=vmem, size = 0x96000, scoped, tag = 'scratch operand']
  %s0 = inlined_call_operand.hbm [shape: f32[4,8,8,8,128], index: 0, kind: input, shape index: {}]
  %s1 = inlined_call_operand.hbm [shape: bf16[3,3,384,128], index: 1, kind: input, shape index: {}]
  %s2 = inlined_call_operand.vmem [shape: f32[1,128], index: 2, kind: input, shape index: {}]
  %s3 = inlined_call_operand.vmem [shape: f32[1,128], index: 3, kind: input, shape index: {}]
  %s4 = inlined_call_operand.hbm [shape: f32[4,8,8,8,128], index: 4, kind: output, shape index: {}]
  %s5 = sld [smem:[#allocation0]]
  $region71: #{tpu_custom_call.1} parent=0
    _
  %s7 = ssub.s32 1, %s5
  %s8 = scalar_select 0, %s7, %s5
  $region1: #{tpu_custom_call.1} parent=0
    #allocation3 [shape = 'u8[524288]{0}', space=vmem, size = 0x80000, scoped, tag = 'input window, operand 0']
    #allocation4 [shape = 's32[2]{0}', space=sflag, size = 0x8, scoped, tag = 'scoped memory for tpu_custom_call.1']
    #allocation5 [shape = 's32[2]{0}', space=sflag, size = 0x8, scoped, tag = 'scoped memory for tpu_custom_call.1']
    #allocation6 [shape = 'u8[884736]{0}', space=vmem, size = 0xd8000, scoped, tag = 'input window, operand 1, single buffered']
    #allocation7 [shape = 's32[1]{0}', space=sflag, size = 0x4, scoped, tag = 'scoped memory for tpu_custom_call.1']
    #allocation8 [shape = 'u8[524288]{0}', space=vmem, size = 0x80000, scoped, tag = 'output window, operand 0']
    %9 = vsyncpa [#allocation4], 0
    %s10 = scalar_lea.sflag [#allocation4], 1
    %11 = vsyncpa %s10, 0
    %12 = vsyncpa [#allocation7], 0
    %13 = vsyncpa [#allocation5], 0
    %s14 = scalar_lea.sflag [#allocation5], 1
    %15 = vsyncpa %s14, 0
    loop: start=0, step=1, limit=6
    $region2: #{tpu_custom_call.1} parent=1 // loop_pre_header
      _
    $region3: #{tpu_custom_call.1} parent=1 // loop_header
      %s17 = sphi 0, %s21
      %p18 = scmp.ge.s32.totalorder %s17, 6
      %s27 = sphi 0, %s29
      %s30 = sphi 0, %s27
      %s31 = sphi 0, %s30
      %s47 = sphi 0, %s31
      %s51 = sphi 0, %s51
      %s53 = sphi 0, %s51
      %s54 = sphi 0, %s53
      %s68 = sphi 0, %s54
      %s72 = sphi 0, %s72
      %s74 = sphi 0, %s72
      %s75 = sphi 0, %s74
      %s89 = sphi 0, %s75
      %s93 = sphi 0, %s93
      %s95 = sphi 0, %s93
      %s96 = sphi 0, %s95
      %s110 = sphi 0, %s96
      %s116 = sphi 0, %s118
      %s119 = sphi 0, %s116
      %s120 = sphi 0, %s119
      %s136 = sphi 0, %s120
    $region4: #{tpu_custom_call.1} parent=1 // loop_header_branch
      %20 = sbr.rel (%p18) target = $region8
    $region5: #{tpu_custom_call.1} parent=1 // loop_body
      %s22 = ssub.s32 %s17, 1
      %s23 = ssub.s32 %s17, 2
      %s24 = sadd.s32 %s17, 1
      %s25 = ssub.s32 %s17, %s24
      %p26 = scmp.eq.s32.totalorder %s25, 0
      %s28 = sadd.s32 %s27, 1
      %s29 = scalar_select %p26, %s27, %s28
      %p32 = pneg %p26
      %p33 = scmp.eq.s32.totalorder %s17, 3
      %p34 = por %p32, %p33
      %p35 = scmp.ne.s32.totalorder %s27, %s30
      %p36 = scmp.eq.s32.totalorder %s17, 0
      %p37 = por %p35, %p36
      %p38 = scmp.ne.s32.totalorder %s27, %s30
      %p39 = scmp.eq.s32.totalorder %s22, 3
      %p40 = por %p38, %p39
      %p41 = scmp.ne.s32.totalorder %s30, %s31
      %p42 = scmp.eq.s32.totalorder %s22, 0
      %p43 = por %p41, %p42
      %p44 = scmp.ne.s32.totalorder %s30, %s31
      %p45 = scmp.eq.s32.totalorder %s23, 3
      %p46 = por %p44, %p45
      %p48 = scmp.ne.s32.totalorder %s31, %s47
      %p49 = scmp.eq.s32.totalorder %s23, 0
      %p50 = por %p48, %p49
      %s52 = sadd.s32 %s51, 1
      %p55 = scmp.eq.s32.totalorder %s17, 3
      %p56 = scmp.ne.s32.totalorder %s51, %s53
      %p57 = scmp.eq.s32.totalorder %s17, 0
      %p58 = por %p56, %p57
      %p59 = scmp.ne.s32.totalorder %s51, %s53
      %p60 = scmp.eq.s32.totalorder %s22, 3
      %p61 = por %p59, %p60
      %p62 = scmp.ne.s32.totalorder %s53, %s54
      %p63 = scmp.eq.s32.totalorder %s22, 0
      %p64 = por %p62, %p63
      %p65 = scmp.ne.s32.totalorder %s53, %s54
      %p66 = scmp.eq.s32.totalorder %s23, 3
      %p67 = por %p65, %p66
      %p69 = scmp.ne.s32.totalorder %s54, %s68
      %p70 = scmp.eq.s32.totalorder %s23, 0
      %p71 = por %p69, %p70
      %s73 = sadd.s32 %s72, 1
      %p76 = scmp.eq.s32.totalorder %s17, 3
      %p77 = scmp.ne.s32.totalorder %s72, %s74
      %p78 = scmp.eq.s32.totalorder %s17, 0
      %p79 = por %p77, %p78
      %p80 = scmp.ne.s32.totalorder %s72, %s74
      %p81 = scmp.eq.s32.totalorder %s22, 3
      %p82 = por %p80, %p81
      %p83 = scmp.ne.s32.totalorder %s74, %s75
      %p84 = scmp.eq.s32.totalorder %s22, 0
      %p85 = por %p83, %p84
      %p86 = scmp.ne.s32.totalorder %s74, %s75
      %p87 = scmp.eq.s32.totalorder %s23, 3
      %p88 = por %p86, %p87
      %p90 = scmp.ne.s32.totalorder %s75, %s89
      %p91 = scmp.eq.s32.totalorder %s23, 0
      %p92 = por %p90, %p91
      %s94 = sadd.s32 %s93, 1
      %p97 = scmp.eq.s32.totalorder %s17, 3
      %p98 = scmp.ne.s32.totalorder %s93, %s95
      %p99 = scmp.eq.s32.totalorder %s17, 0
      %p100 = por %p98, %p99
      %p101 = scmp.ne.s32.totalorder %s93, %s95
      %p102 = scmp.eq.s32.totalorder %s22, 3
      %p103 = por %p101, %p102
      %p104 = scmp.ne.s32.totalorder %s95, %s96
      %p105 = scmp.eq.s32.totalorder %s22, 0
      %p106 = por %p104, %p105
      %p107 = scmp.ne.s32.totalorder %s95, %s96
      %p108 = scmp.eq.s32.totalorder %s23, 3
      %p109 = por %p107, %p108
      %p111 = scmp.ne.s32.totalorder %s96, %s110
      %p112 = scmp.eq.s32.totalorder %s23, 0
      %p113 = por %p111, %p112
      %s114 = ssub.s32 %s17, %s24
      %p115 = scmp.eq.s32.totalorder %s114, 0
      %s117 = sadd.s32 %s116, 1
      %s118 = scalar_select %p115, %s116, %s117
      %p121 = pneg %p115
      %p122 = scmp.eq.s32.totalorder %s17, 3
      %p123 = por %p121, %p122
      %p124 = scmp.ne.s32.totalorder %s116, %s119
      %p125 = scmp.eq.s32.totalorder %s17, 0
      %p126 = por %p124, %p125
      %p127 = scmp.ne.s32.totalorder %s116, %s119
      %p128 = scmp.eq.s32.totalorder %s22, 3
      %p129 = por %p127, %p128
      %p130 = scmp.ne.s32.totalorder %s119, %s120
      %p131 = scmp.eq.s32.totalorder %s22, 0
      %p132 = por %p130, %p131
      %p133 = scmp.ne.s32.totalorder %s119, %s120
      %p134 = scmp.eq.s32.totalorder %s23, 3
      %p135 = por %p133, %p134
      %p137 = scmp.ne.s32.totalorder %s120, %s136
      %p138 = scmp.eq.s32.totalorder %s23, 0
      %p139 = por %p137, %p138
      %p140 = scmp.le.s32.totalorder 1, %s17
      %p141 = scmp.lt.s32.totalorder %s17, 5
      %p142 = pnand %p140, %p141
      %p143 = pneg %p142
      // Predicated region
      $region9: #{tpu_custom_call.1} parent=5 // pred_check
        _
      $region10: #{tpu_custom_call.1} parent=5 // pred_check_branch
        %145 = sbr.rel (%p142) target = $region12
      $region11: #{tpu_custom_call.1} parent=5 // pred_region
        %s146 = ssub.s32 %s17, 1
        // Predicated region
        $region13: #{tpu_custom_call.1} parent=11 // pred_check
          %p147 = pneg %p64
        $region14: #{tpu_custom_call.1} parent=11 // pred_check_branch
          %149 = sbr.rel (%p147) target = $region16
        $region15: #{tpu_custom_call.1} parent=11 // pred_region
          %151 = vsyncadd [#allocation7], 0
          %s152 = sshll.u32 %s1, 4
          %s153 = int_to_ptr.hbm [resolvable:$true] %s152
          %s154 = sshll.u32 [#allocation6], 4
          %s155 = int_to_ptr.vmem [resolvable:$true] %s154
          %160 = dma.hbm_to_vmem [thread:$0]  %s153, 27648, %s155, [#allocation7], 64, 64, 4
        $region16: #{tpu_custom_call.1} parent=11 // pred_fallthru
          _
        // Predicated region
        $region17: #{tpu_custom_call.1} parent=11 // pred_check
          %p161 = pneg %p85
        $region18: #{tpu_custom_call.1} parent=11 // pred_check_branch
          %163 = sbr.rel (%p161) target = $region20
        $region19: #{tpu_custom_call.1} parent=11 // pred_region
          _
        $region20: #{tpu_custom_call.1} parent=11 // pred_fallthru
          _
        // Predicated region
        $region21: #{tpu_custom_call.1} parent=11 // pred_check
          %p164 = pneg %p106
        $region22: #{tpu_custom_call.1} parent=11 // pred_check_branch
          %166 = sbr.rel (%p164) target = $region24
        $region23: #{tpu_custom_call.1} parent=11 // pred_region
          _
        $region24: #{tpu_custom_call.1} parent=11 // pred_fallthru
          _
      $region12: #{tpu_custom_call.1} parent=5 // pred_fallthru
        _
      %p167 = scmp.lt.s32.totalorder %s17, 4
      // Predicated region
      $region25: #{tpu_custom_call.1} parent=5 // pred_check
        %p168 = pneg %p167
      $region26: #{tpu_custom_call.1} parent=5 // pred_check_branch
        %170 = sbr.rel (%p168) target = $region28
      $region27: #{tpu_custom_call.1} parent=5 // pred_region
        // Predicated region
        $region29: #{tpu_custom_call.1} parent=27 // pred_check
          %p171 = pneg %p37
        $region30: #{tpu_custom_call.1} parent=27 // pred_check_branch
          %173 = sbr.rel (%p171) target = $region32
        $region31: #{tpu_custom_call.1} parent=27 // pred_region
          %s174 = sand.u32 %s27, 1
          %s175 = scalar_lea.sflag [#allocation4], %s174
          %s176 = sand.u32 %s27, 1
          %s177 = smul.addr %s176, 512
          %s178 = scalar_lea.vmem [#allocation3], %s177
          %180 = vsyncadd %s175, 0
          %s181 = smul.addr %s17, 64
          %s182 = smul.addr %s181, 8
          %s183 = scalar_lea.hbm %s0, %s182
          %s184 = sshll.u32 %s183, 4
          %s185 = int_to_ptr.hbm [resolvable:$true] %s184
          %s186 = sshll.u32 %s178, 4
          %s187 = int_to_ptr.vmem [resolvable:$true] %s186
          %192 = dma.hbm_to_vmem [thread:$0]  %s185, 8192, %s187, %s175, 128, 128, 8
        $region32: #{tpu_custom_call.1} parent=27 // pred_fallthru
          _
      $region28: #{tpu_custom_call.1} parent=5 // pred_fallthru
        _
      %p193 = scmp.le.s32.totalorder 1, %s17
      %p194 = scmp.lt.s32.totalorder %s17, 5
      %p195 = pnand %p193, %p194
      %p196 = pneg %p195
      // Predicated region
      $region33: #{tpu_custom_call.1} parent=5 // pred_check
        _
      $region34: #{tpu_custom_call.1} parent=5 // pred_check_branch
        %198 = sbr.rel (%p195) target = $region36
      $region35: #{tpu_custom_call.1} parent=5 // pred_region
        %s199 = ssub.s32 %s17, 1
        %s200 = sand.u32 %s30, 1
        %s201 = scalar_lea.sflag [#allocation4], %s200
        %s202 = sand.u32 %s30, 1
        %s203 = smul.addr %s202, 512
        %s204 = scalar_lea.vmem [#allocation3], %s203
        // Predicated region
        $region37: #{tpu_custom_call.1} parent=35 // pred_check
          %p205 = pneg %p43
        $region38: #{tpu_custom_call.1} parent=35 // pred_check_branch
          %207 = sbr.rel (%p205) target = $region40
        $region39: #{tpu_custom_call.1} parent=35 // pred_region
          %209 = dma.done %s201, 8192
        $region40: #{tpu_custom_call.1} parent=35 // pred_fallthru
          _
        // Predicated region
        $region41: #{tpu_custom_call.1} parent=35 // pred_check
          %p210 = pneg %p64
        $region42: #{tpu_custom_call.1} parent=35 // pred_check_branch
          %212 = sbr.rel (%p210) target = $region44
        $region43: #{tpu_custom_call.1} parent=35 // pred_region
          %214 = dma.done [#allocation7], 27648
        $region44: #{tpu_custom_call.1} parent=35 // pred_fallthru
          _
        %s215 = sand.u32 %s30, 1
        %s216 = scalar_lea.sflag [#allocation4], %s215
        %s217 = sand.u32 %s30, 1
        %s218 = smul.addr %s217, 512
        %s219 = scalar_lea.vmem [#allocation3], %s218
        %p220 = pneg %p43
        %p221 = pneg %p40
        %p222 = pneg %p64
        %p223 = pneg %p61
        %p224 = pneg %p85
        %p225 = pneg %p82
        %p226 = pneg %p106
        %p227 = pneg %p103
        %p228 = pneg %p132
        %p229 = pneg %p129
        %s230 = sand.u32 %s119, 1
        %s231 = scalar_lea.sflag [#allocation5], %s230
        %s232 = sand.u32 %s119, 1
        %s233 = smul.addr %s232, 512
        %s234 = scalar_lea.vmem [#allocation8], %s233
        %v236 = vld [vmem:[%s2] sm:$0x1]
        %v237 = vld [vmem:[%s3] sm:$0x1]
        %238 = vst [vmem:[#allocation2] sm:$0xff] 0
        %239 = vst [vmem:[#allocation2 + $0x8] sm:$0xf] 0
        %240 = vst [vmem:[#allocation2 + $0xc] sm:$0xff] 0
        %241 = vst [vmem:[#allocation2 + $0x14] sm:$0xf] 0
        %242 = vst [vmem:[#allocation2 + $0x18] sm:$0xff] 0
        %243 = vst [vmem:[#allocation2 + $0x20] sm:$0xf] 0
        %244 = vst [vmem:[#allocation2 + $0x24] sm:$0xff] 0
        %245 = vst [vmem:[#allocation2 + $0x2c] sm:$0xf] 0
        %246 = vst [vmem:[#allocation2 + $0x30] sm:$0xff] 0
        %247 = vst [vmem:[#allocation2 + $0x38] sm:$0xf] 0
        %248 = vst [vmem:[#allocation2 + $0x3c] sm:$0xff] 0
        %249 = vst [vmem:[#allocation2 + $0x44] sm:$0xf] 0
        %250 = vst [vmem:[#allocation2 + $0x48] sm:$0xff] 0
        %251 = vst [vmem:[#allocation2 + $0x50] sm:$0xf] 0
        %252 = vst [vmem:[#allocation2 + $0x54] sm:$0xff] 0
        %253 = vst [vmem:[#allocation2 + $0x5c] sm:$0xf] 0
        %254 = vst [vmem:[#allocation2 + $0x60] sm:$0xff] 0
        %255 = vst [vmem:[#allocation2 + $0x68] sm:$0xf] 0
        %256 = vst [vmem:[#allocation2 + $0x6c] sm:$0xff] 0
        %257 = vst [vmem:[#allocation2 + $0x74] sm:$0xf] 0
        %s258 = scalar_lea.vmem [#allocation2], 1080
        %259 = vst [vmem:[%s258] sm:$0xff] 0
        %260 = vst [vmem:[%s258 + $0x8] sm:$0xf] 0
        %261 = vst [vmem:[%s258 + $0xc] sm:$0xff] 0
        %262 = vst [vmem:[%s258 + $0x14] sm:$0xf] 0
        %263 = vst [vmem:[%s258 + $0x18] sm:$0xff] 0
        %264 = vst [vmem:[%s258 + $0x20] sm:$0xf] 0
        %265 = vst [vmem:[%s258 + $0x24] sm:$0xff] 0
        %266 = vst [vmem:[%s258 + $0x2c] sm:$0xf] 0
        %267 = vst [vmem:[%s258 + $0x30] sm:$0xff] 0
        %268 = vst [vmem:[%s258 + $0x38] sm:$0xf] 0
        %269 = vst [vmem:[%s258 + $0x3c] sm:$0xff] 0
        %270 = vst [vmem:[%s258 + $0x44] sm:$0xf] 0
        %271 = vst [vmem:[%s258 + $0x48] sm:$0xff] 0
        %272 = vst [vmem:[%s258 + $0x50] sm:$0xf] 0
        %273 = vst [vmem:[%s258 + $0x54] sm:$0xff] 0
        %274 = vst [vmem:[%s258 + $0x5c] sm:$0xf] 0
        %275 = vst [vmem:[%s258 + $0x60] sm:$0xff] 0
        %276 = vst [vmem:[%s258 + $0x68] sm:$0xf] 0
        %277 = vst [vmem:[%s258 + $0x6c] sm:$0xff] 0
        %278 = vst [vmem:[%s258 + $0x74] sm:$0xf] 0
        loop: start=0, step=1, limit=8
        $region45: #{tpu_custom_call.1} parent=35 // loop_pre_header
          _
        $region46: #{tpu_custom_call.1} parent=35 // loop_header
          %s280 = sphi 0, %s284
          %p281 = scmp.ge.s32.totalorder %s280, 8
        $region47: #{tpu_custom_call.1} parent=35 // loop_header_branch
          %283 = sbr.rel (%p281) target = $region51
        $region48: #{tpu_custom_call.1} parent=35 // loop_body
          %s285 = smul.u32 %s280, 64
          %s286 = scalar_lea.vmem %s204, %s285 [#allocation3]
          %v287 = vld [vmem:[%s286] sm:$0xff]
          %v288 = vld [vmem:[%s286 + $0x8] sm:$0xff]
          %v289 = vld [vmem:[%s286 + $0x10] sm:$0xff]
          %v290 = vld [vmem:[%s286 + $0x18] sm:$0xff]
          %v291 = vld [vmem:[%s286 + $0x20] sm:$0xff]
          %v292 = vld [vmem:[%s286 + $0x28] sm:$0xff]
          %v293 = vld [vmem:[%s286 + $0x30] sm:$0xff]
          %v294 = vld [vmem:[%s286 + $0x38] sm:$0xff]
          %v296 = vperm.slane %v236, 0
          %v298 = vmul.f32 %v287, %v296
          %v299 = vmul.f32 %v288, %v296
          %v300 = vmul.f32 %v289, %v296
          %v301 = vmul.f32 %v290, %v296
          %v302 = vmul.f32 %v291, %v296
          %v303 = vmul.f32 %v292, %v296
          %v304 = vmul.f32 %v293, %v296
          %v305 = vmul.f32 %v294, %v296
          %v307 = vperm.slane %v237, 0
          %v309 = vadd.f32 %v298, %v307
          %v310 = vadd.f32 %v299, %v307
          %v311 = vadd.f32 %v300, %v307
          %v312 = vadd.f32 %v301, %v307
          %v313 = vadd.f32 %v302, %v307
          %v314 = vadd.f32 %v303, %v307
          %v315 = vadd.f32 %v304, %v307
          %v316 = vadd.f32 %v305, %v307
          %v317 = vmax.f32 %v309, 0.0
          %v318 = vmax.f32 %v310, 0.0
          %v319 = vmax.f32 %v311, 0.0
          %v320 = vmax.f32 %v312, 0.0
          %v321 = vmax.f32 %v313, 0.0
          %v322 = vmax.f32 %v314, 0.0
          %v323 = vmax.f32 %v315, 0.0
          %v324 = vmax.f32 %v316, 0.0
          %v325 = vpack.c.bf16 %v317, %v317
          %v326 = vpack.c.bf16 %v318, %v318
          %v327 = vpack.c.bf16 %v319, %v319
          %v328 = vpack.c.bf16 %v320, %v320
          %v329 = vpack.c.bf16 %v321, %v321
          %v330 = vpack.c.bf16 %v322, %v322
          %v331 = vpack.c.bf16 %v323, %v323
          %v332 = vpack.c.bf16 %v324, %v324
          %v341 = vunpack.c.l.b16 %v325
          %v342 = vunpack.c.l.b16 %v326
          %v343 = vunpack.c.l.b16 %v327
          %v344 = vunpack.c.l.b16 %v328
          %v345 = vunpack.c.l.b16 %v329
          %v346 = vunpack.c.l.b16 %v330
          %v347 = vunpack.c.l.b16 %v331
          %v348 = vunpack.c.l.b16 %v332
          %v349 = vpack.c.b16 %v341, %v341
          %v350 = vpack.c.b16 %v342, %v342
          %v351 = vpack.c.b16 %v343, %v343
          %v352 = vpack.c.b16 %v344, %v344
          %v353 = vpack.c.b16 %v345, %v345
          %v354 = vpack.c.b16 %v346, %v346
          %v355 = vpack.c.b16 %v347, %v347
          %v356 = vpack.c.b16 %v348, %v348
          %v358 = vshrl.u32 %v349, 16
          %v360 = vrot.slane %v358, 7
          %v361 = vshll.u32 %v349, 16
          %v363 = vor.u32 %v360, %v361
          %v365 = vshrl.u32 %v350, 16
          %v367 = vrot.slane %v365, 7
          %v368 = vshll.u32 %v350, 16
          %v370 = vor.u32 %v367, %v368
          %v372 = vshrl.u32 %v351, 16
          %v374 = vrot.slane %v372, 7
          %v375 = vshll.u32 %v351, 16
          %v377 = vor.u32 %v374, %v375
          %v379 = vshrl.u32 %v352, 16
          %v381 = vrot.slane %v379, 7
          %v382 = vshll.u32 %v352, 16
          %v384 = vor.u32 %v381, %v382
          %v386 = vshrl.u32 %v353, 16
          %v388 = vrot.slane %v386, 7
          %v389 = vshll.u32 %v353, 16
          %v391 = vor.u32 %v388, %v389
          %v393 = vshrl.u32 %v354, 16
          %v395 = vrot.slane %v393, 7
          %v396 = vshll.u32 %v354, 16
          %v398 = vor.u32 %v395, %v396
          %v400 = vshrl.u32 %v355, 16
          %v402 = vrot.slane %v400, 7
          %v403 = vshll.u32 %v355, 16
          %v405 = vor.u32 %v402, %v403
          %v407 = vshrl.u32 %v356, 16
          %v409 = vrot.slane %v407, 7
          %v410 = vshll.u32 %v356, 16
          %v412 = vor.u32 %v409, %v410
          %vm421 = vcmask 1040384
          %vm422 = vsmask.f32 256
          %vm423 = vmand %vm421, %vm422
          %v424 = vsel %vm423, 0, %v363
          %v425 = vsel %vm423, 0, %v370
          %v426 = vsel %vm423, 0, %v377
          %v427 = vsel %vm423, 0, %v384
          %v428 = vsel %vm423, 0, %v391
          %v429 = vsel %vm423, 0, %v398
          %v430 = vsel %vm423, 0, %v405
          %v431 = vsel %vm423, 0, %v412
          %v432 = vrot.slane %v361, 1
          %v433 = vor.u32 %v358, %v432
          %v434 = vrot.slane %v368, 1
          %v435 = vor.u32 %v365, %v434
          %v436 = vrot.slane %v375, 1
          %v437 = vor.u32 %v372, %v436
          %v438 = vrot.slane %v382, 1
          %v439 = vor.u32 %v379, %v438
          %v440 = vrot.slane %v389, 1
          %v441 = vor.u32 %v386, %v440
          %v442 = vrot.slane %v396, 1
          %v443 = vor.u32 %v393, %v442
          %v444 = vrot.slane %v403, 1
          %v445 = vor.u32 %v400, %v444
          %v446 = vrot.slane %v410, 1
          %v447 = vor.u32 %v407, %v446
          %vm456 = vcmask 1043456
          %vm457 = vsmask.f32 3328
          %vm458 = vmand %vm456, %vm457
          %v459 = vsel %vm458, %v433, 0
          %v460 = vsel %vm458, %v435, 0
          %v461 = vsel %vm458, %v437, 0
          %v462 = vsel %vm458, %v439, 0
          %v463 = vsel %vm458, %v441, 0
          %v464 = vsel %vm458, %v443, 0
          %v465 = vsel %vm458, %v445, 0
          %v466 = vsel %vm458, %v447, 0
          %s467 = sadd.s32 %s280, 1
          %v485 = vunpack.c.l.b16 0
          %v486 = vunpack.c.l.b16 %v424
          %v487 = vunpack.c.l.b16 %v459
          %v488 = vunpack.c.l.b16 %v425
          %v489 = vunpack.c.l.b16 %v460
          %v490 = vunpack.c.l.b16 %v426
          %v491 = vunpack.c.l.b16 %v461
          %v492 = vunpack.c.l.b16 %v427
          %v493 = vunpack.c.l.b16 %v462
          %v494 = vunpack.c.l.b16 %v428
          %v495 = vunpack.c.l.b16 %v463
          %v496 = vunpack.c.l.b16 %v429
          %v497 = vunpack.c.l.b16 %v464
          %v498 = vunpack.c.l.b16 %v430
          %v499 = vunpack.c.l.b16 %v465
          %v500 = vunpack.c.l.b16 %v431
          %v501 = vunpack.c.l.b16 %v466
          %v502 = vpack.c.b16 %v485, %v485
          %v503 = vpack.c.b16 %v341, %v486
          %v504 = vpack.c.b16 %v487, %v487
          %v505 = vpack.c.b16 %v342, %v488
          %v506 = vpack.c.b16 %v489, %v489
          %v507 = vpack.c.b16 %v343, %v490
          %v508 = vpack.c.b16 %v491, %v491
          %v509 = vpack.c.b16 %v344, %v492
          %v510 = vpack.c.b16 %v493, %v493
          %v511 = vpack.c.b16 %v345, %v494
          %v512 = vpack.c.b16 %v495, %v495
          %v513 = vpack.c.b16 %v346, %v496
          %v514 = vpack.c.b16 %v497, %v497
          %v515 = vpack.c.b16 %v347, %v498
          %v516 = vpack.c.b16 %v499, %v499
          %v517 = vpack.c.b16 %v348, %v500
          %v518 = vpack.c.b16 %v501, %v501
          %s536 = smul.u32 %s467, 30
          %s537 = smul.addr %s536, 4
          %s538 = scalar_lea.vmem [#allocation2], %s537
          %539 = vst [vmem:[%s538] sm:$0xff] %v502
          %540 = vst [vmem:[%s538 + $0x8] sm:$0xf] %v502
          %541 = vst [vmem:[%s538 + $0xc] sm:$0xff] %v503
          %542 = vst [vmem:[%s538 + $0x14] sm:$0xf] %v504
          %543 = vst [vmem:[%s538 + $0x18] sm:$0xff] %v505
          %544 = vst [vmem:[%s538 + $0x20] sm:$0xf] %v506
          %545 = vst [vmem:[%s538 + $0x24] sm:$0xff] %v507
          %546 = vst [vmem:[%s538 + $0x2c] sm:$0xf] %v508
          %547 = vst [vmem:[%s538 + $0x30] sm:$0xff] %v509
          %548 = vst [vmem:[%s538 + $0x38] sm:$0xf] %v510
          %549 = vst [vmem:[%s538 + $0x3c] sm:$0xff] %v511
          %550 = vst [vmem:[%s538 + $0x44] sm:$0xf] %v512
          %551 = vst [vmem:[%s538 + $0x48] sm:$0xff] %v513
          %552 = vst [vmem:[%s538 + $0x50] sm:$0xf] %v514
          %553 = vst [vmem:[%s538 + $0x54] sm:$0xff] %v515
          %554 = vst [vmem:[%s538 + $0x5c] sm:$0xf] %v516
          %555 = vst [vmem:[%s538 + $0x60] sm:$0xff] %v517
          %556 = vst [vmem:[%s538 + $0x68] sm:$0xf] %v518
          %557 = vst [vmem:[%s538 + $0x6c] sm:$0xff] %v502
          %558 = vst [vmem:[%s538 + $0x74] sm:$0xf] %v502
        $region49: #{tpu_custom_call.1} parent=35 // loop_footer
          %s284 = sadd.s32 1, %s280
        $region50: #{tpu_custom_call.1} parent=35 // loop_footer_branch
          %279 = sbr.rel target = $region46
        $region51: #{tpu_custom_call.1} parent=35 // loop_exit
          _
        loop: start=0, step=1, limit=4
        $region52: #{tpu_custom_call.1} parent=35 // loop_pre_header
          _
        $region53: #{tpu_custom_call.1} parent=35 // loop_header
          %s560 = sphi 0, %s564
          %p561 = scmp.ge.s32.totalorder %s560, 4
        $region54: #{tpu_custom_call.1} parent=35 // loop_header_branch
          %563 = sbr.rel (%p561) target = $region58
        $region55: #{tpu_custom_call.1} parent=35 // loop_body
          %s565 = smul.u32 %s560, 2
          %s566 = smul.u32 %s565, 30
          %s567 = smul.addr %s566, 4
          %s568 = scalar_lea.vmem [#allocation2], %s567
          %v569 = vld [vmem:[%s568] sm:$0xff]
          %v570 = vld [vmem:[%s568 + $0x8] sm:$0xf]
          %v571 = vld [vmem:[%s568 + $0xc] sm:$0xff]
          %v572 = vld [vmem:[%s568 + $0x14] sm:$0xf]
          %v573 = vld [vmem:[%s568 + $0x18] sm:$0xff]
          %v574 = vld [vmem:[%s568 + $0x20] sm:$0xf]
          %v575 = vld [vmem:[%s568 + $0x24] sm:$0xff]
          %v576 = vld [vmem:[%s568 + $0x2c] sm:$0xf]
          %v577 = vld [vmem:[%s568 + $0x30] sm:$0xff]
          %v578 = vld [vmem:[%s568 + $0x38] sm:$0xf]
          %v579 = vld [vmem:[%s568 + $0x3c] sm:$0xff]
          %v580 = vld [vmem:[%s568 + $0x44] sm:$0xf]
          %v581 = vld [vmem:[%s568 + $0x48] sm:$0xff]
          %v582 = vld [vmem:[%s568 + $0x50] sm:$0xf]
          %v583 = vld [vmem:[%s568 + $0x54] sm:$0xff]
          %v584 = vld [vmem:[%s568 + $0x5c] sm:$0xf]
          %v585 = vld [vmem:[%s568 + $0x78] sm:$0xff]
          %v586 = vld [vmem:[%s568 + $0x80] sm:$0xf]
          %v587 = vld [vmem:[%s568 + $0x84] sm:$0xff]
          %v588 = vld [vmem:[%s568 + $0x8c] sm:$0xf]
          %v589 = vld [vmem:[%s568 + $0x90] sm:$0xff]
          %v590 = vld [vmem:[%s568 + $0x98] sm:$0xf]
          %v591 = vld [vmem:[%s568 + $0x9c] sm:$0xff]
          %v592 = vld [vmem:[%s568 + $0xa4] sm:$0xf]
          %v593 = vld [vmem:[%s568 + $0xa8] sm:$0xff]
          %v594 = vld [vmem:[%s568 + $0xb0] sm:$0xf]
          %v595 = vld [vmem:[%s568 + $0xb4] sm:$0xff]
          %v596 = vld [vmem:[%s568 + $0xbc] sm:$0xf]
          %v597 = vld [vmem:[%s568 + $0xc0] sm:$0xff]
          %v598 = vld [vmem:[%s568 + $0xc8] sm:$0xf]
          %v599 = vld [vmem:[%s568 + $0xcc] sm:$0xff]
          %v600 = vld [vmem:[%s568 + $0xd4] sm:$0xf]
          %v601 = vld [vmem:[#allocation6] sm:$0xf]
          %v602 = vld [vmem:[#allocation6 + $0x4] sm:$0xf]
          %v603 = vld [vmem:[#allocation6 + $0x8] sm:$0xf]
          %v604 = vld [vmem:[#allocation6 + $0xc] sm:$0xf]
          %v605 = vld [vmem:[#allocation6 + $0x10] sm:$0xf]
          %v606 = vld [vmem:[#allocation6 + $0x14] sm:$0xf]
          %v607 = vld [vmem:[#allocation6 + $0x18] sm:$0xf]
          %v608 = vld [vmem:[#allocation6 + $0x1c] sm:$0xf]
          %v609 = vld [vmem:[#allocation6 + $0x20] sm:$0xf]
          %v610 = vld [vmem:[#allocation6 + $0x24] sm:$0xf]
          %v611 = vld [vmem:[#allocation6 + $0x28] sm:$0xf]
          %v612 = vld [vmem:[#allocation6 + $0x2c] sm:$0xf]
          %v613 = vld [vmem:[#allocation6 + $0x30] sm:$0xf]
          %v614 = vld [vmem:[#allocation6 + $0x34] sm:$0xf]
          %v615 = vld [vmem:[#allocation6 + $0x38] sm:$0xf]
          %v616 = vld [vmem:[#allocation6 + $0x3c] sm:$0xf]
          %v617 = vld [vmem:[#allocation6 + $0x40] sm:$0xf]
          %v618 = vld [vmem:[#allocation6 + $0x44] sm:$0xf]
          %v619 = vld [vmem:[#allocation6 + $0x48] sm:$0xf]
          %v620 = vld [vmem:[#allocation6 + $0x4c] sm:$0xf]
          %v621 = vld [vmem:[#allocation6 + $0x50] sm:$0xf]
          %v622 = vld [vmem:[#allocation6 + $0x54] sm:$0xf]
          %v623 = vld [vmem:[#allocation6 + $0x58] sm:$0xf]
          %v624 = vld [vmem:[#allocation6 + $0x5c] sm:$0xf]
          %v625 = vld [vmem:[#allocation6 + $0x60] sm:$0xf]
          %v626 = vld [vmem:[#allocation6 + $0x64] sm:$0xf]
          %v627 = vld [vmem:[#allocation6 + $0x68] sm:$0xf]
          %v628 = vld [vmem:[#allocation6 + $0x6c] sm:$0xf]
          %v629 = vld [vmem:[#allocation6 + $0x70] sm:$0xf]
          %v630 = vld [vmem:[#allocation6 + $0x74] sm:$0xf]
          %v631 = vld [vmem:[#allocation6 + $0x78] sm:$0xf]
          %v632 = vld [vmem:[#allocation6 + $0x7c] sm:$0xf]
          %v633 = vld [vmem:[#allocation6 + $0x80] sm:$0xf]
          %v634 = vld [vmem:[#allocation6 + $0x84] sm:$0xf]
          %v635 = vld [vmem:[#allocation6 + $0x88] sm:$0xf]
          %v636 = vld [vmem:[#allocation6 + $0x8c] sm:$0xf]
          %v637 = vld [vmem:[#allocation6 + $0x90] sm:$0xf]
          %v638 = vld [vmem:[#allocation6 + $0x94] sm:$0xf]
          %v639 = vld [vmem:[#allocation6 + $0x98] sm:$0xf]
          %v640 = vld [vmem:[#allocation6 + $0x9c] sm:$0xf]
          %v641 = vld [vmem:[#allocation6 + $0xa0] sm:$0xf]
          %v642 = vld [vmem:[#allocation6 + $0xa4] sm:$0xf]
          %v643 = vld [vmem:[#allocation6 + $0xa8] sm:$0xf]
          %v644 = vld [vmem:[#allocation6 + $0xac] sm:$0xf]
          %v645 = vld [vmem:[#allocation6 + $0xb0] sm:$0xf]
          %v646 = vld [vmem:[#allocation6 + $0xb4] sm:$0xf]
          %v647 = vld [vmem:[#allocation6 + $0xb8] sm:$0xf]
          %v648 = vld [vmem:[#allocation6 + $0xbc] sm:$0xf]
          %s649 = sadd.s32 3, %s566
          %s650 = smul.addr %s649, 4
          %s651 = scalar_lea.vmem [#allocation2], %s650
          %v652 = vld [vmem:[%s651] sm:$0xff]
          %v653 = vld [vmem:[%s651 + $0x8] sm:$0xf]
          %v654 = vld [vmem:[%s651 + $0xc] sm:$0xff]
          %v655 = vld [vmem:[%s651 + $0x14] sm:$0xf]
          %v656 = vld [vmem:[%s651 + $0x18] sm:$0xff]
          %v657 = vld [vmem:[%s651 + $0x20] sm:$0xf]
          %v658 = vld [vmem:[%s651 + $0x24] sm:$0xff]
          %v659 = vld [vmem:[%s651 + $0x2c] sm:$0xf]
          %v660 = vld [vmem:[%s651 + $0x30] sm:$0xff]
          %v661 = vld [vmem:[%s651 + $0x38] sm:$0xf]
          %v662 = vld [vmem:[%s651 + $0x3c] sm:$0xff]
          %v663 = vld [vmem:[%s651 + $0x44] sm:$0xf]
          %v664 = vld [vmem:[%s651 + $0x48] sm:$0xff]
          %v665 = vld [vmem:[%s651 + $0x50] sm:$0xf]
          %v666 = vld [vmem:[%s651 + $0x54] sm:$0xff]
          %v667 = vld [vmem:[%s651 + $0x5c] sm:$0xf]
          %v668 = vld [vmem:[%s651 + $0x78] sm:$0xff]
          %v669 = vld [vmem:[%s651 + $0x80] sm:$0xf]
          %v670 = vld [vmem:[%s651 + $0x84] sm:$0xff]
          %v671 = vld [vmem:[%s651 + $0x8c] sm:$0xf]
          %v672 = vld [vmem:[%s651 + $0x90] sm:$0xff]
          %v673 = vld [vmem:[%s651 + $0x98] sm:$0xf]
          %v674 = vld [vmem:[%s651 + $0x9c] sm:$0xff]
          %v675 = vld [vmem:[%s651 + $0xa4] sm:$0xf]
          %v676 = vld [vmem:[%s651 + $0xa8] sm:$0xff]
          %v677 = vld [vmem:[%s651 + $0xb0] sm:$0xf]
          %v678 = vld [vmem:[%s651 + $0xb4] sm:$0xff]
          %v679 = vld [vmem:[%s651 + $0xbc] sm:$0xf]
          %v680 = vld [vmem:[%s651 + $0xc0] sm:$0xff]
          %v681 = vld [vmem:[%s651 + $0xc8] sm:$0xf]
          %v682 = vld [vmem:[%s651 + $0xcc] sm:$0xff]
          %v683 = vld [vmem:[%s651 + $0xd4] sm:$0xf]
          %s684 = scalar_lea.vmem [#allocation6], 192
          %v685 = vld [vmem:[%s684] sm:$0xf]
          %v686 = vld [vmem:[%s684 + $0x4] sm:$0xf]
          %v687 = vld [vmem:[%s684 + $0x8] sm:$0xf]
          %v688 = vld [vmem:[%s684 + $0xc] sm:$0xf]
          %v689 = vld [vmem:[%s684 + $0x10] sm:$0xf]
          %v690 = vld [vmem:[%s684 + $0x14] sm:$0xf]
          %v691 = vld [vmem:[%s684 + $0x18] sm:$0xf]
          %v692 = vld [vmem:[%s684 + $0x1c] sm:$0xf]
          %v693 = vld [vmem:[%s684 + $0x20] sm:$0xf]
          %v694 = vld [vmem:[%s684 + $0x24] sm:$0xf]
          %v695 = vld [vmem:[%s684 + $0x28] sm:$0xf]
          %v696 = vld [vmem:[%s684 + $0x2c] sm:$0xf]
          %v697 = vld [vmem:[%s684 + $0x30] sm:$0xf]
          %v698 = vld [vmem:[%s684 + $0x34] sm:$0xf]
          %v699 = vld [vmem:[%s684 + $0x38] sm:$0xf]
          %v700 = vld [vmem:[%s684 + $0x3c] sm:$0xf]
          %v701 = vld [vmem:[%s684 + $0x40] sm:$0xf]
          %v702 = vld [vmem:[%s684 + $0x44] sm:$0xf]
          %v703 = vld [vmem:[%s684 + $0x48] sm:$0xf]
          %v704 = vld [vmem:[%s684 + $0x4c] sm:$0xf]
          %v705 = vld [vmem:[%s684 + $0x50] sm:$0xf]
          %v706 = vld [vmem:[%s684 + $0x54] sm:$0xf]
          %v707 = vld [vmem:[%s684 + $0x58] sm:$0xf]
          %v708 = vld [vmem:[%s684 + $0x5c] sm:$0xf]
          %v709 = vld [vmem:[%s684 + $0x60] sm:$0xf]
          %v710 = vld [vmem:[%s684 + $0x64] sm:$0xf]
          %v711 = vld [vmem:[%s684 + $0x68] sm:$0xf]
          %v712 = vld [vmem:[%s684 + $0x6c] sm:$0xf]
          %v713 = vld [vmem:[%s684 + $0x70] sm:$0xf]
          %v714 = vld [vmem:[%s684 + $0x74] sm:$0xf]
          %v715 = vld [vmem:[%s684 + $0x78] sm:$0xf]
          %v716 = vld [vmem:[%s684 + $0x7c] sm:$0xf]
          %v717 = vld [vmem:[%s684 + $0x80] sm:$0xf]
          %v718 = vld [vmem:[%s684 + $0x84] sm:$0xf]
          %v719 = vld [vmem:[%s684 + $0x88] sm:$0xf]
          %v720 = vld [vmem:[%s684 + $0x8c] sm:$0xf]
          %v721 = vld [vmem:[%s684 + $0x90] sm:$0xf]
          %v722 = vld [vmem:[%s684 + $0x94] sm:$0xf]
          %v723 = vld [vmem:[%s684 + $0x98] sm:$0xf]
          %v724 = vld [vmem:[%s684 + $0x9c] sm:$0xf]
          %v725 = vld [vmem:[%s684 + $0xa0] sm:$0xf]
          %v726 = vld [vmem:[%s684 + $0xa4] sm:$0xf]
          %v727 = vld [vmem:[%s684 + $0xa8] sm:$0xf]
          %v728 = vld [vmem:[%s684 + $0xac] sm:$0xf]
          %v729 = vld [vmem:[%s684 + $0xb0] sm:$0xf]
          %v730 = vld [vmem:[%s684 + $0xb4] sm:$0xf]
          %v731 = vld [vmem:[%s684 + $0xb8] sm:$0xf]
          %v732 = vld [vmem:[%s684 + $0xbc] sm:$0xf]
          %v765 = vunpack.c.l.b16 %v652
          %v766 = vunpack.c.h.b16 %v652
          %v767 = vunpack.c.l.b16 %v653
          %v768 = vunpack.c.l.b16 %v654
          %v769 = vunpack.c.h.b16 %v654
          %v770 = vunpack.c.l.b16 %v655
          %v771 = vunpack.c.l.b16 %v656
          %v772 = vunpack.c.h.b16 %v656
          %v773 = vunpack.c.l.b16 %v657
          %v774 = vunpack.c.l.b16 %v658
          %v775 = vunpack.c.h.b16 %v658
          %v776 = vunpack.c.l.b16 %v659
          %v777 = vunpack.c.l.b16 %v660
          %v778 = vunpack.c.h.b16 %v660
          %v779 = vunpack.c.l.b16 %v661
          %v780 = vunpack.c.l.b16 %v662
          %v781 = vunpack.c.h.b16 %v662
          %v782 = vunpack.c.l.b16 %v663
          %v783 = vunpack.c.l.b16 %v664
          %v784 = vunpack.c.h.b16 %v664
          %v785 = vunpack.c.l.b16 %v665
          %v786 = vunpack.c.l.b16 %v666
          %v787 = vunpack.c.h.b16 %v666
          %v788 = vunpack.c.l.b16 %v667
          %v789 = vunpack.c.l.b16 %v668
          %v790 = vunpack.c.h.b16 %v668
          %v791 = vunpack.c.l.b16 %v669
          %v792 = vunpack.c.l.b16 %v670
          %v793 = vunpack.c.h.b16 %v670
          %v794 = vunpack.c.l.b16 %v671
          %v795 = vunpack.c.l.b16 %v672
          %v796 = vunpack.c.h.b16 %v672
          %v797 = vunpack.c.l.b16 %v673
          %v798 = vunpack.c.l.b16 %v674
          %v799 = vunpack.c.h.b16 %v674
          %v800 = vunpack.c.l.b16 %v675
          %v801 = vunpack.c.l.b16 %v676
          %v802 = vunpack.c.h.b16 %v676
          %v803 = vunpack.c.l.b16 %v677
          %v804 = vunpack.c.l.b16 %v678
          %v805 = vunpack.c.h.b16 %v678
          %v806 = vunpack.c.l.b16 %v679
          %v807 = vunpack.c.l.b16 %v680
          %v808 = vunpack.c.h.b16 %v680
          %v809 = vunpack.c.l.b16 %v681
          %v810 = vunpack.c.l.b16 %v682
          %v811 = vunpack.c.h.b16 %v682
          %v812 = vunpack.c.l.b16 %v683
          %v813 = vpack.c.b16 %v768, %v765
          %v814 = vpack.c.b16 %v769, %v766
          %v815 = vpack.c.b16 %v770, %v767
          %v816 = vpack.c.b16 %v774, %v771
          %v817 = vpack.c.b16 %v775, %v772
          %v818 = vpack.c.b16 %v776, %v773
          %v819 = vpack.c.b16 %v780, %v777
          %v820 = vpack.c.b16 %v781, %v778
          %v821 = vpack.c.b16 %v782, %v779
          %v822 = vpack.c.b16 %v786, %v783
          %v823 = vpack.c.b16 %v787, %v784
          %v824 = vpack.c.b16 %v788, %v785
          %v825 = vpack.c.b16 %v792, %v789
          %v826 = vpack.c.b16 %v793, %v790
          %v827 = vpack.c.b16 %v794, %v791
          %v828 = vpack.c.b16 %v798, %v795
          %v829 = vpack.c.b16 %v799, %v796
          %v830 = vpack.c.b16 %v800, %v797
          %v831 = vpack.c.b16 %v804, %v801
          %v832 = vpack.c.b16 %v805, %v802
          %v833 = vpack.c.b16 %v806, %v803
          %v834 = vpack.c.b16 %v810, %v807
          %v835 = vpack.c.b16 %v811, %v808
          %v836 = vpack.c.b16 %v812, %v809
          %v909 = vunpack.c.l.b16 %v685
          %v910 = vunpack.c.l.b16 %v686
          %v911 = vunpack.c.l.b16 %v687
          %v912 = vunpack.c.l.b16 %v688
          %v913 = vunpack.c.l.b16 %v689
          %v914 = vunpack.c.l.b16 %v690
          %v915 = vunpack.c.l.b16 %v691
          %v916 = vunpack.c.l.b16 %v692
          %v917 = vunpack.c.l.b16 %v693
          %v918 = vunpack.c.l.b16 %v694
          %v919 = vunpack.c.l.b16 %v695
          %v920 = vunpack.c.l.b16 %v696
          %v921 = vunpack.c.l.b16 %v697
          %v922 = vunpack.c.l.b16 %v698
          %v923 = vunpack.c.l.b16 %v699
          %v924 = vunpack.c.l.b16 %v700
          %v925 = vunpack.c.l.b16 %v701
          %v926 = vunpack.c.l.b16 %v702
          %v927 = vunpack.c.l.b16 %v703
          %v928 = vunpack.c.l.b16 %v704
          %v929 = vunpack.c.l.b16 %v705
          %v930 = vunpack.c.l.b16 %v706
          %v931 = vunpack.c.l.b16 %v707
          %v932 = vunpack.c.l.b16 %v708
          %v933 = vunpack.c.l.b16 %v709
          %v934 = vunpack.c.l.b16 %v710
          %v935 = vunpack.c.l.b16 %v711
          %v936 = vunpack.c.l.b16 %v712
          %v937 = vunpack.c.l.b16 %v713
          %v938 = vunpack.c.l.b16 %v714
          %v939 = vunpack.c.l.b16 %v715
          %v940 = vunpack.c.l.b16 %v716
          %v941 = vunpack.c.l.b16 %v717
          %v942 = vunpack.c.l.b16 %v718
          %v943 = vunpack.c.l.b16 %v719
          %v944 = vunpack.c.l.b16 %v720
          %v945 = vunpack.c.l.b16 %v721
          %v946 = vunpack.c.l.b16 %v722
          %v947 = vunpack.c.l.b16 %v723
          %v948 = vunpack.c.l.b16 %v724
          %v949 = vunpack.c.l.b16 %v725
          %v950 = vunpack.c.l.b16 %v726
          %v951 = vunpack.c.l.b16 %v727
          %v952 = vunpack.c.l.b16 %v728
          %v953 = vunpack.c.l.b16 %v729
          %v954 = vunpack.c.l.b16 %v730
          %v955 = vunpack.c.l.b16 %v731
          %v956 = vunpack.c.l.b16 %v732
          %v957 = vpack.c.b16 %v910, %v909
          %v958 = vpack.c.b16 %v912, %v911
          %v959 = vpack.c.b16 %v914, %v913
          %v960 = vpack.c.b16 %v916, %v915
          %v961 = vpack.c.b16 %v918, %v917
          %v962 = vpack.c.b16 %v920, %v919
          %v963 = vpack.c.b16 %v922, %v921
          %v964 = vpack.c.b16 %v924, %v923
          %v965 = vpack.c.b16 %v926, %v925
          %v966 = vpack.c.b16 %v928, %v927
          %v967 = vpack.c.b16 %v930, %v929
          %v968 = vpack.c.b16 %v932, %v931
          %v969 = vpack.c.b16 %v934, %v933
          %v970 = vpack.c.b16 %v936, %v935
          %v971 = vpack.c.b16 %v938, %v937
          %v972 = vpack.c.b16 %v940, %v939
          %v973 = vpack.c.b16 %v942, %v941
          %v974 = vpack.c.b16 %v944, %v943
          %v975 = vpack.c.b16 %v946, %v945
          %v976 = vpack.c.b16 %v948, %v947
          %v977 = vpack.c.b16 %v950, %v949
          %v978 = vpack.c.b16 %v952, %v951
          %v979 = vpack.c.b16 %v954, %v953
          %v980 = vpack.c.b16 %v956, %v955
          %1005 = vmatpush.bf16.msra.mxu0 %v964
          %1006 = vmatpush.bf16.msra.mxu0 %v963
          %1007 = vmatpush.bf16.msra.mxu0 %v962
          %1008 = vmatpush.bf16.msra.mxu0 %v961
          %1009 = vmatpush.bf16.msra.mxu0 %v960
          %1010 = vmatpush.bf16.msra.mxu0 %v959
          %1011 = vmatpush.bf16.msra.mxu0 %v958
          %1012 = vmatpush.bf16.msra.mxu0 %v957
          %1013 = vmatmul.bf16.gmra.mxu0 %v813
          %v1014 = vpop.f32.mrf.mxu0
          %v1015 = vadd.f32 0.0, %v1014
          %v1016 = vpop.f32.mrf.mxu0
          %v1017 = vadd.f32 0.0, %v1016
          %1018 = vmatmul.bf16.gmra.mxu0 %v816
          %v1019 = vpop.f32.mrf.mxu0
          %v1020 = vadd.f32 0.0, %v1019
          %v1021 = vpop.f32.mrf.mxu0
          %v1022 = vadd.f32 0.0, %v1021
          %1023 = vmatmul.bf16.gmra.mxu0 %v819
          %v1024 = vpop.f32.mrf.mxu0
          %v1025 = vadd.f32 0.0, %v1024
          %v1026 = vpop.f32.mrf.mxu0
          %v1027 = vadd.f32 0.0, %v1026
          %1028 = vmatmul.bf16.gmra.mxu0 %v822
          %v1029 = vpop.f32.mrf.mxu0
          %v1030 = vadd.f32 0.0, %v1029
          %v1031 = vpop.f32.mrf.mxu0
          %v1032 = vadd.f32 0.0, %v1031
          %1033 = vmatmul.bf16.gmra.mxu0 %v825
          %v1034 = vpop.f32.mrf.mxu0
          %v1035 = vadd.f32 0.0, %v1034
          %v1036 = vpop.f32.mrf.mxu0
          %v1037 = vadd.f32 0.0, %v1036
          %1038 = vmatmul.bf16.gmra.mxu0 %v828
          %v1039 = vpop.f32.mrf.mxu0
          %v1040 = vadd.f32 0.0, %v1039
          %v1041 = vpop.f32.mrf.mxu0
          %v1042 = vadd.f32 0.0, %v1041
          %1043 = vmatmul.bf16.gmra.mxu0 %v831
          %v1044 = vpop.f32.mrf.mxu0
          %v1045 = vadd.f32 0.0, %v1044
          %v1046 = vpop.f32.mrf.mxu0
          %v1047 = vadd.f32 0.0, %v1046
          %1048 = vmatmul.bf16.gmra.mxu0 %v834
          %v1049 = vpop.f32.mrf.mxu0
          %v1050 = vadd.f32 0.0, %v1049
          %v1051 = vpop.f32.mrf.mxu0
          %v1052 = vadd.f32 0.0, %v1051
          %1053 = vdwg.mxu0
          %1054 = vmatpush.bf16.msra.mxu0 %v972
          %1055 = vmatpush.bf16.msra.mxu0 %v971
          %1056 = vmatpush.bf16.msra.mxu0 %v970
          %1057 = vmatpush.bf16.msra.mxu0 %v969
          %1058 = vmatpush.bf16.msra.mxu0 %v968
          %1059 = vmatpush.bf16.msra.mxu0 %v967
          %1060 = vmatpush.bf16.msra.mxu0 %v966
          %1061 = vmatpush.bf16.msra.mxu0 %v965
          %1062 = vmatmul.bf16.gmra.mxu0 %v814
          %v1063 = vpop.f32.mrf.mxu0
          %v1064 = vadd.f32 %v1015, %v1063
          %v1065 = vpop.f32.mrf.mxu0
          %v1066 = vadd.f32 %v1017, %v1065
          %1067 = vmatmul.bf16.gmra.mxu0 %v817
          %v1068 = vpop.f32.mrf.mxu0
          %v1069 = vadd.f32 %v1020, %v1068
          %v1070 = vpop.f32.mrf.mxu0
          %v1071 = vadd.f32 %v1022, %v1070
          %1072 = vmatmul.bf16.gmra.mxu0 %v820
          %v1073 = vpop.f32.mrf.mxu0
          %v1074 = vadd.f32 %v1025, %v1073
          %v1075 = vpop.f32.mrf.mxu0
          %v1076 = vadd.f32 %v1027, %v1075
          %1077 = vmatmul.bf16.gmra.mxu0 %v823
          %v1078 = vpop.f32.mrf.mxu0
          %v1079 = vadd.f32 %v1030, %v1078
          %v1080 = vpop.f32.mrf.mxu0
          %v1081 = vadd.f32 %v1032, %v1080
          %1082 = vmatmul.bf16.gmra.mxu0 %v826
          %v1083 = vpop.f32.mrf.mxu0
          %v1084 = vadd.f32 %v1035, %v1083
          %v1085 = vpop.f32.mrf.mxu0
          %v1086 = vadd.f32 %v1037, %v1085
          %1087 = vmatmul.bf16.gmra.mxu0 %v829
          %v1088 = vpop.f32.mrf.mxu0
          %v1089 = vadd.f32 %v1040, %v1088
          %v1090 = vpop.f32.mrf.mxu0
          %v1091 = vadd.f32 %v1042, %v1090
          %1092 = vmatmul.bf16.gmra.mxu0 %v832
          %v1093 = vpop.f32.mrf.mxu0
          %v1094 = vadd.f32 %v1045, %v1093
          %v1095 = vpop.f32.mrf.mxu0
          %v1096 = vadd.f32 %v1047, %v1095
          %1097 = vmatmul.bf16.gmra.mxu0 %v835
          %v1098 = vpop.f32.mrf.mxu0
          %v1099 = vadd.f32 %v1050, %v1098
          %v1100 = vpop.f32.mrf.mxu0
          %v1101 = vadd.f32 %v1052, %v1100
          %1102 = vdwg.mxu0
          %1103 = vmatpush.bf16.msra.mxu0 %v980
          %1104 = vmatpush.bf16.msra.mxu0 %v979
          %1105 = vmatpush.bf16.msra.mxu0 %v978
          %1106 = vmatpush.bf16.msra.mxu0 %v977
          %1107 = vmatpush.bf16.msra.mxu0 %v976
          %1108 = vmatpush.bf16.msra.mxu0 %v975
          %1109 = vmatpush.bf16.msra.mxu0 %v974
          %1110 = vmatpush.bf16.msra.mxu0 %v973
          %1111 = vmatmul.bf16.gmra.mxu0 %v815
          %v1112 = vpop.f32.mrf.mxu0
          %v1113 = vadd.f32 %v1064, %v1112
          %v1114 = vpop.f32.mrf.mxu0
          %v1115 = vadd.f32 %v1066, %v1114
          %1116 = vmatmul.bf16.gmra.mxu0 %v818
          %v1117 = vpop.f32.mrf.mxu0
          %v1118 = vadd.f32 %v1069, %v1117
          %v1119 = vpop.f32.mrf.mxu0
          %v1120 = vadd.f32 %v1071, %v1119
          %1121 = vmatmul.bf16.gmra.mxu0 %v821
          %v1122 = vpop.f32.mrf.mxu0
          %v1123 = vadd.f32 %v1074, %v1122
          %v1124 = vpop.f32.mrf.mxu0
          %v1125 = vadd.f32 %v1076, %v1124
          %1126 = vmatmul.bf16.gmra.mxu0 %v824
          %v1127 = vpop.f32.mrf.mxu0
          %v1128 = vadd.f32 %v1079, %v1127
          %v1129 = vpop.f32.mrf.mxu0
          %v1130 = vadd.f32 %v1081, %v1129
          %1131 = vmatmul.bf16.gmra.mxu0 %v827
          %v1132 = vpop.f32.mrf.mxu0
          %v1133 = vadd.f32 %v1084, %v1132
          %v1134 = vpop.f32.mrf.mxu0
          %v1135 = vadd.f32 %v1086, %v1134
          %1136 = vmatmul.bf16.gmra.mxu0 %v830
          %v1137 = vpop.f32.mrf.mxu0
          %v1138 = vadd.f32 %v1089, %v1137
          %v1139 = vpop.f32.mrf.mxu0
          %v1140 = vadd.f32 %v1091, %v1139
          %1141 = vmatmul.bf16.gmra.mxu0 %v833
          %v1142 = vpop.f32.mrf.mxu0
          %v1143 = vadd.f32 %v1094, %v1142
          %v1144 = vpop.f32.mrf.mxu0
          %v1145 = vadd.f32 %v1096, %v1144
          %1146 = vmatmul.bf16.gmra.mxu0 %v836
          %v1147 = vpop.f32.mrf.mxu0
          %v1148 = vadd.f32 %v1099, %v1147
          %v1149 = vpop.f32.mrf.mxu0
          %v1150 = vadd.f32 %v1101, %v1149
          %1151 = vdwg.mxu0
          %v1184 = vunpack.c.l.b16 %v569
          %v1185 = vunpack.c.h.b16 %v569
          %v1186 = vunpack.c.l.b16 %v570
          %v1187 = vunpack.c.l.b16 %v571
          %v1188 = vunpack.c.h.b16 %v571
          %v1189 = vunpack.c.l.b16 %v572
          %v1190 = vunpack.c.l.b16 %v573
          %v1191 = vunpack.c.h.b16 %v573
          %v1192 = vunpack.c.l.b16 %v574
          %v1193 = vunpack.c.l.b16 %v575
          %v1194 = vunpack.c.h.b16 %v575
          %v1195 = vunpack.c.l.b16 %v576
          %v1196 = vunpack.c.l.b16 %v577
          %v1197 = vunpack.c.h.b16 %v577
          %v1198 = vunpack.c.l.b16 %v578
          %v1199 = vunpack.c.l.b16 %v579
          %v1200 = vunpack.c.h.b16 %v579
          %v1201 = vunpack.c.l.b16 %v580
          %v1202 = vunpack.c.l.b16 %v581
          %v1203 = vunpack.c.h.b16 %v581
          %v1204 = vunpack.c.l.b16 %v582
          %v1205 = vunpack.c.l.b16 %v583
          %v1206 = vunpack.c.h.b16 %v583
          %v1207 = vunpack.c.l.b16 %v584
          %v1208 = vunpack.c.l.b16 %v585
          %v1209 = vunpack.c.h.b16 %v585
          %v1210 = vunpack.c.l.b16 %v586
          %v1211 = vunpack.c.l.b16 %v587
          %v1212 = vunpack.c.h.b16 %v587
          %v1213 = vunpack.c.l.b16 %v588
          %v1214 = vunpack.c.l.b16 %v589
          %v1215 = vunpack.c.h.b16 %v589
          %v1216 = vunpack.c.l.b16 %v590
          %v1217 = vunpack.c.l.b16 %v591
          %v1218 = vunpack.c.h.b16 %v591
          %v1219 = vunpack.c.l.b16 %v592
          %v1220 = vunpack.c.l.b16 %v593
          %v1221 = vunpack.c.h.b16 %v593
          %v1222 = vunpack.c.l.b16 %v594
          %v1223 = vunpack.c.l.b16 %v595
          %v1224 = vunpack.c.h.b16 %v595
          %v1225 = vunpack.c.l.b16 %v596
          %v1226 = vunpack.c.l.b16 %v597
          %v1227 = vunpack.c.h.b16 %v597
          %v1228 = vunpack.c.l.b16 %v598
          %v1229 = vunpack.c.l.b16 %v599
          %v1230 = vunpack.c.h.b16 %v599
          %v1231 = vunpack.c.l.b16 %v600
          %v1232 = vpack.c.b16 %v1187, %v1184
          %v1233 = vpack.c.b16 %v1188, %v1185
          %v1234 = vpack.c.b16 %v1189, %v1186
          %v1235 = vpack.c.b16 %v1193, %v1190
          %v1236 = vpack.c.b16 %v1194, %v1191
          %v1237 = vpack.c.b16 %v1195, %v1192
          %v1238 = vpack.c.b16 %v1199, %v1196
          %v1239 = vpack.c.b16 %v1200, %v1197
          %v1240 = vpack.c.b16 %v1201, %v1198
          %v1241 = vpack.c.b16 %v1205, %v1202
          %v1242 = vpack.c.b16 %v1206, %v1203
          %v1243 = vpack.c.b16 %v1207, %v1204
          %v1244 = vpack.c.b16 %v1211, %v1208
          %v1245 = vpack.c.b16 %v1212, %v1209
          %v1246 = vpack.c.b16 %v1213, %v1210
          %v1247 = vpack.c.b16 %v1217, %v1214
          %v1248 = vpack.c.b16 %v1218, %v1215
          %v1249 = vpack.c.b16 %v1219, %v1216
          %v1250 = vpack.c.b16 %v1223, %v1220
          %v1251 = vpack.c.b16 %v1224, %v1221
          %v1252 = vpack.c.b16 %v1225, %v1222
          %v1253 = vpack.c.b16 %v1229, %v1226
          %v1254 = vpack.c.b16 %v1230, %v1227
          %v1255 = vpack.c.b16 %v1231, %v1228
          %v1328 = vunpack.c.l.b16 %v601
          %v1329 = vunpack.c.l.b16 %v602
          %v1330 = vunpack.c.l.b16 %v603
          %v1331 = vunpack.c.l.b16 %v604
          %v1332 = vunpack.c.l.b16 %v605
          %v1333 = vunpack.c.l.b16 %v606
          %v1334 = vunpack.c.l.b16 %v607
          %v1335 = vunpack.c.l.b16 %v608
          %v1336 = vunpack.c.l.b16 %v609
          %v1337 = vunpack.c.l.b16 %v610
          %v1338 = vunpack.c.l.b16 %v611
          %v1339 = vunpack.c.l.b16 %v612
          %v1340 = vunpack.c.l.b16 %v613
          %v1341 = vunpack.c.l.b16 %v614
          %v1342 = vunpack.c.l.b16 %v615
          %v1343 = vunpack.c.l.b16 %v616
          %v1344 = vunpack.c.l.b16 %v617
          %v1345 = vunpack.c.l.b16 %v618
          %v1346 = vunpack.c.l.b16 %v619
          %v1347 = vunpack.c.l.b16 %v620
          %v1348 = vunpack.c.l.b16 %v621
          %v1349 = vunpack.c.l.b16 %v622
          %v1350 = vunpack.c.l.b16 %v623
          %v1351 = vunpack.c.l.b16 %v624
          %v1352 = vunpack.c.l.b16 %v625
          %v1353 = vunpack.c.l.b16 %v626
          %v1354 = vunpack.c.l.b16 %v627
          %v1355 = vunpack.c.l.b16 %v628
          %v1356 = vunpack.c.l.b16 %v629
          %v1357 = vunpack.c.l.b16 %v630
          %v1358 = vunpack.c.l.b16 %v631
          %v1359 = vunpack.c.l.b16 %v632
          %v1360 = vunpack.c.l.b16 %v633
          %v1361 = vunpack.c.l.b16 %v634
          %v1362 = vunpack.c.l.b16 %v635
          %v1363 = vunpack.c.l.b16 %v636
          %v1364 = vunpack.c.l.b16 %v637
          %v1365 = vunpack.c.l.b16 %v638
          %v1366 = vunpack.c.l.b16 %v639
          %v1367 = vunpack.c.l.b16 %v640
          %v1368 = vunpack.c.l.b16 %v641
          %v1369 = vunpack.c.l.b16 %v642
          %v1370 = vunpack.c.l.b16 %v643
          %v1371 = vunpack.c.l.b16 %v644
          %v1372 = vunpack.c.l.b16 %v645
          %v1373 = vunpack.c.l.b16 %v646
          %v1374 = vunpack.c.l.b16 %v647
          %v1375 = vunpack.c.l.b16 %v648
          %v1376 = vpack.c.b16 %v1329, %v1328
          %v1377 = vpack.c.b16 %v1331, %v1330
          %v1378 = vpack.c.b16 %v1333, %v1332
          %v1379 = vpack.c.b16 %v1335, %v1334
          %v1380 = vpack.c.b16 %v1337, %v1336
          %v1381 = vpack.c.b16 %v1339, %v1338
          %v1382 = vpack.c.b16 %v1341, %v1340
          %v1383 = vpack.c.b16 %v1343, %v1342
          %v1384 = vpack.c.b16 %v1345, %v1344
          %v1385 = vpack.c.b16 %v1347, %v1346
          %v1386 = vpack.c.b16 %v1349, %v1348
          %v1387 = vpack.c.b16 %v1351, %v1350
          %v1388 = vpack.c.b16 %v1353, %v1352
          %v1389 = vpack.c.b16 %v1355, %v1354
          %v1390 = vpack.c.b16 %v1357, %v1356
          %v1391 = vpack.c.b16 %v1359, %v1358
          %v1392 = vpack.c.b16 %v1361, %v1360
          %v1393 = vpack.c.b16 %v1363, %v1362
          %v1394 = vpack.c.b16 %v1365, %v1364
          %v1395 = vpack.c.b16 %v1367, %v1366
          %v1396 = vpack.c.b16 %v1369, %v1368
          %v1397 = vpack.c.b16 %v1371, %v1370
          %v1398 = vpack.c.b16 %v1373, %v1372
          %v1399 = vpack.c.b16 %v1375, %v1374
          %1424 = vmatpush.bf16.msra.mxu0 %v1383
          %1425 = vmatpush.bf16.msra.mxu0 %v1382
          %1426 = vmatpush.bf16.msra.mxu0 %v1381
          %1427 = vmatpush.bf16.msra.mxu0 %v1380
          %1428 = vmatpush.bf16.msra.mxu0 %v1379
          %1429 = vmatpush.bf16.msra.mxu0 %v1378
          %1430 = vmatpush.bf16.msra.mxu0 %v1377
          %1431 = vmatpush.bf16.msra.mxu0 %v1376
          %1432 = vmatmul.bf16.gmra.mxu0 %v1232
          %v1433 = vpop.f32.mrf.mxu0
          %v1434 = vadd.f32 %v1113, %v1433
          %v1435 = vpop.f32.mrf.mxu0
          %v1436 = vadd.f32 %v1115, %v1435
          %1437 = vmatmul.bf16.gmra.mxu0 %v1235
          %v1438 = vpop.f32.mrf.mxu0
          %v1439 = vadd.f32 %v1118, %v1438
          %v1440 = vpop.f32.mrf.mxu0
          %v1441 = vadd.f32 %v1120, %v1440
          %1442 = vmatmul.bf16.gmra.mxu0 %v1238
          %v1443 = vpop.f32.mrf.mxu0
          %v1444 = vadd.f32 %v1123, %v1443
          %v1445 = vpop.f32.mrf.mxu0
          %v1446 = vadd.f32 %v1125, %v1445
          %1447 = vmatmul.bf16.gmra.mxu0 %v1241
          %v1448 = vpop.f32.mrf.mxu0
          %v1449 = vadd.f32 %v1128, %v1448
          %v1450 = vpop.f32.mrf.mxu0
          %v1451 = vadd.f32 %v1130, %v1450
          %1452 = vmatmul.bf16.gmra.mxu0 %v1244
          %v1453 = vpop.f32.mrf.mxu0
          %v1454 = vadd.f32 %v1133, %v1453
          %v1455 = vpop.f32.mrf.mxu0
          %v1456 = vadd.f32 %v1135, %v1455
          %1457 = vmatmul.bf16.gmra.mxu0 %v1247
          %v1458 = vpop.f32.mrf.mxu0
          %v1459 = vadd.f32 %v1138, %v1458
          %v1460 = vpop.f32.mrf.mxu0
          %v1461 = vadd.f32 %v1140, %v1460
          %1462 = vmatmul.bf16.gmra.mxu0 %v1250
          %v1463 = vpop.f32.mrf.mxu0
          %v1464 = vadd.f32 %v1143, %v1463
          %v1465 = vpop.f32.mrf.mxu0
          %v1466 = vadd.f32 %v1145, %v1465
          %1467 = vmatmul.bf16.gmra.mxu0 %v1253
          %v1468 = vpop.f32.mrf.mxu0
          %v1469 = vadd.f32 %v1148, %v1468
          %v1470 = vpop.f32.mrf.mxu0
          %v1471 = vadd.f32 %v1150, %v1470
          %1472 = vdwg.mxu0
          %1473 = vmatpush.bf16.msra.mxu0 %v1391
          %1474 = vmatpush.bf16.msra.mxu0 %v1390
          %1475 = vmatpush.bf16.msra.mxu0 %v1389
          %1476 = vmatpush.bf16.msra.mxu0 %v1388
          %1477 = vmatpush.bf16.msra.mxu0 %v1387
          %1478 = vmatpush.bf16.msra.mxu0 %v1386
          %1479 = vmatpush.bf16.msra.mxu0 %v1385
          %1480 = vmatpush.bf16.msra.mxu0 %v1384
          %1481 = vmatmul.bf16.gmra.mxu0 %v1233
          %v1482 = vpop.f32.mrf.mxu0
          %v1483 = vadd.f32 %v1434, %v1482
          %v1484 = vpop.f32.mrf.mxu0
          %v1485 = vadd.f32 %v1436, %v1484
          %1486 = vmatmul.bf16.gmra.mxu0 %v1236
          %v1487 = vpop.f32.mrf.mxu0
          %v1488 = vadd.f32 %v1439, %v1487
          %v1489 = vpop.f32.mrf.mxu0
          %v1490 = vadd.f32 %v1441, %v1489
          %1491 = vmatmul.bf16.gmra.mxu0 %v1239
          %v1492 = vpop.f32.mrf.mxu0
          %v1493 = vadd.f32 %v1444, %v1492
          %v1494 = vpop.f32.mrf.mxu0
          %v1495 = vadd.f32 %v1446, %v1494
          %1496 = vmatmul.bf16.gmra.mxu0 %v1242
          %v1497 = vpop.f32.mrf.mxu0
          %v1498 = vadd.f32 %v1449, %v1497
          %v1499 = vpop.f32.mrf.mxu0
          %v1500 = vadd.f32 %v1451, %v1499
          %1501 = vmatmul.bf16.gmra.mxu0 %v1245
          %v1502 = vpop.f32.mrf.mxu0
          %v1503 = vadd.f32 %v1454, %v1502
          %v1504 = vpop.f32.mrf.mxu0
          %v1505 = vadd.f32 %v1456, %v1504
          %1506 = vmatmul.bf16.gmra.mxu0 %v1248
          %v1507 = vpop.f32.mrf.mxu0
          %v1508 = vadd.f32 %v1459, %v1507
          %v1509 = vpop.f32.mrf.mxu0
          %v1510 = vadd.f32 %v1461, %v1509
          %1511 = vmatmul.bf16.gmra.mxu0 %v1251
          %v1512 = vpop.f32.mrf.mxu0
          %v1513 = vadd.f32 %v1464, %v1512
          %v1514 = vpop.f32.mrf.mxu0
          %v1515 = vadd.f32 %v1466, %v1514
          %1516 = vmatmul.bf16.gmra.mxu0 %v1254
          %v1517 = vpop.f32.mrf.mxu0
          %v1518 = vadd.f32 %v1469, %v1517
          %v1519 = vpop.f32.mrf.mxu0
          %v1520 = vadd.f32 %v1471, %v1519
          %1521 = vdwg.mxu0
          %1522 = vmatpush.bf16.msra.mxu0 %v1399
          %1523 = vmatpush.bf16.msra.mxu0 %v1398
          %1524 = vmatpush.bf16.msra.mxu0 %v1397
          %1525 = vmatpush.bf16.msra.mxu0 %v1396
          %1526 = vmatpush.bf16.msra.mxu0 %v1395
          %1527 = vmatpush.bf16.msra.mxu0 %v1394
          %1528 = vmatpush.bf16.msra.mxu0 %v1393
          %1529 = vmatpush.bf16.msra.mxu0 %v1392
          %1530 = vmatmul.bf16.gmra.mxu0 %v1234
          %v1531 = vpop.f32.mrf.mxu0
          %v1532 = vadd.f32 %v1483, %v1531
          %v1533 = vpop.f32.mrf.mxu0
          %v1534 = vadd.f32 %v1485, %v1533
          %1535 = vmatmul.bf16.gmra.mxu0 %v1237
          %v1536 = vpop.f32.mrf.mxu0
          %v1537 = vadd.f32 %v1488, %v1536
          %v1538 = vpop.f32.mrf.mxu0
          %v1539 = vadd.f32 %v1490, %v1538
          %1540 = vmatmul.bf16.gmra.mxu0 %v1240
          %v1541 = vpop.f32.mrf.mxu0
          %v1542 = vadd.f32 %v1493, %v1541
          %v1543 = vpop.f32.mrf.mxu0
          %v1544 = vadd.f32 %v1495, %v1543
          %1545 = vmatmul.bf16.gmra.mxu0 %v1243
          %v1546 = vpop.f32.mrf.mxu0
          %v1547 = vadd.f32 %v1498, %v1546
          %v1548 = vpop.f32.mrf.mxu0
          %v1549 = vadd.f32 %v1500, %v1548
          %1550 = vmatmul.bf16.gmra.mxu0 %v1246
          %v1551 = vpop.f32.mrf.mxu0
          %v1552 = vadd.f32 %v1503, %v1551
          %v1553 = vpop.f32.mrf.mxu0
          %v1554 = vadd.f32 %v1505, %v1553
          %1555 = vmatmul.bf16.gmra.mxu0 %v1249
          %v1556 = vpop.f32.mrf.mxu0
          %v1557 = vadd.f32 %v1508, %v1556
          %v1558 = vpop.f32.mrf.mxu0
          %v1559 = vadd.f32 %v1510, %v1558
          %1560 = vmatmul.bf16.gmra.mxu0 %v1252
          %v1561 = vpop.f32.mrf.mxu0
          %v1562 = vadd.f32 %v1513, %v1561
          %v1563 = vpop.f32.mrf.mxu0
          %v1564 = vadd.f32 %v1515, %v1563
          %1565 = vmatmul.bf16.gmra.mxu0 %v1255
          %v1566 = vpop.f32.mrf.mxu0
          %v1567 = vadd.f32 %v1518, %v1566
          %v1568 = vpop.f32.mrf.mxu0
          %v1569 = vadd.f32 %v1520, %v1568
          %1570 = vdwg.mxu0
          %s1571 = sadd.s32 6, %s566
          %s1572 = smul.addr %s1571, 4
          %s1573 = scalar_lea.vmem [#allocation2], %s1572
          %v1574 = vld [vmem:[%s1573] sm:$0xff]
          %v1575 = vld [vmem:[%s1573 + $0x8] sm:$0xf]
          %v1576 = vld [vmem:[%s1573 + $0xc] sm:$0xff]
          %v1577 = vld [vmem:[%s1573 + $0x14] sm:$0xf]
          %v1578 = vld [vmem:[%s1573 + $0x18] sm:$0xff]
          %v1579 = vld [vmem:[%s1573 + $0x20] sm:$0xf]
          %v1580 = vld [vmem:[%s1573 + $0x24] sm:$0xff]
          %v1581 = vld [vmem:[%s1573 + $0x2c] sm:$0xf]
          %v1582 = vld [vmem:[%s1573 + $0x30] sm:$0xff]
          %v1583 = vld [vmem:[%s1573 + $0x38] sm:$0xf]
          %v1584 = vld [vmem:[%s1573 + $0x3c] sm:$0xff]
          %v1585 = vld [vmem:[%s1573 + $0x44] sm:$0xf]
          %v1586 = vld [vmem:[%s1573 + $0x48] sm:$0xff]
          %v1587 = vld [vmem:[%s1573 + $0x50] sm:$0xf]
          %v1588 = vld [vmem:[%s1573 + $0x54] sm:$0xff]
          %v1589 = vld [vmem:[%s1573 + $0x5c] sm:$0xf]
          %v1590 = vld [vmem:[%s1573 + $0x78] sm:$0xff]
          %v1591 = vld [vmem:[%s1573 + $0x80] sm:$0xf]
          %v1592 = vld [vmem:[%s1573 + $0x84] sm:$0xff]
          %v1593 = vld [vmem:[%s1573 + $0x8c] sm:$0xf]
          %v1594 = vld [vmem:[%s1573 + $0x90] sm:$0xff]
          %v1595 = vld [vmem:[%s1573 + $0x98] sm:$0xf]
          %v1596 = vld [vmem:[%s1573 + $0x9c] sm:$0xff]
          %v1597 = vld [vmem:[%s1573 + $0xa4] sm:$0xf]
          %v1598 = vld [vmem:[%s1573 + $0xa8] sm:$0xff]
          %v1599 = vld [vmem:[%s1573 + $0xb0] sm:$0xf]
          %v1600 = vld [vmem:[%s1573 + $0xb4] sm:$0xff]
          %v1601 = vld [vmem:[%s1573 + $0xbc] sm:$0xf]
          %v1602 = vld [vmem:[%s1573 + $0xc0] sm:$0xff]
          %v1603 = vld [vmem:[%s1573 + $0xc8] sm:$0xf]
          %v1604 = vld [vmem:[%s1573 + $0xcc] sm:$0xff]
          %v1605 = vld [vmem:[%s1573 + $0xd4] sm:$0xf]
          %s1606 = scalar_lea.vmem [#allocation6], 384
          %v1607 = vld [vmem:[%s1606] sm:$0xf]
          %v1608 = vld [vmem:[%s1606 + $0x4] sm:$0xf]
          %v1609 = vld [vmem:[%s1606 + $0x8] sm:$0xf]
          %v1610 = vld [vmem:[%s1606 + $0xc] sm:$0xf]
          %v1611 = vld [vmem:[%s1606 + $0x10] sm:$0xf]
          %v1612 = vld [vmem:[%s1606 + $0x14] sm:$0xf]
          %v1613 = vld [vmem:[%s1606 + $0x18] sm:$0xf]
          %v1614 = vld [vmem:[%s1606 + $0x1c] sm:$0xf]
          %v1615 = vld [vmem:[%s1606 + $0x20] sm:$0xf]
          %v1616 = vld [vmem:[%s1606 + $0x24] sm:$0xf]
          %v1617 = vld [vmem:[%s1606 + $0x28] sm:$0xf]
          %v1618 = vld [vmem:[%s1606 + $0x2c] sm:$0xf]
          %v1619 = vld [vmem:[%s1606 + $0x30] sm:$0xf]
          %v1620 = vld [vmem:[%s1606 + $0x34] sm:$0xf]
          %v1621 = vld [vmem:[%s1606 + $0x38] sm:$0xf]
          %v1622 = vld [vmem:[%s1606 + $0x3c] sm:$0xf]
          %v1623 = vld [vmem:[%s1606 + $0x40] sm:$0xf]
          %v1624 = vld [vmem:[%s1606 + $0x44] sm:$0xf]
          %v1625 = vld [vmem:[%s1606 + $0x48] sm:$0xf]
          %v1626 = vld [vmem:[%s1606 + $0x4c] sm:$0xf]
          %v1627 = vld [vmem:[%s1606 + $0x50] sm:$0xf]
          %v1628 = vld [vmem:[%s1606 + $0x54] sm:$0xf]
          %v1629 = vld [vmem:[%s1606 + $0x58] sm:$0xf]
          %v1630 = vld [vmem:[%s1606 + $0x5c] sm:$0xf]
          %v1631 = vld [vmem:[%s1606 + $0x60] sm:$0xf]
          %v1632 = vld [vmem:[%s1606 + $0x64] sm:$0xf]
          %v1633 = vld [vmem:[%s1606 + $0x68] sm:$0xf]
          %v1634 = vld [vmem:[%s1606 + $0x6c] sm:$0xf]
          %v1635 = vld [vmem:[%s1606 + $0x70] sm:$0xf]
          %v1636 = vld [vmem:[%s1606 + $0x74] sm:$0xf]
          %v1637 = vld [vmem:[%s1606 + $0x78] sm:$0xf]
          %v1638 = vld [vmem:[%s1606 + $0x7c] sm:$0xf]
          %v1639 = vld [vmem:[%s1606 + $0x80] sm:$0xf]
          %v1640 = vld [vmem:[%s1606 + $0x84] sm:$0xf]
          %v1641 = vld [vmem:[%s1606 + $0x88] sm:$0xf]
          %v1642 = vld [vmem:[%s1606 + $0x8c] sm:$0xf]
          %v1643 = vld [vmem:[%s1606 + $0x90] sm:$0xf]
          %v1644 = vld [vmem:[%s1606 + $0x94] sm:$0xf]
          %v1645 = vld [vmem:[%s1606 + $0x98] sm:$0xf]
          %v1646 = vld [vmem:[%s1606 + $0x9c] sm:$0xf]
          %v1647 = vld [vmem:[%s1606 + $0xa0] sm:$0xf]
          %v1648 = vld [vmem:[%s1606 + $0xa4] sm:$0xf]
          %v1649 = vld [vmem:[%s1606 + $0xa8] sm:$0xf]
          %v1650 = vld [vmem:[%s1606 + $0xac] sm:$0xf]
          %v1651 = vld [vmem:[%s1606 + $0xb0] sm:$0xf]
          %v1652 = vld [vmem:[%s1606 + $0xb4] sm:$0xf]
          %v1653 = vld [vmem:[%s1606 + $0xb8] sm:$0xf]
          %v1654 = vld [vmem:[%s1606 + $0xbc] sm:$0xf]
          %v1687 = vunpack.c.l.b16 %v1574
          %v1688 = vunpack.c.h.b16 %v1574
          %v1689 = vunpack.c.l.b16 %v1575
          %v1690 = vunpack.c.l.b16 %v1576
          %v1691 = vunpack.c.h.b16 %v1576
          %v1692 = vunpack.c.l.b16 %v1577
          %v1693 = vunpack.c.l.b16 %v1578
          %v1694 = vunpack.c.h.b16 %v1578
          %v1695 = vunpack.c.l.b16 %v1579
          %v1696 = vunpack.c.l.b16 %v1580
          %v1697 = vunpack.c.h.b16 %v1580
          %v1698 = vunpack.c.l.b16 %v1581
          %v1699 = vunpack.c.l.b16 %v1582
          %v1700 = vunpack.c.h.b16 %v1582
          %v1701 = vunpack.c.l.b16 %v1583
          %v1702 = vunpack.c.l.b16 %v1584
          %v1703 = vunpack.c.h.b16 %v1584
          %v1704 = vunpack.c.l.b16 %v1585
          %v1705 = vunpack.c.l.b16 %v1586
          %v1706 = vunpack.c.h.b16 %v1586
          %v1707 = vunpack.c.l.b16 %v1587
          %v1708 = vunpack.c.l.b16 %v1588
          %v1709 = vunpack.c.h.b16 %v1588
          %v1710 = vunpack.c.l.b16 %v1589
          %v1711 = vunpack.c.l.b16 %v1590
          %v1712 = vunpack.c.h.b16 %v1590
          %v1713 = vunpack.c.l.b16 %v1591
          %v1714 = vunpack.c.l.b16 %v1592
          %v1715 = vunpack.c.h.b16 %v1592
          %v1716 = vunpack.c.l.b16 %v1593
          %v1717 = vunpack.c.l.b16 %v1594
          %v1718 = vunpack.c.h.b16 %v1594
          %v1719 = vunpack.c.l.b16 %v1595
          %v1720 = vunpack.c.l.b16 %v1596
          %v1721 = vunpack.c.h.b16 %v1596
          %v1722 = vunpack.c.l.b16 %v1597
          %v1723 = vunpack.c.l.b16 %v1598
          %v1724 = vunpack.c.h.b16 %v1598
          %v1725 = vunpack.c.l.b16 %v1599
          %v1726 = vunpack.c.l.b16 %v1600
          %v1727 = vunpack.c.h.b16 %v1600
          %v1728 = vunpack.c.l.b16 %v1601
          %v1729 = vunpack.c.l.b16 %v1602
          %v1730 = vunpack.c.h.b16 %v1602
          %v1731 = vunpack.c.l.b16 %v1603
          %v1732 = vunpack.c.l.b16 %v1604
          %v1733 = vunpack.c.h.b16 %v1604
          %v1734 = vunpack.c.l.b16 %v1605
          %v1735 = vpack.c.b16 %v1690, %v1687
          %v1736 = vpack.c.b16 %v1691, %v1688
          %v1737 = vpack.c.b16 %v1692, %v1689
          %v1738 = vpack.c.b16 %v1696, %v1693
          %v1739 = vpack.c.b16 %v1697, %v1694
          %v1740 = vpack.c.b16 %v1698, %v1695
          %v1741 = vpack.c.b16 %v1702, %v1699
          %v1742 = vpack.c.b16 %v1703, %v1700
          %v1743 = vpack.c.b16 %v1704, %v1701
          %v1744 = vpack.c.b16 %v1708, %v1705
          %v1745 = vpack.c.b16 %v1709, %v1706
          %v1746 = vpack.c.b16 %v1710, %v1707
          %v1747 = vpack.c.b16 %v1714, %v1711
          %v1748 = vpack.c.b16 %v1715, %v1712
          %v1749 = vpack.c.b16 %v1716, %v1713
          %v1750 = vpack.c.b16 %v1720, %v1717
          %v1751 = vpack.c.b16 %v1721, %v1718
          %v1752 = vpack.c.b16 %v1722, %v1719
          %v1753 = vpack.c.b16 %v1726, %v1723
          %v1754 = vpack.c.b16 %v1727, %v1724
          %v1755 = vpack.c.b16 %v1728, %v1725
          %v1756 = vpack.c.b16 %v1732, %v1729
          %v1757 = vpack.c.b16 %v1733, %v1730
          %v1758 = vpack.c.b16 %v1734, %v1731
          %v1831 = vunpack.c.l.b16 %v1607
          %v1832 = vunpack.c.l.b16 %v1608
          %v1833 = vunpack.c.l.b16 %v1609
          %v1834 = vunpack.c.l.b16 %v1610
          %v1835 = vunpack.c.l.b16 %v1611
          %v1836 = vunpack.c.l.b16 %v1612
          %v1837 = vunpack.c.l.b16 %v1613
          %v1838 = vunpack.c.l.b16 %v1614
          %v1839 = vunpack.c.l.b16 %v1615
          %v1840 = vunpack.c.l.b16 %v1616
          %v1841 = vunpack.c.l.b16 %v1617
          %v1842 = vunpack.c.l.b16 %v1618
          %v1843 = vunpack.c.l.b16 %v1619
          %v1844 = vunpack.c.l.b16 %v1620
          %v1845 = vunpack.c.l.b16 %v1621
          %v1846 = vunpack.c.l.b16 %v1622
          %v1847 = vunpack.c.l.b16 %v1623
          %v1848 = vunpack.c.l.b16 %v1624
          %v1849 = vunpack.c.l.b16 %v1625
          %v1850 = vunpack.c.l.b16 %v1626
          %v1851 = vunpack.c.l.b16 %v1627
          %v1852 = vunpack.c.l.b16 %v1628
          %v1853 = vunpack.c.l.b16 %v1629
          %v1854 = vunpack.c.l.b16 %v1630
          %v1855 = vunpack.c.l.b16 %v1631
          %v1856 = vunpack.c.l.b16 %v1632
          %v1857 = vunpack.c.l.b16 %v1633
          %v1858 = vunpack.c.l.b16 %v1634
          %v1859 = vunpack.c.l.b16 %v1635
          %v1860 = vunpack.c.l.b16 %v1636
          %v1861 = vunpack.c.l.b16 %v1637
          %v1862 = vunpack.c.l.b16 %v1638
          %v1863 = vunpack.c.l.b16 %v1639
          %v1864 = vunpack.c.l.b16 %v1640
          %v1865 = vunpack.c.l.b16 %v1641
          %v1866 = vunpack.c.l.b16 %v1642
          %v1867 = vunpack.c.l.b16 %v1643
          %v1868 = vunpack.c.l.b16 %v1644
          %v1869 = vunpack.c.l.b16 %v1645
          %v1870 = vunpack.c.l.b16 %v1646
          %v1871 = vunpack.c.l.b16 %v1647
          %v1872 = vunpack.c.l.b16 %v1648
          %v1873 = vunpack.c.l.b16 %v1649
          %v1874 = vunpack.c.l.b16 %v1650
          %v1875 = vunpack.c.l.b16 %v1651
          %v1876 = vunpack.c.l.b16 %v1652
          %v1877 = vunpack.c.l.b16 %v1653
          %v1878 = vunpack.c.l.b16 %v1654
          %v1879 = vpack.c.b16 %v1832, %v1831
          %v1880 = vpack.c.b16 %v1834, %v1833
          %v1881 = vpack.c.b16 %v1836, %v1835
          %v1882 = vpack.c.b16 %v1838, %v1837
          %v1883 = vpack.c.b16 %v1840, %v1839
          %v1884 = vpack.c.b16 %v1842, %v1841
          %v1885 = vpack.c.b16 %v1844, %v1843
          %v1886 = vpack.c.b16 %v1846, %v1845
          %v1887 = vpack.c.b16 %v1848, %v1847
          %v1888 = vpack.c.b16 %v1850, %v1849
          %v1889 = vpack.c.b16 %v1852, %v1851
          %v1890 = vpack.c.b16 %v1854, %v1853
          %v1891 = vpack.c.b16 %v1856, %v1855
          %v1892 = vpack.c.b16 %v1858, %v1857
          %v1893 = vpack.c.b16 %v1860, %v1859
          %v1894 = vpack.c.b16 %v1862, %v1861
          %v1895 = vpack.c.b16 %v1864, %v1863
          %v1896 = vpack.c.b16 %v1866, %v1865
          %v1897 = vpack.c.b16 %v1868, %v1867
          %v1898 = vpack.c.b16 %v1870, %v1869
          %v1899 = vpack.c.b16 %v1872, %v1871
          %v1900 = vpack.c.b16 %v1874, %v1873
          %v1901 = vpack.c.b16 %v1876, %v1875
          %v1902 = vpack.c.b16 %v1878, %v1877
          %1927 = vmatpush.bf16.msra.mxu0 %v1886
          %1928 = vmatpush.bf16.msra.mxu0 %v1885
          %1929 = vmatpush.bf16.msra.mxu0 %v1884
          %1930 = vmatpush.bf16.msra.mxu0 %v1883
          %1931 = vmatpush.bf16.msra.mxu0 %v1882
          %1932 = vmatpush.bf16.msra.mxu0 %v1881
          %1933 = vmatpush.bf16.msra.mxu0 %v1880
          %1934 = vmatpush.bf16.msra.mxu0 %v1879
          %1935 = vmatmul.bf16.gmra.mxu0 %v1735
          %v1936 = vpop.f32.mrf.mxu0
          %v1937 = vadd.f32 0.0, %v1936
          %v1938 = vpop.f32.mrf.mxu0
          %v1939 = vadd.f32 0.0, %v1938
          %1940 = vmatmul.bf16.gmra.mxu0 %v1738
          %v1941 = vpop.f32.mrf.mxu0
          %v1942 = vadd.f32 0.0, %v1941
          %v1943 = vpop.f32.mrf.mxu0
          %v1944 = vadd.f32 0.0, %v1943
          %1945 = vmatmul.bf16.gmra.mxu0 %v1741
          %v1946 = vpop.f32.mrf.mxu0
          %v1947 = vadd.f32 0.0, %v1946
          %v1948 = vpop.f32.mrf.mxu0
          %v1949 = vadd.f32 0.0, %v1948
          %1950 = vmatmul.bf16.gmra.mxu0 %v1744
          %v1951 = vpop.f32.mrf.mxu0
          %v1952 = vadd.f32 0.0, %v1951
          %v1953 = vpop.f32.mrf.mxu0
          %v1954 = vadd.f32 0.0, %v1953
          %1955 = vmatmul.bf16.gmra.mxu0 %v1747
          %v1956 = vpop.f32.mrf.mxu0
          %v1957 = vadd.f32 0.0, %v1956
          %v1958 = vpop.f32.mrf.mxu0
          %v1959 = vadd.f32 0.0, %v1958
          %1960 = vmatmul.bf16.gmra.mxu0 %v1750
          %v1961 = vpop.f32.mrf.mxu0
          %v1962 = vadd.f32 0.0, %v1961
          %v1963 = vpop.f32.mrf.mxu0
          %v1964 = vadd.f32 0.0, %v1963
          %1965 = vmatmul.bf16.gmra.mxu0 %v1753
          %v1966 = vpop.f32.mrf.mxu0
          %v1967 = vadd.f32 0.0, %v1966
          %v1968 = vpop.f32.mrf.mxu0
          %v1969 = vadd.f32 0.0, %v1968
          %1970 = vmatmul.bf16.gmra.mxu0 %v1756
          %v1971 = vpop.f32.mrf.mxu0
          %v1972 = vadd.f32 0.0, %v1971
          %v1973 = vpop.f32.mrf.mxu0
          %v1974 = vadd.f32 0.0, %v1973
          %1975 = vdwg.mxu0
          %1976 = vmatpush.bf16.msra.mxu0 %v1894
          %1977 = vmatpush.bf16.msra.mxu0 %v1893
          %1978 = vmatpush.bf16.msra.mxu0 %v1892
          %1979 = vmatpush.bf16.msra.mxu0 %v1891
          %1980 = vmatpush.bf16.msra.mxu0 %v1890
          %1981 = vmatpush.bf16.msra.mxu0 %v1889
          %1982 = vmatpush.bf16.msra.mxu0 %v1888
          %1983 = vmatpush.bf16.msra.mxu0 %v1887
          %1984 = vmatmul.bf16.gmra.mxu0 %v1736
          %v1985 = vpop.f32.mrf.mxu0
          %v1986 = vadd.f32 %v1937, %v1985
          %v1987 = vpop.f32.mrf.mxu0
          %v1988 = vadd.f32 %v1939, %v1987
          %1989 = vmatmul.bf16.gmra.mxu0 %v1739
          %v1990 = vpop.f32.mrf.mxu0
          %v1991 = vadd.f32 %v1942, %v1990
          %v1992 = vpop.f32.mrf.mxu0
          %v1993 = vadd.f32 %v1944, %v1992
          %1994 = vmatmul.bf16.gmra.mxu0 %v1742
          %v1995 = vpop.f32.mrf.mxu0
          %v1996 = vadd.f32 %v1947, %v1995
          %v1997 = vpop.f32.mrf.mxu0
          %v1998 = vadd.f32 %v1949, %v1997
          %1999 = vmatmul.bf16.gmra.mxu0 %v1745
          %v2000 = vpop.f32.mrf.mxu0
          %v2001 = vadd.f32 %v1952, %v2000
          %v2002 = vpop.f32.mrf.mxu0
          %v2003 = vadd.f32 %v1954, %v2002
          %2004 = vmatmul.bf16.gmra.mxu0 %v1748
          %v2005 = vpop.f32.mrf.mxu0
          %v2006 = vadd.f32 %v1957, %v2005
          %v2007 = vpop.f32.mrf.mxu0
          %v2008 = vadd.f32 %v1959, %v2007
          %2009 = vmatmul.bf16.gmra.mxu0 %v1751
          %v2010 = vpop.f32.mrf.mxu0
          %v2011 = vadd.f32 %v1962, %v2010
          %v2012 = vpop.f32.mrf.mxu0
          %v2013 = vadd.f32 %v1964, %v2012
          %2014 = vmatmul.bf16.gmra.mxu0 %v1754
          %v2015 = vpop.f32.mrf.mxu0
          %v2016 = vadd.f32 %v1967, %v2015
          %v2017 = vpop.f32.mrf.mxu0
          %v2018 = vadd.f32 %v1969, %v2017
          %2019 = vmatmul.bf16.gmra.mxu0 %v1757
          %v2020 = vpop.f32.mrf.mxu0
          %v2021 = vadd.f32 %v1972, %v2020
          %v2022 = vpop.f32.mrf.mxu0
          %v2023 = vadd.f32 %v1974, %v2022
          %2024 = vdwg.mxu0
          %2025 = vmatpush.bf16.msra.mxu0 %v1902
          %2026 = vmatpush.bf16.msra.mxu0 %v1901
          %2027 = vmatpush.bf16.msra.mxu0 %v1900
          %2028 = vmatpush.bf16.msra.mxu0 %v1899
          %2029 = vmatpush.bf16.msra.mxu0 %v1898
          %2030 = vmatpush.bf16.msra.mxu0 %v1897
          %2031 = vmatpush.bf16.msra.mxu0 %v1896
          %2032 = vmatpush.bf16.msra.mxu0 %v1895
          %2033 = vmatmul.bf16.gmra.mxu0 %v1737
          %v2034 = vpop.f32.mrf.mxu0
          %v2035 = vadd.f32 %v1986, %v2034
          %v2036 = vpop.f32.mrf.mxu0
          %v2037 = vadd.f32 %v1988, %v2036
          %2038 = vmatmul.bf16.gmra.mxu0 %v1740
          %v2039 = vpop.f32.mrf.mxu0
          %v2040 = vadd.f32 %v1991, %v2039
          %v2041 = vpop.f32.mrf.mxu0
          %v2042 = vadd.f32 %v1993, %v2041
          %2043 = vmatmul.bf16.gmra.mxu0 %v1743
          %v2044 = vpop.f32.mrf.mxu0
          %v2045 = vadd.f32 %v1996, %v2044
          %v2046 = vpop.f32.mrf.mxu0
          %v2047 = vadd.f32 %v1998, %v2046
          %2048 = vmatmul.bf16.gmra.mxu0 %v1746
          %v2049 = vpop.f32.mrf.mxu0
          %v2050 = vadd.f32 %v2001, %v2049
          %v2051 = vpop.f32.mrf.mxu0
          %v2052 = vadd.f32 %v2003, %v2051
          %2053 = vmatmul.bf16.gmra.mxu0 %v1749
          %v2054 = vpop.f32.mrf.mxu0
          %v2055 = vadd.f32 %v2006, %v2054
          %v2056 = vpop.f32.mrf.mxu0
          %v2057 = vadd.f32 %v2008, %v2056
          %2058 = vmatmul.bf16.gmra.mxu0 %v1752
          %v2059 = vpop.f32.mrf.mxu0
          %v2060 = vadd.f32 %v2011, %v2059
          %v2061 = vpop.f32.mrf.mxu0
          %v2062 = vadd.f32 %v2013, %v2061
          %2063 = vmatmul.bf16.gmra.mxu0 %v1755
          %v2064 = vpop.f32.mrf.mxu0
          %v2065 = vadd.f32 %v2016, %v2064
          %v2066 = vpop.f32.mrf.mxu0
          %v2067 = vadd.f32 %v2018, %v2066
          %2068 = vmatmul.bf16.gmra.mxu0 %v1758
          %v2069 = vpop.f32.mrf.mxu0
          %v2070 = vadd.f32 %v2021, %v2069
          %v2071 = vpop.f32.mrf.mxu0
          %v2072 = vadd.f32 %v2023, %v2071
          %2073 = vdwg.mxu0
          %v2074 = vadd.f32 %v1532, %v2035
          %v2075 = vadd.f32 %v1534, %v2037
          %v2076 = vadd.f32 %v1537, %v2040
          %v2077 = vadd.f32 %v1539, %v2042
          %v2078 = vadd.f32 %v1542, %v2045
          %v2079 = vadd.f32 %v1544, %v2047
          %v2080 = vadd.f32 %v1547, %v2050
          %v2081 = vadd.f32 %v1549, %v2052
          %v2082 = vadd.f32 %v1552, %v2055
          %v2083 = vadd.f32 %v1554, %v2057
          %v2084 = vadd.f32 %v1557, %v2060
          %v2085 = vadd.f32 %v1559, %v2062
          %v2086 = vadd.f32 %v1562, %v2065
          %v2087 = vadd.f32 %v1564, %v2067
          %v2088 = vadd.f32 %v1567, %v2070
          %v2089 = vadd.f32 %v1569, %v2072
          %s2090 = sadd.s32 %s565, 1
          %s2091 = smul.u32 %s2090, 30
          %s2092 = smul.addr %s2091, 4
          %s2093 = scalar_lea.vmem [#allocation2], %s2092
          %v2094 = vld [vmem:[%s2093] sm:$0xff]
          %v2095 = vld [vmem:[%s2093 + $0x8] sm:$0xf]
          %v2096 = vld [vmem:[%s2093 + $0xc] sm:$0xff]
          %v2097 = vld [vmem:[%s2093 + $0x14] sm:$0xf]
          %v2098 = vld [vmem:[%s2093 + $0x18] sm:$0xff]
          %v2099 = vld [vmem:[%s2093 + $0x20] sm:$0xf]
          %v2100 = vld [vmem:[%s2093 + $0x24] sm:$0xff]
          %v2101 = vld [vmem:[%s2093 + $0x2c] sm:$0xf]
          %v2102 = vld [vmem:[%s2093 + $0x30] sm:$0xff]
          %v2103 = vld [vmem:[%s2093 + $0x38] sm:$0xf]
          %v2104 = vld [vmem:[%s2093 + $0x3c] sm:$0xff]
          %v2105 = vld [vmem:[%s2093 + $0x44] sm:$0xf]
          %v2106 = vld [vmem:[%s2093 + $0x48] sm:$0xff]
          %v2107 = vld [vmem:[%s2093 + $0x50] sm:$0xf]
          %v2108 = vld [vmem:[%s2093 + $0x54] sm:$0xff]
          %v2109 = vld [vmem:[%s2093 + $0x5c] sm:$0xf]
          %v2110 = vld [vmem:[%s2093 + $0x78] sm:$0xff]
          %v2111 = vld [vmem:[%s2093 + $0x80] sm:$0xf]
          %v2112 = vld [vmem:[%s2093 + $0x84] sm:$0xff]
          %v2113 = vld [vmem:[%s2093 + $0x8c] sm:$0xf]
          %v2114 = vld [vmem:[%s2093 + $0x90] sm:$0xff]
          %v2115 = vld [vmem:[%s2093 + $0x98] sm:$0xf]
          %v2116 = vld [vmem:[%s2093 + $0x9c] sm:$0xff]
          %v2117 = vld [vmem:[%s2093 + $0xa4] sm:$0xf]
          %v2118 = vld [vmem:[%s2093 + $0xa8] sm:$0xff]
          %v2119 = vld [vmem:[%s2093 + $0xb0] sm:$0xf]
          %v2120 = vld [vmem:[%s2093 + $0xb4] sm:$0xff]
          %v2121 = vld [vmem:[%s2093 + $0xbc] sm:$0xf]
          %v2122 = vld [vmem:[%s2093 + $0xc0] sm:$0xff]
          %v2123 = vld [vmem:[%s2093 + $0xc8] sm:$0xf]
          %v2124 = vld [vmem:[%s2093 + $0xcc] sm:$0xff]
          %v2125 = vld [vmem:[%s2093 + $0xd4] sm:$0xf]
          %s2126 = scalar_lea.vmem [#allocation6], 576
          %v2127 = vld [vmem:[%s2126] sm:$0xf]
          %v2128 = vld [vmem:[%s2126 + $0x4] sm:$0xf]
          %v2129 = vld [vmem:[%s2126 + $0x8] sm:$0xf]
          %v2130 = vld [vmem:[%s2126 + $0xc] sm:$0xf]
          %v2131 = vld [vmem:[%s2126 + $0x10] sm:$0xf]
          %v2132 = vld [vmem:[%s2126 + $0x14] sm:$0xf]
          %v2133 = vld [vmem:[%s2126 + $0x18] sm:$0xf]
          %v2134 = vld [vmem:[%s2126 + $0x1c] sm:$0xf]
          %v2135 = vld [vmem:[%s2126 + $0x20] sm:$0xf]
          %v2136 = vld [vmem:[%s2126 + $0x24] sm:$0xf]
          %v2137 = vld [vmem:[%s2126 + $0x28] sm:$0xf]
          %v2138 = vld [vmem:[%s2126 + $0x2c] sm:$0xf]
          %v2139 = vld [vmem:[%s2126 + $0x30] sm:$0xf]
          %v2140 = vld [vmem:[%s2126 + $0x34] sm:$0xf]
          %v2141 = vld [vmem:[%s2126 + $0x38] sm:$0xf]
          %v2142 = vld [vmem:[%s2126 + $0x3c] sm:$0xf]
          %v2143 = vld [vmem:[%s2126 + $0x40] sm:$0xf]
          %v2144 = vld [vmem:[%s2126 + $0x44] sm:$0xf]
          %v2145 = vld [vmem:[%s2126 + $0x48] sm:$0xf]
          %v2146 = vld [vmem:[%s2126 + $0x4c] sm:$0xf]
          %v2147 = vld [vmem:[%s2126 + $0x50] sm:$0xf]
          %v2148 = vld [vmem:[%s2126 + $0x54] sm:$0xf]
          %v2149 = vld [vmem:[%s2126 + $0x58] sm:$0xf]
          %v2150 = vld [vmem:[%s2126 + $0x5c] sm:$0xf]
          %v2151 = vld [vmem:[%s2126 + $0x60] sm:$0xf]
          %v2152 = vld [vmem:[%s2126 + $0x64] sm:$0xf]
          %v2153 = vld [vmem:[%s2126 + $0x68] sm:$0xf]
          %v2154 = vld [vmem:[%s2126 + $0x6c] sm:$0xf]
          %v2155 = vld [vmem:[%s2126 + $0x70] sm:$0xf]
          %v2156 = vld [vmem:[%s2126 + $0x74] sm:$0xf]
          %v2157 = vld [vmem:[%s2126 + $0x78] sm:$0xf]
          %v2158 = vld [vmem:[%s2126 + $0x7c] sm:$0xf]
          %v2159 = vld [vmem:[%s2126 + $0x80] sm:$0xf]
          %v2160 = vld [vmem:[%s2126 + $0x84] sm:$0xf]
          %v2161 = vld [vmem:[%s2126 + $0x88] sm:$0xf]
          %v2162 = vld [vmem:[%s2126 + $0x8c] sm:$0xf]
          %v2163 = vld [vmem:[%s2126 + $0x90] sm:$0xf]
          %v2164 = vld [vmem:[%s2126 + $0x94] sm:$0xf]
          %v2165 = vld [vmem:[%s2126 + $0x98] sm:$0xf]
          %v2166 = vld [vmem:[%s2126 + $0x9c] sm:$0xf]
          %v2167 = vld [vmem:[%s2126 + $0xa0] sm:$0xf]
          %v2168 = vld [vmem:[%s2126 + $0xa4] sm:$0xf]
          %v2169 = vld [vmem:[%s2126 + $0xa8] sm:$0xf]
          %v2170 = vld [vmem:[%s2126 + $0xac] sm:$0xf]
          %v2171 = vld [vmem:[%s2126 + $0xb0] sm:$0xf]
          %v2172 = vld [vmem:[%s2126 + $0xb4] sm:$0xf]
          %v2173 = vld [vmem:[%s2126 + $0xb8] sm:$0xf]
          %v2174 = vld [vmem:[%s2126 + $0xbc] sm:$0xf]
          %v2207 = vunpack.c.l.b16 %v2094
          %v2208 = vunpack.c.h.b16 %v2094
          %v2209 = vunpack.c.l.b16 %v2095
          %v2210 = vunpack.c.l.b16 %v2096
          %v2211 = vunpack.c.h.b16 %v2096
          %v2212 = vunpack.c.l.b16 %v2097
          %v2213 = vunpack.c.l.b16 %v2098
          %v2214 = vunpack.c.h.b16 %v2098
          %v2215 = vunpack.c.l.b16 %v2099
          %v2216 = vunpack.c.l.b16 %v2100
          %v2217 = vunpack.c.h.b16 %v2100
          %v2218 = vunpack.c.l.b16 %v2101
          %v2219 = vunpack.c.l.b16 %v2102
          %v2220 = vunpack.c.h.b16 %v2102
          %v2221 = vunpack.c.l.b16 %v2103
          %v2222 = vunpack.c.l.b16 %v2104
          %v2223 = vunpack.c.h.b16 %v2104
          %v2224 = vunpack.c.l.b16 %v2105
          %v2225 = vunpack.c.l.b16 %v2106
          %v2226 = vunpack.c.h.b16 %v2106
          %v2227 = vunpack.c.l.b16 %v2107
          %v2228 = vunpack.c.l.b16 %v2108
          %v2229 = vunpack.c.h.b16 %v2108
          %v2230 = vunpack.c.l.b16 %v2109
          %v2231 = vunpack.c.l.b16 %v2110
          %v2232 = vunpack.c.h.b16 %v2110
          %v2233 = vunpack.c.l.b16 %v2111
          %v2234 = vunpack.c.l.b16 %v2112
          %v2235 = vunpack.c.h.b16 %v2112
          %v2236 = vunpack.c.l.b16 %v2113
          %v2237 = vunpack.c.l.b16 %v2114
          %v2238 = vunpack.c.h.b16 %v2114
          %v2239 = vunpack.c.l.b16 %v2115
          %v2240 = vunpack.c.l.b16 %v2116
          %v2241 = vunpack.c.h.b16 %v2116
          %v2242 = vunpack.c.l.b16 %v2117
          %v2243 = vunpack.c.l.b16 %v2118
          %v2244 = vunpack.c.h.b16 %v2118
          %v2245 = vunpack.c.l.b16 %v2119
          %v2246 = vunpack.c.l.b16 %v2120
          %v2247 = vunpack.c.h.b16 %v2120
          %v2248 = vunpack.c.l.b16 %v2121
          %v2249 = vunpack.c.l.b16 %v2122
          %v2250 = vunpack.c.h.b16 %v2122
          %v2251 = vunpack.c.l.b16 %v2123
          %v2252 = vunpack.c.l.b16 %v2124
          %v2253 = vunpack.c.h.b16 %v2124
          %v2254 = vunpack.c.l.b16 %v2125
          %v2255 = vpack.c.b16 %v2210, %v2207
          %v2256 = vpack.c.b16 %v2211, %v2208
          %v2257 = vpack.c.b16 %v2212, %v2209
          %v2258 = vpack.c.b16 %v2216, %v2213
          %v2259 = vpack.c.b16 %v2217, %v2214
          %v2260 = vpack.c.b16 %v2218, %v2215
          %v2261 = vpack.c.b16 %v2222, %v2219
          %v2262 = vpack.c.b16 %v2223, %v2220
          %v2263 = vpack.c.b16 %v2224, %v2221
          %v2264 = vpack.c.b16 %v2228, %v2225
          %v2265 = vpack.c.b16 %v2229, %v2226
          %v2266 = vpack.c.b16 %v2230, %v2227
          %v2267 = vpack.c.b16 %v2234, %v2231
          %v2268 = vpack.c.b16 %v2235, %v2232
          %v2269 = vpack.c.b16 %v2236, %v2233
          %v2270 = vpack.c.b16 %v2240, %v2237
          %v2271 = vpack.c.b16 %v2241, %v2238
          %v2272 = vpack.c.b16 %v2242, %v2239
          %v2273 = vpack.c.b16 %v2246, %v2243
          %v2274 = vpack.c.b16 %v2247, %v2244
          %v2275 = vpack.c.b16 %v2248, %v2245
          %v2276 = vpack.c.b16 %v2252, %v2249
          %v2277 = vpack.c.b16 %v2253, %v2250
          %v2278 = vpack.c.b16 %v2254, %v2251
          %v2351 = vunpack.c.l.b16 %v2127
          %v2352 = vunpack.c.l.b16 %v2128
          %v2353 = vunpack.c.l.b16 %v2129
          %v2354 = vunpack.c.l.b16 %v2130
          %v2355 = vunpack.c.l.b16 %v2131
          %v2356 = vunpack.c.l.b16 %v2132
          %v2357 = vunpack.c.l.b16 %v2133
          %v2358 = vunpack.c.l.b16 %v2134
          %v2359 = vunpack.c.l.b16 %v2135
          %v2360 = vunpack.c.l.b16 %v2136
          %v2361 = vunpack.c.l.b16 %v2137
          %v2362 = vunpack.c.l.b16 %v2138
          %v2363 = vunpack.c.l.b16 %v2139
          %v2364 = vunpack.c.l.b16 %v2140
          %v2365 = vunpack.c.l.b16 %v2141
          %v2366 = vunpack.c.l.b16 %v2142
          %v2367 = vunpack.c.l.b16 %v2143
          %v2368 = vunpack.c.l.b16 %v2144
          %v2369 = vunpack.c.l.b16 %v2145
          %v2370 = vunpack.c.l.b16 %v2146
          %v2371 = vunpack.c.l.b16 %v2147
          %v2372 = vunpack.c.l.b16 %v2148
          %v2373 = vunpack.c.l.b16 %v2149
          %v2374 = vunpack.c.l.b16 %v2150
          %v2375 = vunpack.c.l.b16 %v2151
          %v2376 = vunpack.c.l.b16 %v2152
          %v2377 = vunpack.c.l.b16 %v2153
          %v2378 = vunpack.c.l.b16 %v2154
          %v2379 = vunpack.c.l.b16 %v2155
          %v2380 = vunpack.c.l.b16 %v2156
          %v2381 = vunpack.c.l.b16 %v2157
          %v2382 = vunpack.c.l.b16 %v2158
          %v2383 = vunpack.c.l.b16 %v2159
          %v2384 = vunpack.c.l.b16 %v2160
          %v2385 = vunpack.c.l.b16 %v2161
          %v2386 = vunpack.c.l.b16 %v2162
          %v2387 = vunpack.c.l.b16 %v2163
          %v2388 = vunpack.c.l.b16 %v2164
          %v2389 = vunpack.c.l.b16 %v2165
          %v2390 = vunpack.c.l.b16 %v2166
          %v2391 = vunpack.c.l.b16 %v2167
          %v2392 = vunpack.c.l.b16 %v2168
          %v2393 = vunpack.c.l.b16 %v2169
          %v2394 = vunpack.c.l.b16 %v2170
          %v2395 = vunpack.c.l.b16 %v2171
          %v2396 = vunpack.c.l.b16 %v2172
          %v2397 = vunpack.c.l.b16 %v2173
          %v2398 = vunpack.c.l.b16 %v2174
          %v2399 = vpack.c.b16 %v2352, %v2351
          %v2400 = vpack.c.b16 %v2354, %v2353
          %v2401 = vpack.c.b16 %v2356, %v2355
          %v2402 = vpack.c.b16 %v2358, %v2357
          %v2403 = vpack.c.b16 %v2360, %v2359
          %v2404 = vpack.c.b16 %v2362, %v2361
          %v2405 = vpack.c.b16 %v2364, %v2363
          %v2406 = vpack.c.b16 %v2366, %v2365
          %v2407 = vpack.c.b16 %v2368, %v2367
          %v2408 = vpack.c.b16 %v2370, %v2369
          %v2409 = vpack.c.b16 %v2372, %v2371
          %v2410 = vpack.c.b16 %v2374, %v2373
          %v2411 = vpack.c.b16 %v2376, %v2375
          %v2412 = vpack.c.b16 %v2378, %v2377
          %v2413 = vpack.c.b16 %v2380, %v2379
          %v2414 = vpack.c.b16 %v2382, %v2381
          %v2415 = vpack.c.b16 %v2384, %v2383
          %v2416 = vpack.c.b16 %v2386, %v2385
          %v2417 = vpack.c.b16 %v2388, %v2387
          %v2418 = vpack.c.b16 %v2390, %v2389
          %v2419 = vpack.c.b16 %v2392, %v2391
          %v2420 = vpack.c.b16 %v2394, %v2393
          %v2421 = vpack.c.b16 %v2396, %v2395
          %v2422 = vpack.c.b16 %v2398, %v2397
          %2447 = vmatpush.bf16.msra.mxu0 %v2406
          %2448 = vmatpush.bf16.msra.mxu0 %v2405
          %2449 = vmatpush.bf16.msra.mxu0 %v2404
          %2450 = vmatpush.bf16.msra.mxu0 %v2403
          %2451 = vmatpush.bf16.msra.mxu0 %v2402
          %2452 = vmatpush.bf16.msra.mxu0 %v2401
          %2453 = vmatpush.bf16.msra.mxu0 %v2400
          %2454 = vmatpush.bf16.msra.mxu0 %v2399
          %2455 = vmatmul.bf16.gmra.mxu0 %v2255
          %v2456 = vpop.f32.mrf.mxu0
          %v2457 = vadd.f32 0.0, %v2456
          %v2458 = vpop.f32.mrf.mxu0
          %v2459 = vadd.f32 0.0, %v2458
          %2460 = vmatmul.bf16.gmra.mxu0 %v2258
          %v2461 = vpop.f32.mrf.mxu0
          %v2462 = vadd.f32 0.0, %v2461
          %v2463 = vpop.f32.mrf.mxu0
          %v2464 = vadd.f32 0.0, %v2463
          %2465 = vmatmul.bf16.gmra.mxu0 %v2261
          %v2466 = vpop.f32.mrf.mxu0
          %v2467 = vadd.f32 0.0, %v2466
          %v2468 = vpop.f32.mrf.mxu0
          %v2469 = vadd.f32 0.0, %v2468
          %2470 = vmatmul.bf16.gmra.mxu0 %v2264
          %v2471 = vpop.f32.mrf.mxu0
          %v2472 = vadd.f32 0.0, %v2471
          %v2473 = vpop.f32.mrf.mxu0
          %v2474 = vadd.f32 0.0, %v2473
          %2475 = vmatmul.bf16.gmra.mxu0 %v2267
          %v2476 = vpop.f32.mrf.mxu0
          %v2477 = vadd.f32 0.0, %v2476
          %v2478 = vpop.f32.mrf.mxu0
          %v2479 = vadd.f32 0.0, %v2478
          %2480 = vmatmul.bf16.gmra.mxu0 %v2270
          %v2481 = vpop.f32.mrf.mxu0
          %v2482 = vadd.f32 0.0, %v2481
          %v2483 = vpop.f32.mrf.mxu0
          %v2484 = vadd.f32 0.0, %v2483
          %2485 = vmatmul.bf16.gmra.mxu0 %v2273
          %v2486 = vpop.f32.mrf.mxu0
          %v2487 = vadd.f32 0.0, %v2486
          %v2488 = vpop.f32.mrf.mxu0
          %v2489 = vadd.f32 0.0, %v2488
          %2490 = vmatmul.bf16.gmra.mxu0 %v2276
          %v2491 = vpop.f32.mrf.mxu0
          %v2492 = vadd.f32 0.0, %v2491
          %v2493 = vpop.f32.mrf.mxu0
          %v2494 = vadd.f32 0.0, %v2493
          %2495 = vdwg.mxu0
          %2496 = vmatpush.bf16.msra.mxu0 %v2414
          %2497 = vmatpush.bf16.msra.mxu0 %v2413
          %2498 = vmatpush.bf16.msra.mxu0 %v2412
          %2499 = vmatpush.bf16.msra.mxu0 %v2411
          %2500 = vmatpush.bf16.msra.mxu0 %v2410
          %2501 = vmatpush.bf16.msra.mxu0 %v2409
          %2502 = vmatpush.bf16.msra.mxu0 %v2408
          %2503 = vmatpush.bf16.msra.mxu0 %v2407
          %2504 = vmatmul.bf16.gmra.mxu0 %v2256
          %v2505 = vpop.f32.mrf.mxu0
          %v2506 = vadd.f32 %v2457, %v2505
          %v2507 = vpop.f32.mrf.mxu0
          %v2508 = vadd.f32 %v2459, %v2507
          %2509 = vmatmul.bf16.gmra.mxu0 %v2259
          %v2510 = vpop.f32.mrf.mxu0
          %v2511 = vadd.f32 %v2462, %v2510
          %v2512 = vpop.f32.mrf.mxu0
          %v2513 = vadd.f32 %v2464, %v2512
          %2514 = vmatmul.bf16.gmra.mxu0 %v2262
          %v2515 = vpop.f32.mrf.mxu0
          %v2516 = vadd.f32 %v2467, %v2515
          %v2517 = vpop.f32.mrf.mxu0
          %v2518 = vadd.f32 %v2469, %v2517
          %2519 = vmatmul.bf16.gmra.mxu0 %v2265
          %v2520 = vpop.f32.mrf.mxu0
          %v2521 = vadd.f32 %v2472, %v2520
          %v2522 = vpop.f32.mrf.mxu0
          %v2523 = vadd.f32 %v2474, %v2522
          %2524 = vmatmul.bf16.gmra.mxu0 %v2268
          %v2525 = vpop.f32.mrf.mxu0
          %v2526 = vadd.f32 %v2477, %v2525
          %v2527 = vpop.f32.mrf.mxu0
          %v2528 = vadd.f32 %v2479, %v2527
          %2529 = vmatmul.bf16.gmra.mxu0 %v2271
          %v2530 = vpop.f32.mrf.mxu0
          %v2531 = vadd.f32 %v2482, %v2530
          %v2532 = vpop.f32.mrf.mxu0
          %v2533 = vadd.f32 %v2484, %v2532
          %2534 = vmatmul.bf16.gmra.mxu0 %v2274
          %v2535 = vpop.f32.mrf.mxu0
          %v2536 = vadd.f32 %v2487, %v2535
          %v2537 = vpop.f32.mrf.mxu0
          %v2538 = vadd.f32 %v2489, %v2537
          %2539 = vmatmul.bf16.gmra.mxu0 %v2277
          %v2540 = vpop.f32.mrf.mxu0
          %v2541 = vadd.f32 %v2492, %v2540
          %v2542 = vpop.f32.mrf.mxu0
          %v2543 = vadd.f32 %v2494, %v2542
          %2544 = vdwg.mxu0
          %2545 = vmatpush.bf16.msra.mxu0 %v2422
          %2546 = vmatpush.bf16.msra.mxu0 %v2421
          %2547 = vmatpush.bf16.msra.mxu0 %v2420
          %2548 = vmatpush.bf16.msra.mxu0 %v2419
          %2549 = vmatpush.bf16.msra.mxu0 %v2418
          %2550 = vmatpush.bf16.msra.mxu0 %v2417
          %2551 = vmatpush.bf16.msra.mxu0 %v2416
          %2552 = vmatpush.bf16.msra.mxu0 %v2415
          %2553 = vmatmul.bf16.gmra.mxu0 %v2257
          %v2554 = vpop.f32.mrf.mxu0
          %v2555 = vadd.f32 %v2506, %v2554
          %v2556 = vpop.f32.mrf.mxu0
          %v2557 = vadd.f32 %v2508, %v2556
          %2558 = vmatmul.bf16.gmra.mxu0 %v2260
          %v2559 = vpop.f32.mrf.mxu0
          %v2560 = vadd.f32 %v2511, %v2559
          %v2561 = vpop.f32.mrf.mxu0
          %v2562 = vadd.f32 %v2513, %v2561
          %2563 = vmatmul.bf16.gmra.mxu0 %v2263
          %v2564 = vpop.f32.mrf.mxu0
          %v2565 = vadd.f32 %v2516, %v2564
          %v2566 = vpop.f32.mrf.mxu0
          %v2567 = vadd.f32 %v2518, %v2566
          %2568 = vmatmul.bf16.gmra.mxu0 %v2266
          %v2569 = vpop.f32.mrf.mxu0
          %v2570 = vadd.f32 %v2521, %v2569
          %v2571 = vpop.f32.mrf.mxu0
          %v2572 = vadd.f32 %v2523, %v2571
          %2573 = vmatmul.bf16.gmra.mxu0 %v2269
          %v2574 = vpop.f32.mrf.mxu0
          %v2575 = vadd.f32 %v2526, %v2574
          %v2576 = vpop.f32.mrf.mxu0
          %v2577 = vadd.f32 %v2528, %v2576
          %2578 = vmatmul.bf16.gmra.mxu0 %v2272
          %v2579 = vpop.f32.mrf.mxu0
          %v2580 = vadd.f32 %v2531, %v2579
          %v2581 = vpop.f32.mrf.mxu0
          %v2582 = vadd.f32 %v2533, %v2581
          %2583 = vmatmul.bf16.gmra.mxu0 %v2275
          %v2584 = vpop.f32.mrf.mxu0
          %v2585 = vadd.f32 %v2536, %v2584
          %v2586 = vpop.f32.mrf.mxu0
          %v2587 = vadd.f32 %v2538, %v2586
          %2588 = vmatmul.bf16.gmra.mxu0 %v2278
          %v2589 = vpop.f32.mrf.mxu0
          %v2590 = vadd.f32 %v2541, %v2589
          %v2591 = vpop.f32.mrf.mxu0
          %v2592 = vadd.f32 %v2543, %v2591
          %2593 = vdwg.mxu0
          %v2594 = vadd.f32 %v2074, %v2555
          %v2595 = vadd.f32 %v2075, %v2557
          %v2596 = vadd.f32 %v2076, %v2560
          %v2597 = vadd.f32 %v2077, %v2562
          %v2598 = vadd.f32 %v2078, %v2565
          %v2599 = vadd.f32 %v2079, %v2567
          %v2600 = vadd.f32 %v2080, %v2570
          %v2601 = vadd.f32 %v2081, %v2572
          %v2602 = vadd.f32 %v2082, %v2575
          %v2603 = vadd.f32 %v2083, %v2577
          %v2604 = vadd.f32 %v2084, %v2580
          %v2605 = vadd.f32 %v2085, %v2582
          %v2606 = vadd.f32 %v2086, %v2585
          %v2607 = vadd.f32 %v2087, %v2587
          %v2608 = vadd.f32 %v2088, %v2590
          %v2609 = vadd.f32 %v2089, %v2592
          %s2610 = sadd.s32 3, %s2091
          %s2611 = smul.addr %s2610, 4
          %s2612 = scalar_lea.vmem [#allocation2], %s2611
          %v2613 = vld [vmem:[%s2612] sm:$0xff]
          %v2614 = vld [vmem:[%s2612 + $0x8] sm:$0xf]
          %v2615 = vld [vmem:[%s2612 + $0xc] sm:$0xff]
          %v2616 = vld [vmem:[%s2612 + $0x14] sm:$0xf]
          %v2617 = vld [vmem:[%s2612 + $0x18] sm:$0xff]
          %v2618 = vld [vmem:[%s2612 + $0x20] sm:$0xf]
          %v2619 = vld [vmem:[%s2612 + $0x24] sm:$0xff]
          %v2620 = vld [vmem:[%s2612 + $0x2c] sm:$0xf]
          %v2621 = vld [vmem:[%s2612 + $0x30] sm:$0xff]
          %v2622 = vld [vmem:[%s2612 + $0x38] sm:$0xf]
          %v2623 = vld [vmem:[%s2612 + $0x3c] sm:$0xff]
          %v2624 = vld [vmem:[%s2612 + $0x44] sm:$0xf]
          %v2625 = vld [vmem:[%s2612 + $0x48] sm:$0xff]
          %v2626 = vld [vmem:[%s2612 + $0x50] sm:$0xf]
          %v2627 = vld [vmem:[%s2612 + $0x54] sm:$0xff]
          %v2628 = vld [vmem:[%s2612 + $0x5c] sm:$0xf]
          %v2629 = vld [vmem:[%s2612 + $0x78] sm:$0xff]
          %v2630 = vld [vmem:[%s2612 + $0x80] sm:$0xf]
          %v2631 = vld [vmem:[%s2612 + $0x84] sm:$0xff]
          %v2632 = vld [vmem:[%s2612 + $0x8c] sm:$0xf]
          %v2633 = vld [vmem:[%s2612 + $0x90] sm:$0xff]
          %v2634 = vld [vmem:[%s2612 + $0x98] sm:$0xf]
          %v2635 = vld [vmem:[%s2612 + $0x9c] sm:$0xff]
          %v2636 = vld [vmem:[%s2612 + $0xa4] sm:$0xf]
          %v2637 = vld [vmem:[%s2612 + $0xa8] sm:$0xff]
          %v2638 = vld [vmem:[%s2612 + $0xb0] sm:$0xf]
          %v2639 = vld [vmem:[%s2612 + $0xb4] sm:$0xff]
          %v2640 = vld [vmem:[%s2612 + $0xbc] sm:$0xf]
          %v2641 = vld [vmem:[%s2612 + $0xc0] sm:$0xff]
          %v2642 = vld [vmem:[%s2612 + $0xc8] sm:$0xf]
          %v2643 = vld [vmem:[%s2612 + $0xcc] sm:$0xff]
          %v2644 = vld [vmem:[%s2612 + $0xd4] sm:$0xf]
          %s2645 = scalar_lea.vmem [#allocation6], 768
          %v2646 = vld [vmem:[%s2645] sm:$0xf]
          %v2647 = vld [vmem:[%s2645 + $0x4] sm:$0xf]
          %v2648 = vld [vmem:[%s2645 + $0x8] sm:$0xf]
          %v2649 = vld [vmem:[%s2645 + $0xc] sm:$0xf]
          %v2650 = vld [vmem:[%s2645 + $0x10] sm:$0xf]
          %v2651 = vld [vmem:[%s2645 + $0x14] sm:$0xf]
          %v2652 = vld [vmem:[%s2645 + $0x18] sm:$0xf]
          %v2653 = vld [vmem:[%s2645 + $0x1c] sm:$0xf]
          %v2654 = vld [vmem:[%s2645 + $0x20] sm:$0xf]
          %v2655 = vld [vmem:[%s2645 + $0x24] sm:$0xf]
          %v2656 = vld [vmem:[%s2645 + $0x28] sm:$0xf]
          %v2657 = vld [vmem:[%s2645 + $0x2c] sm:$0xf]
          %v2658 = vld [vmem:[%s2645 + $0x30] sm:$0xf]
          %v2659 = vld [vmem:[%s2645 + $0x34] sm:$0xf]
          %v2660 = vld [vmem:[%s2645 + $0x38] sm:$0xf]
          %v2661 = vld [vmem:[%s2645 + $0x3c] sm:$0xf]
          %v2662 = vld [vmem:[%s2645 + $0x40] sm:$0xf]
          %v2663 = vld [vmem:[%s2645 + $0x44] sm:$0xf]
          %v2664 = vld [vmem:[%s2645 + $0x48] sm:$0xf]
          %v2665 = vld [vmem:[%s2645 + $0x4c] sm:$0xf]
          %v2666 = vld [vmem:[%s2645 + $0x50] sm:$0xf]
          %v2667 = vld [vmem:[%s2645 + $0x54] sm:$0xf]
          %v2668 = vld [vmem:[%s2645 + $0x58] sm:$0xf]
          %v2669 = vld [vmem:[%s2645 + $0x5c] sm:$0xf]
          %v2670 = vld [vmem:[%s2645 + $0x60] sm:$0xf]
          %v2671 = vld [vmem:[%s2645 + $0x64] sm:$0xf]
          %v2672 = vld [vmem:[%s2645 + $0x68] sm:$0xf]
          %v2673 = vld [vmem:[%s2645 + $0x6c] sm:$0xf]
          %v2674 = vld [vmem:[%s2645 + $0x70] sm:$0xf]
          %v2675 = vld [vmem:[%s2645 + $0x74] sm:$0xf]
          %v2676 = vld [vmem:[%s2645 + $0x78] sm:$0xf]
          %v2677 = vld [vmem:[%s2645 + $0x7c] sm:$0xf]
          %v2678 = vld [vmem:[%s2645 + $0x80] sm:$0xf]
          %v2679 = vld [vmem:[%s2645 + $0x84] sm:$0xf]
          %v2680 = vld [vmem:[%s2645 + $0x88] sm:$0xf]
          %v2681 = vld [vmem:[%s2645 + $0x8c] sm:$0xf]
          %v2682 = vld [vmem:[%s2645 + $0x90] sm:$0xf]
          %v2683 = vld [vmem:[%s2645 + $0x94] sm:$0xf]
          %v2684 = vld [vmem:[%s2645 + $0x98] sm:$0xf]
          %v2685 = vld [vmem:[%s2645 + $0x9c] sm:$0xf]
          %v2686 = vld [vmem:[%s2645 + $0xa0] sm:$0xf]
          %v2687 = vld [vmem:[%s2645 + $0xa4] sm:$0xf]
          %v2688 = vld [vmem:[%s2645 + $0xa8] sm:$0xf]
          %v2689 = vld [vmem:[%s2645 + $0xac] sm:$0xf]
          %v2690 = vld [vmem:[%s2645 + $0xb0] sm:$0xf]
          %v2691 = vld [vmem:[%s2645 + $0xb4] sm:$0xf]
          %v2692 = vld [vmem:[%s2645 + $0xb8] sm:$0xf]
          %v2693 = vld [vmem:[%s2645 + $0xbc] sm:$0xf]
          %v2726 = vunpack.c.l.b16 %v2613
          %v2727 = vunpack.c.h.b16 %v2613
          %v2728 = vunpack.c.l.b16 %v2614
          %v2729 = vunpack.c.l.b16 %v2615
          %v2730 = vunpack.c.h.b16 %v2615
          %v2731 = vunpack.c.l.b16 %v2616
          %v2732 = vunpack.c.l.b16 %v2617
          %v2733 = vunpack.c.h.b16 %v2617
          %v2734 = vunpack.c.l.b16 %v2618
          %v2735 = vunpack.c.l.b16 %v2619
          %v2736 = vunpack.c.h.b16 %v2619
          %v2737 = vunpack.c.l.b16 %v2620
          %v2738 = vunpack.c.l.b16 %v2621
          %v2739 = vunpack.c.h.b16 %v2621
          %v2740 = vunpack.c.l.b16 %v2622
          %v2741 = vunpack.c.l.b16 %v2623
          %v2742 = vunpack.c.h.b16 %v2623
          %v2743 = vunpack.c.l.b16 %v2624
          %v2744 = vunpack.c.l.b16 %v2625
          %v2745 = vunpack.c.h.b16 %v2625
          %v2746 = vunpack.c.l.b16 %v2626
          %v2747 = vunpack.c.l.b16 %v2627
          %v2748 = vunpack.c.h.b16 %v2627
          %v2749 = vunpack.c.l.b16 %v2628
          %v2750 = vunpack.c.l.b16 %v2629
          %v2751 = vunpack.c.h.b16 %v2629
          %v2752 = vunpack.c.l.b16 %v2630
          %v2753 = vunpack.c.l.b16 %v2631
          %v2754 = vunpack.c.h.b16 %v2631
          %v2755 = vunpack.c.l.b16 %v2632
          %v2756 = vunpack.c.l.b16 %v2633
          %v2757 = vunpack.c.h.b16 %v2633
          %v2758 = vunpack.c.l.b16 %v2634
          %v2759 = vunpack.c.l.b16 %v2635
          %v2760 = vunpack.c.h.b16 %v2635
          %v2761 = vunpack.c.l.b16 %v2636
          %v2762 = vunpack.c.l.b16 %v2637
          %v2763 = vunpack.c.h.b16 %v2637
          %v2764 = vunpack.c.l.b16 %v2638
          %v2765 = vunpack.c.l.b16 %v2639
          %v2766 = vunpack.c.h.b16 %v2639
          %v2767 = vunpack.c.l.b16 %v2640
          %v2768 = vunpack.c.l.b16 %v2641
          %v2769 = vunpack.c.h.b16 %v2641
          %v2770 = vunpack.c.l.b16 %v2642
          %v2771 = vunpack.c.l.b16 %v2643
          %v2772 = vunpack.c.h.b16 %v2643
          %v2773 = vunpack.c.l.b16 %v2644
          %v2774 = vpack.c.b16 %v2729, %v2726
          %v2775 = vpack.c.b16 %v2730, %v2727
          %v2776 = vpack.c.b16 %v2731, %v2728
          %v2777 = vpack.c.b16 %v2735, %v2732
          %v2778 = vpack.c.b16 %v2736, %v2733
          %v2779 = vpack.c.b16 %v2737, %v2734
          %v2780 = vpack.c.b16 %v2741, %v2738
          %v2781 = vpack.c.b16 %v2742, %v2739
          %v2782 = vpack.c.b16 %v2743, %v2740
          %v2783 = vpack.c.b16 %v2747, %v2744
          %v2784 = vpack.c.b16 %v2748, %v2745
          %v2785 = vpack.c.b16 %v2749, %v2746
          %v2786 = vpack.c.b16 %v2753, %v2750
          %v2787 = vpack.c.b16 %v2754, %v2751
          %v2788 = vpack.c.b16 %v2755, %v2752
          %v2789 = vpack.c.b16 %v2759, %v2756
          %v2790 = vpack.c.b16 %v2760, %v2757
          %v2791 = vpack.c.b16 %v2761, %v2758
          %v2792 = vpack.c.b16 %v2765, %v2762
          %v2793 = vpack.c.b16 %v2766, %v2763
          %v2794 = vpack.c.b16 %v2767, %v2764
          %v2795 = vpack.c.b16 %v2771, %v2768
          %v2796 = vpack.c.b16 %v2772, %v2769
          %v2797 = vpack.c.b16 %v2773, %v2770
          %v2870 = vunpack.c.l.b16 %v2646
          %v2871 = vunpack.c.l.b16 %v2647
          %v2872 = vunpack.c.l.b16 %v2648
          %v2873 = vunpack.c.l.b16 %v2649
          %v2874 = vunpack.c.l.b16 %v2650
          %v2875 = vunpack.c.l.b16 %v2651
          %v2876 = vunpack.c.l.b16 %v2652
          %v2877 = vunpack.c.l.b16 %v2653
          %v2878 = vunpack.c.l.b16 %v2654
          %v2879 = vunpack.c.l.b16 %v2655
          %v2880 = vunpack.c.l.b16 %v2656
          %v2881 = vunpack.c.l.b16 %v2657
          %v2882 = vunpack.c.l.b16 %v2658
          %v2883 = vunpack.c.l.b16 %v2659
          %v2884 = vunpack.c.l.b16 %v2660
          %v2885 = vunpack.c.l.b16 %v2661
          %v2886 = vunpack.c.l.b16 %v2662
          %v2887 = vunpack.c.l.b16 %v2663
          %v2888 = vunpack.c.l.b16 %v2664
          %v2889 = vunpack.c.l.b16 %v2665
          %v2890 = vunpack.c.l.b16 %v2666
          %v2891 = vunpack.c.l.b16 %v2667
          %v2892 = vunpack.c.l.b16 %v2668
          %v2893 = vunpack.c.l.b16 %v2669
          %v2894 = vunpack.c.l.b16 %v2670
          %v2895 = vunpack.c.l.b16 %v2671
          %v2896 = vunpack.c.l.b16 %v2672
          %v2897 = vunpack.c.l.b16 %v2673
          %v2898 = vunpack.c.l.b16 %v2674
          %v2899 = vunpack.c.l.b16 %v2675
          %v2900 = vunpack.c.l.b16 %v2676
          %v2901 = vunpack.c.l.b16 %v2677
          %v2902 = vunpack.c.l.b16 %v2678
          %v2903 = vunpack.c.l.b16 %v2679
          %v2904 = vunpack.c.l.b16 %v2680
          %v2905 = vunpack.c.l.b16 %v2681
          %v2906 = vunpack.c.l.b16 %v2682
          %v2907 = vunpack.c.l.b16 %v2683
          %v2908 = vunpack.c.l.b16 %v2684
          %v2909 = vunpack.c.l.b16 %v2685
          %v2910 = vunpack.c.l.b16 %v2686
          %v2911 = vunpack.c.l.b16 %v2687
          %v2912 = vunpack.c.l.b16 %v2688
          %v2913 = vunpack.c.l.b16 %v2689
          %v2914 = vunpack.c.l.b16 %v2690
          %v2915 = vunpack.c.l.b16 %v2691
          %v2916 = vunpack.c.l.b16 %v2692
          %v2917 = vunpack.c.l.b16 %v2693
          %v2918 = vpack.c.b16 %v2871, %v2870
          %v2919 = vpack.c.b16 %v2873, %v2872
          %v2920 = vpack.c.b16 %v2875, %v2874
          %v2921 = vpack.c.b16 %v2877, %v2876
          %v2922 = vpack.c.b16 %v2879, %v2878
          %v2923 = vpack.c.b16 %v2881, %v2880
          %v2924 = vpack.c.b16 %v2883, %v2882
          %v2925 = vpack.c.b16 %v2885, %v2884
          %v2926 = vpack.c.b16 %v2887, %v2886
          %v2927 = vpack.c.b16 %v2889, %v2888
          %v2928 = vpack.c.b16 %v2891, %v2890
          %v2929 = vpack.c.b16 %v2893, %v2892
          %v2930 = vpack.c.b16 %v2895, %v2894
          %v2931 = vpack.c.b16 %v2897, %v2896
          %v2932 = vpack.c.b16 %v2899, %v2898
          %v2933 = vpack.c.b16 %v2901, %v2900
          %v2934 = vpack.c.b16 %v2903, %v2902
          %v2935 = vpack.c.b16 %v2905, %v2904
          %v2936 = vpack.c.b16 %v2907, %v2906
          %v2937 = vpack.c.b16 %v2909, %v2908
          %v2938 = vpack.c.b16 %v2911, %v2910
          %v2939 = vpack.c.b16 %v2913, %v2912
          %v2940 = vpack.c.b16 %v2915, %v2914
          %v2941 = vpack.c.b16 %v2917, %v2916
          %2966 = vmatpush.bf16.msra.mxu0 %v2925
          %2967 = vmatpush.bf16.msra.mxu0 %v2924
          %2968 = vmatpush.bf16.msra.mxu0 %v2923
          %2969 = vmatpush.bf16.msra.mxu0 %v2922
          %2970 = vmatpush.bf16.msra.mxu0 %v2921
          %2971 = vmatpush.bf16.msra.mxu0 %v2920
          %2972 = vmatpush.bf16.msra.mxu0 %v2919
          %2973 = vmatpush.bf16.msra.mxu0 %v2918
          %2974 = vmatmul.bf16.gmra.mxu0 %v2774
          %v2975 = vpop.f32.mrf.mxu0
          %v2976 = vadd.f32 0.0, %v2975
          %v2977 = vpop.f32.mrf.mxu0
          %v2978 = vadd.f32 0.0, %v2977
          %2979 = vmatmul.bf16.gmra.mxu0 %v2777
          %v2980 = vpop.f32.mrf.mxu0
          %v2981 = vadd.f32 0.0, %v2980
          %v2982 = vpop.f32.mrf.mxu0
          %v2983 = vadd.f32 0.0, %v2982
          %2984 = vmatmul.bf16.gmra.mxu0 %v2780
          %v2985 = vpop.f32.mrf.mxu0
          %v2986 = vadd.f32 0.0, %v2985
          %v2987 = vpop.f32.mrf.mxu0
          %v2988 = vadd.f32 0.0, %v2987
          %2989 = vmatmul.bf16.gmra.mxu0 %v2783
          %v2990 = vpop.f32.mrf.mxu0
          %v2991 = vadd.f32 0.0, %v2990
          %v2992 = vpop.f32.mrf.mxu0
          %v2993 = vadd.f32 0.0, %v2992
          %2994 = vmatmul.bf16.gmra.mxu0 %v2786
          %v2995 = vpop.f32.mrf.mxu0
          %v2996 = vadd.f32 0.0, %v2995
          %v2997 = vpop.f32.mrf.mxu0
          %v2998 = vadd.f32 0.0, %v2997
          %2999 = vmatmul.bf16.gmra.mxu0 %v2789
          %v3000 = vpop.f32.mrf.mxu0
          %v3001 = vadd.f32 0.0, %v3000
          %v3002 = vpop.f32.mrf.mxu0
          %v3003 = vadd.f32 0.0, %v3002
          %3004 = vmatmul.bf16.gmra.mxu0 %v2792
          %v3005 = vpop.f32.mrf.mxu0
          %v3006 = vadd.f32 0.0, %v3005
          %v3007 = vpop.f32.mrf.mxu0
          %v3008 = vadd.f32 0.0, %v3007
          %3009 = vmatmul.bf16.gmra.mxu0 %v2795
          %v3010 = vpop.f32.mrf.mxu0
          %v3011 = vadd.f32 0.0, %v3010
          %v3012 = vpop.f32.mrf.mxu0
          %v3013 = vadd.f32 0.0, %v3012
          %3014 = vdwg.mxu0
          %3015 = vmatpush.bf16.msra.mxu0 %v2933
          %3016 = vmatpush.bf16.msra.mxu0 %v2932
          %3017 = vmatpush.bf16.msra.mxu0 %v2931
          %3018 = vmatpush.bf16.msra.mxu0 %v2930
          %3019 = vmatpush.bf16.msra.mxu0 %v2929
          %3020 = vmatpush.bf16.msra.mxu0 %v2928
          %3021 = vmatpush.bf16.msra.mxu0 %v2927
          %3022 = vmatpush.bf16.msra.mxu0 %v2926
          %3023 = vmatmul.bf16.gmra.mxu0 %v2775
          %v3024 = vpop.f32.mrf.mxu0
          %v3025 = vadd.f32 %v2976, %v3024
          %v3026 = vpop.f32.mrf.mxu0
          %v3027 = vadd.f32 %v2978, %v3026
          %3028 = vmatmul.bf16.gmra.mxu0 %v2778
          %v3029 = vpop.f32.mrf.mxu0
          %v3030 = vadd.f32 %v2981, %v3029
          %v3031 = vpop.f32.mrf.mxu0
          %v3032 = vadd.f32 %v2983, %v3031
          %3033 = vmatmul.bf16.gmra.mxu0 %v2781
          %v3034 = vpop.f32.mrf.mxu0
          %v3035 = vadd.f32 %v2986, %v3034
          %v3036 = vpop.f32.mrf.mxu0
          %v3037 = vadd.f32 %v2988, %v3036
          %3038 = vmatmul.bf16.gmra.mxu0 %v2784
          %v3039 = vpop.f32.mrf.mxu0
          %v3040 = vadd.f32 %v2991, %v3039
          %v3041 = vpop.f32.mrf.mxu0
          %v3042 = vadd.f32 %v2993, %v3041
          %3043 = vmatmul.bf16.gmra.mxu0 %v2787
          %v3044 = vpop.f32.mrf.mxu0
          %v3045 = vadd.f32 %v2996, %v3044
          %v3046 = vpop.f32.mrf.mxu0
          %v3047 = vadd.f32 %v2998, %v3046
          %3048 = vmatmul.bf16.gmra.mxu0 %v2790
          %v3049 = vpop.f32.mrf.mxu0
          %v3050 = vadd.f32 %v3001, %v3049
          %v3051 = vpop.f32.mrf.mxu0
          %v3052 = vadd.f32 %v3003, %v3051
          %3053 = vmatmul.bf16.gmra.mxu0 %v2793
          %v3054 = vpop.f32.mrf.mxu0
          %v3055 = vadd.f32 %v3006, %v3054
          %v3056 = vpop.f32.mrf.mxu0
          %v3057 = vadd.f32 %v3008, %v3056
          %3058 = vmatmul.bf16.gmra.mxu0 %v2796
          %v3059 = vpop.f32.mrf.mxu0
          %v3060 = vadd.f32 %v3011, %v3059
          %v3061 = vpop.f32.mrf.mxu0
          %v3062 = vadd.f32 %v3013, %v3061
          %3063 = vdwg.mxu0
          %3064 = vmatpush.bf16.msra.mxu0 %v2941
          %3065 = vmatpush.bf16.msra.mxu0 %v2940
          %3066 = vmatpush.bf16.msra.mxu0 %v2939
          %3067 = vmatpush.bf16.msra.mxu0 %v2938
          %3068 = vmatpush.bf16.msra.mxu0 %v2937
          %3069 = vmatpush.bf16.msra.mxu0 %v2936
          %3070 = vmatpush.bf16.msra.mxu0 %v2935
          %3071 = vmatpush.bf16.msra.mxu0 %v2934
          %3072 = vmatmul.bf16.gmra.mxu0 %v2776
          %v3073 = vpop.f32.mrf.mxu0
          %v3074 = vadd.f32 %v3025, %v3073
          %v3075 = vpop.f32.mrf.mxu0
          %v3076 = vadd.f32 %v3027, %v3075
          %3077 = vmatmul.bf16.gmra.mxu0 %v2779
          %v3078 = vpop.f32.mrf.mxu0
          %v3079 = vadd.f32 %v3030, %v3078
          %v3080 = vpop.f32.mrf.mxu0
          %v3081 = vadd.f32 %v3032, %v3080
          %3082 = vmatmul.bf16.gmra.mxu0 %v2782
          %v3083 = vpop.f32.mrf.mxu0
          %v3084 = vadd.f32 %v3035, %v3083
          %v3085 = vpop.f32.mrf.mxu0
          %v3086 = vadd.f32 %v3037, %v3085
          %3087 = vmatmul.bf16.gmra.mxu0 %v2785
          %v3088 = vpop.f32.mrf.mxu0
          %v3089 = vadd.f32 %v3040, %v3088
          %v3090 = vpop.f32.mrf.mxu0
          %v3091 = vadd.f32 %v3042, %v3090
          %3092 = vmatmul.bf16.gmra.mxu0 %v2788
          %v3093 = vpop.f32.mrf.mxu0
          %v3094 = vadd.f32 %v3045, %v3093
          %v3095 = vpop.f32.mrf.mxu0
          %v3096 = vadd.f32 %v3047, %v3095
          %3097 = vmatmul.bf16.gmra.mxu0 %v2791
          %v3098 = vpop.f32.mrf.mxu0
          %v3099 = vadd.f32 %v3050, %v3098
          %v3100 = vpop.f32.mrf.mxu0
          %v3101 = vadd.f32 %v3052, %v3100
          %3102 = vmatmul.bf16.gmra.mxu0 %v2794
          %v3103 = vpop.f32.mrf.mxu0
          %v3104 = vadd.f32 %v3055, %v3103
          %v3105 = vpop.f32.mrf.mxu0
          %v3106 = vadd.f32 %v3057, %v3105
          %3107 = vmatmul.bf16.gmra.mxu0 %v2797
          %v3108 = vpop.f32.mrf.mxu0
          %v3109 = vadd.f32 %v3060, %v3108
          %v3110 = vpop.f32.mrf.mxu0
          %v3111 = vadd.f32 %v3062, %v3110
          %3112 = vdwg.mxu0
          %v3113 = vadd.f32 %v2594, %v3074
          %v3114 = vadd.f32 %v2595, %v3076
          %v3115 = vadd.f32 %v2596, %v3079
          %v3116 = vadd.f32 %v2597, %v3081
          %v3117 = vadd.f32 %v2598, %v3084
          %v3118 = vadd.f32 %v2599, %v3086
          %v3119 = vadd.f32 %v2600, %v3089
          %v3120 = vadd.f32 %v2601, %v3091
          %v3121 = vadd.f32 %v2602, %v3094
          %v3122 = vadd.f32 %v2603, %v3096
          %v3123 = vadd.f32 %v2604, %v3099
          %v3124 = vadd.f32 %v2605, %v3101
          %v3125 = vadd.f32 %v2606, %v3104
          %v3126 = vadd.f32 %v2607, %v3106
          %v3127 = vadd.f32 %v2608, %v3109
          %v3128 = vadd.f32 %v2609, %v3111
          %s3129 = sadd.s32 6, %s2091
          %s3130 = smul.addr %s3129, 4
          %s3131 = scalar_lea.vmem [#allocation2], %s3130
          %v3132 = vld [vmem:[%s3131] sm:$0xff]
          %v3133 = vld [vmem:[%s3131 + $0x8] sm:$0xf]
          %v3134 = vld [vmem:[%s3131 + $0xc] sm:$0xff]
          %v3135 = vld [vmem:[%s3131 + $0x14] sm:$0xf]
          %v3136 = vld [vmem:[%s3131 + $0x18] sm:$0xff]
          %v3137 = vld [vmem:[%s3131 + $0x20] sm:$0xf]
          %v3138 = vld [vmem:[%s3131 + $0x24] sm:$0xff]
          %v3139 = vld [vmem:[%s3131 + $0x2c] sm:$0xf]
          %v3140 = vld [vmem:[%s3131 + $0x30] sm:$0xff]
          %v3141 = vld [vmem:[%s3131 + $0x38] sm:$0xf]
          %v3142 = vld [vmem:[%s3131 + $0x3c] sm:$0xff]
          %v3143 = vld [vmem:[%s3131 + $0x44] sm:$0xf]
          %v3144 = vld [vmem:[%s3131 + $0x48] sm:$0xff]
          %v3145 = vld [vmem:[%s3131 + $0x50] sm:$0xf]
          %v3146 = vld [vmem:[%s3131 + $0x54] sm:$0xff]
          %v3147 = vld [vmem:[%s3131 + $0x5c] sm:$0xf]
          %v3148 = vld [vmem:[%s3131 + $0x78] sm:$0xff]
          %v3149 = vld [vmem:[%s3131 + $0x80] sm:$0xf]
          %v3150 = vld [vmem:[%s3131 + $0x84] sm:$0xff]
          %v3151 = vld [vmem:[%s3131 + $0x8c] sm:$0xf]
          %v3152 = vld [vmem:[%s3131 + $0x90] sm:$0xff]
          %v3153 = vld [vmem:[%s3131 + $0x98] sm:$0xf]
          %v3154 = vld [vmem:[%s3131 + $0x9c] sm:$0xff]
          %v3155 = vld [vmem:[%s3131 + $0xa4] sm:$0xf]
          %v3156 = vld [vmem:[%s3131 + $0xa8] sm:$0xff]
          %v3157 = vld [vmem:[%s3131 + $0xb0] sm:$0xf]
          %v3158 = vld [vmem:[%s3131 + $0xb4] sm:$0xff]
          %v3159 = vld [vmem:[%s3131 + $0xbc] sm:$0xf]
          %v3160 = vld [vmem:[%s3131 + $0xc0] sm:$0xff]
          %v3161 = vld [vmem:[%s3131 + $0xc8] sm:$0xf]
          %v3162 = vld [vmem:[%s3131 + $0xcc] sm:$0xff]
          %v3163 = vld [vmem:[%s3131 + $0xd4] sm:$0xf]
          %s3164 = scalar_lea.vmem [#allocation6], 960
          %v3165 = vld [vmem:[%s3164] sm:$0xf]
          %v3166 = vld [vmem:[%s3164 + $0x4] sm:$0xf]
          %v3167 = vld [vmem:[%s3164 + $0x8] sm:$0xf]
          %v3168 = vld [vmem:[%s3164 + $0xc] sm:$0xf]
          %v3169 = vld [vmem:[%s3164 + $0x10] sm:$0xf]
          %v3170 = vld [vmem:[%s3164 + $0x14] sm:$0xf]
          %v3171 = vld [vmem:[%s3164 + $0x18] sm:$0xf]
          %v3172 = vld [vmem:[%s3164 + $0x1c] sm:$0xf]
          %v3173 = vld [vmem:[%s3164 + $0x20] sm:$0xf]
          %v3174 = vld [vmem:[%s3164 + $0x24] sm:$0xf]
          %v3175 = vld [vmem:[%s3164 + $0x28] sm:$0xf]
          %v3176 = vld [vmem:[%s3164 + $0x2c] sm:$0xf]
          %v3177 = vld [vmem:[%s3164 + $0x30] sm:$0xf]
          %v3178 = vld [vmem:[%s3164 + $0x34] sm:$0xf]
          %v3179 = vld [vmem:[%s3164 + $0x38] sm:$0xf]
          %v3180 = vld [vmem:[%s3164 + $0x3c] sm:$0xf]
          %v3181 = vld [vmem:[%s3164 + $0x40] sm:$0xf]
          %v3182 = vld [vmem:[%s3164 + $0x44] sm:$0xf]
          %v3183 = vld [vmem:[%s3164 + $0x48] sm:$0xf]
          %v3184 = vld [vmem:[%s3164 + $0x4c] sm:$0xf]
          %v3185 = vld [vmem:[%s3164 + $0x50] sm:$0xf]
          %v3186 = vld [vmem:[%s3164 + $0x54] sm:$0xf]
          %v3187 = vld [vmem:[%s3164 + $0x58] sm:$0xf]
          %v3188 = vld [vmem:[%s3164 + $0x5c] sm:$0xf]
          %v3189 = vld [vmem:[%s3164 + $0x60] sm:$0xf]
          %v3190 = vld [vmem:[%s3164 + $0x64] sm:$0xf]
          %v3191 = vld [vmem:[%s3164 + $0x68] sm:$0xf]
          %v3192 = vld [vmem:[%s3164 + $0x6c] sm:$0xf]
          %v3193 = vld [vmem:[%s3164 + $0x70] sm:$0xf]
          %v3194 = vld [vmem:[%s3164 + $0x74] sm:$0xf]
          %v3195 = vld [vmem:[%s3164 + $0x78] sm:$0xf]
          %v3196 = vld [vmem:[%s3164 + $0x7c] sm:$0xf]
          %v3197 = vld [vmem:[%s3164 + $0x80] sm:$0xf]
          %v3198 = vld [vmem:[%s3164 + $0x84] sm:$0xf]
          %v3199 = vld [vmem:[%s3164 + $0x88] sm:$0xf]
          %v3200 = vld [vmem:[%s3164 + $0x8c] sm:$0xf]
          %v3201 = vld [vmem:[%s3164 + $0x90] sm:$0xf]
          %v3202 = vld [vmem:[%s3164 + $0x94] sm:$0xf]
          %v3203 = vld [vmem:[%s3164 + $0x98] sm:$0xf]
          %v3204 = vld [vmem:[%s3164 + $0x9c] sm:$0xf]
          %v3205 = vld [vmem:[%s3164 + $0xa0] sm:$0xf]
          %v3206 = vld [vmem:[%s3164 + $0xa4] sm:$0xf]
          %v3207 = vld [vmem:[%s3164 + $0xa8] sm:$0xf]
          %v3208 = vld [vmem:[%s3164 + $0xac] sm:$0xf]
          %v3209 = vld [vmem:[%s3164 + $0xb0] sm:$0xf]
          %v3210 = vld [vmem:[%s3164 + $0xb4] sm:$0xf]
          %v3211 = vld [vmem:[%s3164 + $0xb8] sm:$0xf]
          %v3212 = vld [vmem:[%s3164 + $0xbc] sm:$0xf]
          %v3245 = vunpack.c.l.b16 %v3132
          %v3246 = vunpack.c.h.b16 %v3132
          %v3247 = vunpack.c.l.b16 %v3133
          %v3248 = vunpack.c.l.b16 %v3134
          %v3249 = vunpack.c.h.b16 %v3134
          %v3250 = vunpack.c.l.b16 %v3135
          %v3251 = vunpack.c.l.b16 %v3136
          %v3252 = vunpack.c.h.b16 %v3136
          %v3253 = vunpack.c.l.b16 %v3137
          %v3254 = vunpack.c.l.b16 %v3138
          %v3255 = vunpack.c.h.b16 %v3138
          %v3256 = vunpack.c.l.b16 %v3139
          %v3257 = vunpack.c.l.b16 %v3140
          %v3258 = vunpack.c.h.b16 %v3140
          %v3259 = vunpack.c.l.b16 %v3141
          %v3260 = vunpack.c.l.b16 %v3142
          %v3261 = vunpack.c.h.b16 %v3142
          %v3262 = vunpack.c.l.b16 %v3143
          %v3263 = vunpack.c.l.b16 %v3144
          %v3264 = vunpack.c.h.b16 %v3144
          %v3265 = vunpack.c.l.b16 %v3145
          %v3266 = vunpack.c.l.b16 %v3146
          %v3267 = vunpack.c.h.b16 %v3146
          %v3268 = vunpack.c.l.b16 %v3147
          %v3269 = vunpack.c.l.b16 %v3148
          %v3270 = vunpack.c.h.b16 %v3148
          %v3271 = vunpack.c.l.b16 %v3149
          %v3272 = vunpack.c.l.b16 %v3150
          %v3273 = vunpack.c.h.b16 %v3150
          %v3274 = vunpack.c.l.b16 %v3151
          %v3275 = vunpack.c.l.b16 %v3152
          %v3276 = vunpack.c.h.b16 %v3152
          %v3277 = vunpack.c.l.b16 %v3153
          %v3278 = vunpack.c.l.b16 %v3154
          %v3279 = vunpack.c.h.b16 %v3154
          %v3280 = vunpack.c.l.b16 %v3155
          %v3281 = vunpack.c.l.b16 %v3156
          %v3282 = vunpack.c.h.b16 %v3156
          %v3283 = vunpack.c.l.b16 %v3157
          %v3284 = vunpack.c.l.b16 %v3158
          %v3285 = vunpack.c.h.b16 %v3158
          %v3286 = vunpack.c.l.b16 %v3159
          %v3287 = vunpack.c.l.b16 %v3160
          %v3288 = vunpack.c.h.b16 %v3160
          %v3289 = vunpack.c.l.b16 %v3161
          %v3290 = vunpack.c.l.b16 %v3162
          %v3291 = vunpack.c.h.b16 %v3162
          %v3292 = vunpack.c.l.b16 %v3163
          %v3293 = vpack.c.b16 %v3248, %v3245
          %v3294 = vpack.c.b16 %v3249, %v3246
          %v3295 = vpack.c.b16 %v3250, %v3247
          %v3296 = vpack.c.b16 %v3254, %v3251
          %v3297 = vpack.c.b16 %v3255, %v3252
          %v3298 = vpack.c.b16 %v3256, %v3253
          %v3299 = vpack.c.b16 %v3260, %v3257
          %v3300 = vpack.c.b16 %v3261, %v3258
          %v3301 = vpack.c.b16 %v3262, %v3259
          %v3302 = vpack.c.b16 %v3266, %v3263
          %v3303 = vpack.c.b16 %v3267, %v3264
          %v3304 = vpack.c.b16 %v3268, %v3265
          %v3305 = vpack.c.b16 %v3272, %v3269
          %v3306 = vpack.c.b16 %v3273, %v3270
          %v3307 = vpack.c.b16 %v3274, %v3271
          %v3308 = vpack.c.b16 %v3278, %v3275
          %v3309 = vpack.c.b16 %v3279, %v3276
          %v3310 = vpack.c.b16 %v3280, %v3277
          %v3311 = vpack.c.b16 %v3284, %v3281
          %v3312 = vpack.c.b16 %v3285, %v3282
          %v3313 = vpack.c.b16 %v3286, %v3283
          %v3314 = vpack.c.b16 %v3290, %v3287
          %v3315 = vpack.c.b16 %v3291, %v3288
          %v3316 = vpack.c.b16 %v3292, %v3289
          %v3389 = vunpack.c.l.b16 %v3165
          %v3390 = vunpack.c.l.b16 %v3166
          %v3391 = vunpack.c.l.b16 %v3167
          %v3392 = vunpack.c.l.b16 %v3168
          %v3393 = vunpack.c.l.b16 %v3169
          %v3394 = vunpack.c.l.b16 %v3170
          %v3395 = vunpack.c.l.b16 %v3171
          %v3396 = vunpack.c.l.b16 %v3172
          %v3397 = vunpack.c.l.b16 %v3173
          %v3398 = vunpack.c.l.b16 %v3174
          %v3399 = vunpack.c.l.b16 %v3175
          %v3400 = vunpack.c.l.b16 %v3176
          %v3401 = vunpack.c.l.b16 %v3177
          %v3402 = vunpack.c.l.b16 %v3178
          %v3403 = vunpack.c.l.b16 %v3179
          %v3404 = vunpack.c.l.b16 %v3180
          %v3405 = vunpack.c.l.b16 %v3181
          %v3406 = vunpack.c.l.b16 %v3182
          %v3407 = vunpack.c.l.b16 %v3183
          %v3408 = vunpack.c.l.b16 %v3184
          %v3409 = vunpack.c.l.b16 %v3185
          %v3410 = vunpack.c.l.b16 %v3186
          %v3411 = vunpack.c.l.b16 %v3187
          %v3412 = vunpack.c.l.b16 %v3188
          %v3413 = vunpack.c.l.b16 %v3189
          %v3414 = vunpack.c.l.b16 %v3190
          %v3415 = vunpack.c.l.b16 %v3191
          %v3416 = vunpack.c.l.b16 %v3192
          %v3417 = vunpack.c.l.b16 %v3193
          %v3418 = vunpack.c.l.b16 %v3194
          %v3419 = vunpack.c.l.b16 %v3195
          %v3420 = vunpack.c.l.b16 %v3196
          %v3421 = vunpack.c.l.b16 %v3197
          %v3422 = vunpack.c.l.b16 %v3198
          %v3423 = vunpack.c.l.b16 %v3199
          %v3424 = vunpack.c.l.b16 %v3200
          %v3425 = vunpack.c.l.b16 %v3201
          %v3426 = vunpack.c.l.b16 %v3202
          %v3427 = vunpack.c.l.b16 %v3203
          %v3428 = vunpack.c.l.b16 %v3204
          %v3429 = vunpack.c.l.b16 %v3205
          %v3430 = vunpack.c.l.b16 %v3206
          %v3431 = vunpack.c.l.b16 %v3207
          %v3432 = vunpack.c.l.b16 %v3208
          %v3433 = vunpack.c.l.b16 %v3209
          %v3434 = vunpack.c.l.b16 %v3210
          %v3435 = vunpack.c.l.b16 %v3211
          %v3436 = vunpack.c.l.b16 %v3212
          %v3437 = vpack.c.b16 %v3390, %v3389
          %v3438 = vpack.c.b16 %v3392, %v3391
          %v3439 = vpack.c.b16 %v3394, %v3393
          %v3440 = vpack.c.b16 %v3396, %v3395
          %v3441 = vpack.c.b16 %v3398, %v3397
          %v3442 = vpack.c.b16 %v3400, %v3399
          %v3443 = vpack.c.b16 %v3402, %v3401
          %v3444 = vpack.c.b16 %v3404, %v3403
          %v3445 = vpack.c.b16 %v3406, %v3405
          %v3446 = vpack.c.b16 %v3408, %v3407
          %v3447 = vpack.c.b16 %v3410, %v3409
          %v3448 = vpack.c.b16 %v3412, %v3411
          %v3449 = vpack.c.b16 %v3414, %v3413
          %v3450 = vpack.c.b16 %v3416, %v3415
          %v3451 = vpack.c.b16 %v3418, %v3417
          %v3452 = vpack.c.b16 %v3420, %v3419
          %v3453 = vpack.c.b16 %v3422, %v3421
          %v3454 = vpack.c.b16 %v3424, %v3423
          %v3455 = vpack.c.b16 %v3426, %v3425
          %v3456 = vpack.c.b16 %v3428, %v3427
          %v3457 = vpack.c.b16 %v3430, %v3429
          %v3458 = vpack.c.b16 %v3432, %v3431
          %v3459 = vpack.c.b16 %v3434, %v3433
          %v3460 = vpack.c.b16 %v3436, %v3435
          %3485 = vmatpush.bf16.msra.mxu0 %v3444
          %3486 = vmatpush.bf16.msra.mxu0 %v3443
          %3487 = vmatpush.bf16.msra.mxu0 %v3442
          %3488 = vmatpush.bf16.msra.mxu0 %v3441
          %3489 = vmatpush.bf16.msra.mxu0 %v3440
          %3490 = vmatpush.bf16.msra.mxu0 %v3439
          %3491 = vmatpush.bf16.msra.mxu0 %v3438
          %3492 = vmatpush.bf16.msra.mxu0 %v3437
          %3493 = vmatmul.bf16.gmra.mxu0 %v3293
          %v3494 = vpop.f32.mrf.mxu0
          %v3495 = vadd.f32 0.0, %v3494
          %v3496 = vpop.f32.mrf.mxu0
          %v3497 = vadd.f32 0.0, %v3496
          %3498 = vmatmul.bf16.gmra.mxu0 %v3296
          %v3499 = vpop.f32.mrf.mxu0
          %v3500 = vadd.f32 0.0, %v3499
          %v3501 = vpop.f32.mrf.mxu0
          %v3502 = vadd.f32 0.0, %v3501
          %3503 = vmatmul.bf16.gmra.mxu0 %v3299
          %v3504 = vpop.f32.mrf.mxu0
          %v3505 = vadd.f32 0.0, %v3504
          %v3506 = vpop.f32.mrf.mxu0
          %v3507 = vadd.f32 0.0, %v3506
          %3508 = vmatmul.bf16.gmra.mxu0 %v3302
          %v3509 = vpop.f32.mrf.mxu0
          %v3510 = vadd.f32 0.0, %v3509
          %v3511 = vpop.f32.mrf.mxu0
          %v3512 = vadd.f32 0.0, %v3511
          %3513 = vmatmul.bf16.gmra.mxu0 %v3305
          %v3514 = vpop.f32.mrf.mxu0
          %v3515 = vadd.f32 0.0, %v3514
          %v3516 = vpop.f32.mrf.mxu0
          %v3517 = vadd.f32 0.0, %v3516
          %3518 = vmatmul.bf16.gmra.mxu0 %v3308
          %v3519 = vpop.f32.mrf.mxu0
          %v3520 = vadd.f32 0.0, %v3519
          %v3521 = vpop.f32.mrf.mxu0
          %v3522 = vadd.f32 0.0, %v3521
          %3523 = vmatmul.bf16.gmra.mxu0 %v3311
          %v3524 = vpop.f32.mrf.mxu0
          %v3525 = vadd.f32 0.0, %v3524
          %v3526 = vpop.f32.mrf.mxu0
          %v3527 = vadd.f32 0.0, %v3526
          %3528 = vmatmul.bf16.gmra.mxu0 %v3314
          %v3529 = vpop.f32.mrf.mxu0
          %v3530 = vadd.f32 0.0, %v3529
          %v3531 = vpop.f32.mrf.mxu0
          %v3532 = vadd.f32 0.0, %v3531
          %3533 = vdwg.mxu0
          %3534 = vmatpush.bf16.msra.mxu0 %v3452
          %3535 = vmatpush.bf16.msra.mxu0 %v3451
          %3536 = vmatpush.bf16.msra.mxu0 %v3450
          %3537 = vmatpush.bf16.msra.mxu0 %v3449
          %3538 = vmatpush.bf16.msra.mxu0 %v3448
          %3539 = vmatpush.bf16.msra.mxu0 %v3447
          %3540 = vmatpush.bf16.msra.mxu0 %v3446
          %3541 = vmatpush.bf16.msra.mxu0 %v3445
          %3542 = vmatmul.bf16.gmra.mxu0 %v3294
          %v3543 = vpop.f32.mrf.mxu0
          %v3544 = vadd.f32 %v3495, %v3543
          %v3545 = vpop.f32.mrf.mxu0
          %v3546 = vadd.f32 %v3497, %v3545
          %3547 = vmatmul.bf16.gmra.mxu0 %v3297
          %v3548 = vpop.f32.mrf.mxu0
          %v3549 = vadd.f32 %v3500, %v3548
          %v3550 = vpop.f32.mrf.mxu0
          %v3551 = vadd.f32 %v3502, %v3550
          %3552 = vmatmul.bf16.gmra.mxu0 %v3300
          %v3553 = vpop.f32.mrf.mxu0
          %v3554 = vadd.f32 %v3505, %v3553
          %v3555 = vpop.f32.mrf.mxu0
          %v3556 = vadd.f32 %v3507, %v3555
          %3557 = vmatmul.bf16.gmra.mxu0 %v3303
          %v3558 = vpop.f32.mrf.mxu0
          %v3559 = vadd.f32 %v3510, %v3558
          %v3560 = vpop.f32.mrf.mxu0
          %v3561 = vadd.f32 %v3512, %v3560
          %3562 = vmatmul.bf16.gmra.mxu0 %v3306
          %v3563 = vpop.f32.mrf.mxu0
          %v3564 = vadd.f32 %v3515, %v3563
          %v3565 = vpop.f32.mrf.mxu0
          %v3566 = vadd.f32 %v3517, %v3565
          %3567 = vmatmul.bf16.gmra.mxu0 %v3309
          %v3568 = vpop.f32.mrf.mxu0
          %v3569 = vadd.f32 %v3520, %v3568
          %v3570 = vpop.f32.mrf.mxu0
          %v3571 = vadd.f32 %v3522, %v3570
          %3572 = vmatmul.bf16.gmra.mxu0 %v3312
          %v3573 = vpop.f32.mrf.mxu0
          %v3574 = vadd.f32 %v3525, %v3573
          %v3575 = vpop.f32.mrf.mxu0
          %v3576 = vadd.f32 %v3527, %v3575
          %3577 = vmatmul.bf16.gmra.mxu0 %v3315
          %v3578 = vpop.f32.mrf.mxu0
          %v3579 = vadd.f32 %v3530, %v3578
          %v3580 = vpop.f32.mrf.mxu0
          %v3581 = vadd.f32 %v3532, %v3580
          %3582 = vdwg.mxu0
          %3583 = vmatpush.bf16.msra.mxu0 %v3460
          %3584 = vmatpush.bf16.msra.mxu0 %v3459
          %3585 = vmatpush.bf16.msra.mxu0 %v3458
          %3586 = vmatpush.bf16.msra.mxu0 %v3457
          %3587 = vmatpush.bf16.msra.mxu0 %v3456
          %3588 = vmatpush.bf16.msra.mxu0 %v3455
          %3589 = vmatpush.bf16.msra.mxu0 %v3454
          %3590 = vmatpush.bf16.msra.mxu0 %v3453
          %3591 = vmatmul.bf16.gmra.mxu0 %v3295
          %v3592 = vpop.f32.mrf.mxu0
          %v3593 = vadd.f32 %v3544, %v3592
          %v3594 = vpop.f32.mrf.mxu0
          %v3595 = vadd.f32 %v3546, %v3594
          %3596 = vmatmul.bf16.gmra.mxu0 %v3298
          %v3597 = vpop.f32.mrf.mxu0
          %v3598 = vadd.f32 %v3549, %v3597
          %v3599 = vpop.f32.mrf.mxu0
          %v3600 = vadd.f32 %v3551, %v3599
          %3601 = vmatmul.bf16.gmra.mxu0 %v3301
          %v3602 = vpop.f32.mrf.mxu0
          %v3603 = vadd.f32 %v3554, %v3602
          %v3604 = vpop.f32.mrf.mxu0
          %v3605 = vadd.f32 %v3556, %v3604
          %3606 = vmatmul.bf16.gmra.mxu0 %v3304
          %v3607 = vpop.f32.mrf.mxu0
          %v3608 = vadd.f32 %v3559, %v3607
          %v3609 = vpop.f32.mrf.mxu0
          %v3610 = vadd.f32 %v3561, %v3609
          %3611 = vmatmul.bf16.gmra.mxu0 %v3307
          %v3612 = vpop.f32.mrf.mxu0
          %v3613 = vadd.f32 %v3564, %v3612
          %v3614 = vpop.f32.mrf.mxu0
          %v3615 = vadd.f32 %v3566, %v3614
          %3616 = vmatmul.bf16.gmra.mxu0 %v3310
          %v3617 = vpop.f32.mrf.mxu0
          %v3618 = vadd.f32 %v3569, %v3617
          %v3619 = vpop.f32.mrf.mxu0
          %v3620 = vadd.f32 %v3571, %v3619
          %3621 = vmatmul.bf16.gmra.mxu0 %v3313
          %v3622 = vpop.f32.mrf.mxu0
          %v3623 = vadd.f32 %v3574, %v3622
          %v3624 = vpop.f32.mrf.mxu0
          %v3625 = vadd.f32 %v3576, %v3624
          %3626 = vmatmul.bf16.gmra.mxu0 %v3316
          %v3627 = vpop.f32.mrf.mxu0
          %v3628 = vadd.f32 %v3579, %v3627
          %v3629 = vpop.f32.mrf.mxu0
          %v3630 = vadd.f32 %v3581, %v3629
          %3631 = vdwg.mxu0
          %v3632 = vadd.f32 %v3113, %v3593
          %v3633 = vadd.f32 %v3114, %v3595
          %v3634 = vadd.f32 %v3115, %v3598
          %v3635 = vadd.f32 %v3116, %v3600
          %v3636 = vadd.f32 %v3117, %v3603
          %v3637 = vadd.f32 %v3118, %v3605
          %v3638 = vadd.f32 %v3119, %v3608
          %v3639 = vadd.f32 %v3120, %v3610
          %v3640 = vadd.f32 %v3121, %v3613
          %v3641 = vadd.f32 %v3122, %v3615
          %v3642 = vadd.f32 %v3123, %v3618
          %v3643 = vadd.f32 %v3124, %v3620
          %v3644 = vadd.f32 %v3125, %v3623
          %v3645 = vadd.f32 %v3126, %v3625
          %v3646 = vadd.f32 %v3127, %v3628
          %v3647 = vadd.f32 %v3128, %v3630
          %s3648 = sadd.s32 %s565, 2
          %s3649 = smul.u32 %s3648, 30
          %s3650 = smul.addr %s3649, 4
          %s3651 = scalar_lea.vmem [#allocation2], %s3650
          %v3652 = vld [vmem:[%s3651] sm:$0xff]
          %v3653 = vld [vmem:[%s3651 + $0x8] sm:$0xf]
          %v3654 = vld [vmem:[%s3651 + $0xc] sm:$0xff]
          %v3655 = vld [vmem:[%s3651 + $0x14] sm:$0xf]
          %v3656 = vld [vmem:[%s3651 + $0x18] sm:$0xff]
          %v3657 = vld [vmem:[%s3651 + $0x20] sm:$0xf]
          %v3658 = vld [vmem:[%s3651 + $0x24] sm:$0xff]
          %v3659 = vld [vmem:[%s3651 + $0x2c] sm:$0xf]
          %v3660 = vld [vmem:[%s3651 + $0x30] sm:$0xff]
          %v3661 = vld [vmem:[%s3651 + $0x38] sm:$0xf]
          %v3662 = vld [vmem:[%s3651 + $0x3c] sm:$0xff]
          %v3663 = vld [vmem:[%s3651 + $0x44] sm:$0xf]
          %v3664 = vld [vmem:[%s3651 + $0x48] sm:$0xff]
          %v3665 = vld [vmem:[%s3651 + $0x50] sm:$0xf]
          %v3666 = vld [vmem:[%s3651 + $0x54] sm:$0xff]
          %v3667 = vld [vmem:[%s3651 + $0x5c] sm:$0xf]
          %v3668 = vld [vmem:[%s3651 + $0x78] sm:$0xff]
          %v3669 = vld [vmem:[%s3651 + $0x80] sm:$0xf]
          %v3670 = vld [vmem:[%s3651 + $0x84] sm:$0xff]
          %v3671 = vld [vmem:[%s3651 + $0x8c] sm:$0xf]
          %v3672 = vld [vmem:[%s3651 + $0x90] sm:$0xff]
          %v3673 = vld [vmem:[%s3651 + $0x98] sm:$0xf]
          %v3674 = vld [vmem:[%s3651 + $0x9c] sm:$0xff]
          %v3675 = vld [vmem:[%s3651 + $0xa4] sm:$0xf]
          %v3676 = vld [vmem:[%s3651 + $0xa8] sm:$0xff]
          %v3677 = vld [vmem:[%s3651 + $0xb0] sm:$0xf]
          %v3678 = vld [vmem:[%s3651 + $0xb4] sm:$0xff]
          %v3679 = vld [vmem:[%s3651 + $0xbc] sm:$0xf]
          %v3680 = vld [vmem:[%s3651 + $0xc0] sm:$0xff]
          %v3681 = vld [vmem:[%s3651 + $0xc8] sm:$0xf]
          %v3682 = vld [vmem:[%s3651 + $0xcc] sm:$0xff]
          %v3683 = vld [vmem:[%s3651 + $0xd4] sm:$0xf]
          %s3684 = scalar_lea.vmem [#allocation6], 1152
          %v3685 = vld [vmem:[%s3684] sm:$0xf]
          %v3686 = vld [vmem:[%s3684 + $0x4] sm:$0xf]
          %v3687 = vld [vmem:[%s3684 + $0x8] sm:$0xf]
          %v3688 = vld [vmem:[%s3684 + $0xc] sm:$0xf]
          %v3689 = vld [vmem:[%s3684 + $0x10] sm:$0xf]
          %v3690 = vld [vmem:[%s3684 + $0x14] sm:$0xf]
          %v3691 = vld [vmem:[%s3684 + $0x18] sm:$0xf]
          %v3692 = vld [vmem:[%s3684 + $0x1c] sm:$0xf]
          %v3693 = vld [vmem:[%s3684 + $0x20] sm:$0xf]
          %v3694 = vld [vmem:[%s3684 + $0x24] sm:$0xf]
          %v3695 = vld [vmem:[%s3684 + $0x28] sm:$0xf]
          %v3696 = vld [vmem:[%s3684 + $0x2c] sm:$0xf]
          %v3697 = vld [vmem:[%s3684 + $0x30] sm:$0xf]
          %v3698 = vld [vmem:[%s3684 + $0x34] sm:$0xf]
          %v3699 = vld [vmem:[%s3684 + $0x38] sm:$0xf]
          %v3700 = vld [vmem:[%s3684 + $0x3c] sm:$0xf]
          %v3701 = vld [vmem:[%s3684 + $0x40] sm:$0xf]
          %v3702 = vld [vmem:[%s3684 + $0x44] sm:$0xf]
          %v3703 = vld [vmem:[%s3684 + $0x48] sm:$0xf]
          %v3704 = vld [vmem:[%s3684 + $0x4c] sm:$0xf]
          %v3705 = vld [vmem:[%s3684 + $0x50] sm:$0xf]
          %v3706 = vld [vmem:[%s3684 + $0x54] sm:$0xf]
          %v3707 = vld [vmem:[%s3684 + $0x58] sm:$0xf]
          %v3708 = vld [vmem:[%s3684 + $0x5c] sm:$0xf]
          %v3709 = vld [vmem:[%s3684 + $0x60] sm:$0xf]
          %v3710 = vld [vmem:[%s3684 + $0x64] sm:$0xf]
          %v3711 = vld [vmem:[%s3684 + $0x68] sm:$0xf]
          %v3712 = vld [vmem:[%s3684 + $0x6c] sm:$0xf]
          %v3713 = vld [vmem:[%s3684 + $0x70] sm:$0xf]
          %v3714 = vld [vmem:[%s3684 + $0x74] sm:$0xf]
          %v3715 = vld [vmem:[%s3684 + $0x78] sm:$0xf]
          %v3716 = vld [vmem:[%s3684 + $0x7c] sm:$0xf]
          %v3717 = vld [vmem:[%s3684 + $0x80] sm:$0xf]
          %v3718 = vld [vmem:[%s3684 + $0x84] sm:$0xf]
          %v3719 = vld [vmem:[%s3684 + $0x88] sm:$0xf]
          %v3720 = vld [vmem:[%s3684 + $0x8c] sm:$0xf]
          %v3721 = vld [vmem:[%s3684 + $0x90] sm:$0xf]
          %v3722 = vld [vmem:[%s3684 + $0x94] sm:$0xf]
          %v3723 = vld [vmem:[%s3684 + $0x98] sm:$0xf]
          %v3724 = vld [vmem:[%s3684 + $0x9c] sm:$0xf]
          %v3725 = vld [vmem:[%s3684 + $0xa0] sm:$0xf]
          %v3726 = vld [vmem:[%s3684 + $0xa4] sm:$0xf]
          %v3727 = vld [vmem:[%s3684 + $0xa8] sm:$0xf]
          %v3728 = vld [vmem:[%s3684 + $0xac] sm:$0xf]
          %v3729 = vld [vmem:[%s3684 + $0xb0] sm:$0xf]
          %v3730 = vld [vmem:[%s3684 + $0xb4] sm:$0xf]
          %v3731 = vld [vmem:[%s3684 + $0xb8] sm:$0xf]
          %v3732 = vld [vmem:[%s3684 + $0xbc] sm:$0xf]
          %v3765 = vunpack.c.l.b16 %v3652
          %v3766 = vunpack.c.h.b16 %v3652
          %v3767 = vunpack.c.l.b16 %v3653
          %v3768 = vunpack.c.l.b16 %v3654
          %v3769 = vunpack.c.h.b16 %v3654
          %v3770 = vunpack.c.l.b16 %v3655
          %v3771 = vunpack.c.l.b16 %v3656
          %v3772 = vunpack.c.h.b16 %v3656
          %v3773 = vunpack.c.l.b16 %v3657
          %v3774 = vunpack.c.l.b16 %v3658
          %v3775 = vunpack.c.h.b16 %v3658
          %v3776 = vunpack.c.l.b16 %v3659
          %v3777 = vunpack.c.l.b16 %v3660
          %v3778 = vunpack.c.h.b16 %v3660
          %v3779 = vunpack.c.l.b16 %v3661
          %v3780 = vunpack.c.l.b16 %v3662
          %v3781 = vunpack.c.h.b16 %v3662
          %v3782 = vunpack.c.l.b16 %v3663
          %v3783 = vunpack.c.l.b16 %v3664
          %v3784 = vunpack.c.h.b16 %v3664
          %v3785 = vunpack.c.l.b16 %v3665
          %v3786 = vunpack.c.l.b16 %v3666
          %v3787 = vunpack.c.h.b16 %v3666
          %v3788 = vunpack.c.l.b16 %v3667
          %v3789 = vunpack.c.l.b16 %v3668
          %v3790 = vunpack.c.h.b16 %v3668
          %v3791 = vunpack.c.l.b16 %v3669
          %v3792 = vunpack.c.l.b16 %v3670
          %v3793 = vunpack.c.h.b16 %v3670
          %v3794 = vunpack.c.l.b16 %v3671
          %v3795 = vunpack.c.l.b16 %v3672
          %v3796 = vunpack.c.h.b16 %v3672
          %v3797 = vunpack.c.l.b16 %v3673
          %v3798 = vunpack.c.l.b16 %v3674
          %v3799 = vunpack.c.h.b16 %v3674
          %v3800 = vunpack.c.l.b16 %v3675
          %v3801 = vunpack.c.l.b16 %v3676
          %v3802 = vunpack.c.h.b16 %v3676
          %v3803 = vunpack.c.l.b16 %v3677
          %v3804 = vunpack.c.l.b16 %v3678
          %v3805 = vunpack.c.h.b16 %v3678
          %v3806 = vunpack.c.l.b16 %v3679
          %v3807 = vunpack.c.l.b16 %v3680
          %v3808 = vunpack.c.h.b16 %v3680
          %v3809 = vunpack.c.l.b16 %v3681
          %v3810 = vunpack.c.l.b16 %v3682
          %v3811 = vunpack.c.h.b16 %v3682
          %v3812 = vunpack.c.l.b16 %v3683
          %v3813 = vpack.c.b16 %v3768, %v3765
          %v3814 = vpack.c.b16 %v3769, %v3766
          %v3815 = vpack.c.b16 %v3770, %v3767
          %v3816 = vpack.c.b16 %v3774, %v3771
          %v3817 = vpack.c.b16 %v3775, %v3772
          %v3818 = vpack.c.b16 %v3776, %v3773
          %v3819 = vpack.c.b16 %v3780, %v3777
          %v3820 = vpack.c.b16 %v3781, %v3778
          %v3821 = vpack.c.b16 %v3782, %v3779
          %v3822 = vpack.c.b16 %v3786, %v3783
          %v3823 = vpack.c.b16 %v3787, %v3784
          %v3824 = vpack.c.b16 %v3788, %v3785
          %v3825 = vpack.c.b16 %v3792, %v3789
          %v3826 = vpack.c.b16 %v3793, %v3790
          %v3827 = vpack.c.b16 %v3794, %v3791
          %v3828 = vpack.c.b16 %v3798, %v3795
          %v3829 = vpack.c.b16 %v3799, %v3796
          %v3830 = vpack.c.b16 %v3800, %v3797
          %v3831 = vpack.c.b16 %v3804, %v3801
          %v3832 = vpack.c.b16 %v3805, %v3802
          %v3833 = vpack.c.b16 %v3806, %v3803
          %v3834 = vpack.c.b16 %v3810, %v3807
          %v3835 = vpack.c.b16 %v3811, %v3808
          %v3836 = vpack.c.b16 %v3812, %v3809
          %v3909 = vunpack.c.l.b16 %v3685
          %v3910 = vunpack.c.l.b16 %v3686
          %v3911 = vunpack.c.l.b16 %v3687
          %v3912 = vunpack.c.l.b16 %v3688
          %v3913 = vunpack.c.l.b16 %v3689
          %v3914 = vunpack.c.l.b16 %v3690
          %v3915 = vunpack.c.l.b16 %v3691
          %v3916 = vunpack.c.l.b16 %v3692
          %v3917 = vunpack.c.l.b16 %v3693
          %v3918 = vunpack.c.l.b16 %v3694
          %v3919 = vunpack.c.l.b16 %v3695
          %v3920 = vunpack.c.l.b16 %v3696
          %v3921 = vunpack.c.l.b16 %v3697
          %v3922 = vunpack.c.l.b16 %v3698
          %v3923 = vunpack.c.l.b16 %v3699
          %v3924 = vunpack.c.l.b16 %v3700
          %v3925 = vunpack.c.l.b16 %v3701
          %v3926 = vunpack.c.l.b16 %v3702
          %v3927 = vunpack.c.l.b16 %v3703
          %v3928 = vunpack.c.l.b16 %v3704
          %v3929 = vunpack.c.l.b16 %v3705
          %v3930 = vunpack.c.l.b16 %v3706
          %v3931 = vunpack.c.l.b16 %v3707
          %v3932 = vunpack.c.l.b16 %v3708
          %v3933 = vunpack.c.l.b16 %v3709
          %v3934 = vunpack.c.l.b16 %v3710
          %v3935 = vunpack.c.l.b16 %v3711
          %v3936 = vunpack.c.l.b16 %v3712
          %v3937 = vunpack.c.l.b16 %v3713
          %v3938 = vunpack.c.l.b16 %v3714
          %v3939 = vunpack.c.l.b16 %v3715
          %v3940 = vunpack.c.l.b16 %v3716
          %v3941 = vunpack.c.l.b16 %v3717
          %v3942 = vunpack.c.l.b16 %v3718
          %v3943 = vunpack.c.l.b16 %v3719
          %v3944 = vunpack.c.l.b16 %v3720
          %v3945 = vunpack.c.l.b16 %v3721
          %v3946 = vunpack.c.l.b16 %v3722
          %v3947 = vunpack.c.l.b16 %v3723
          %v3948 = vunpack.c.l.b16 %v3724
          %v3949 = vunpack.c.l.b16 %v3725
          %v3950 = vunpack.c.l.b16 %v3726
          %v3951 = vunpack.c.l.b16 %v3727
          %v3952 = vunpack.c.l.b16 %v3728
          %v3953 = vunpack.c.l.b16 %v3729
          %v3954 = vunpack.c.l.b16 %v3730
          %v3955 = vunpack.c.l.b16 %v3731
          %v3956 = vunpack.c.l.b16 %v3732
          %v3957 = vpack.c.b16 %v3910, %v3909
          %v3958 = vpack.c.b16 %v3912, %v3911
          %v3959 = vpack.c.b16 %v3914, %v3913
          %v3960 = vpack.c.b16 %v3916, %v3915
          %v3961 = vpack.c.b16 %v3918, %v3917
          %v3962 = vpack.c.b16 %v3920, %v3919
          %v3963 = vpack.c.b16 %v3922, %v3921
          %v3964 = vpack.c.b16 %v3924, %v3923
          %v3965 = vpack.c.b16 %v3926, %v3925
          %v3966 = vpack.c.b16 %v3928, %v3927
          %v3967 = vpack.c.b16 %v3930, %v3929
          %v3968 = vpack.c.b16 %v3932, %v3931
          %v3969 = vpack.c.b16 %v3934, %v3933
          %v3970 = vpack.c.b16 %v3936, %v3935
          %v3971 = vpack.c.b16 %v3938, %v3937
          %v3972 = vpack.c.b16 %v3940, %v3939
          %v3973 = vpack.c.b16 %v3942, %v3941
          %v3974 = vpack.c.b16 %v3944, %v3943
          %v3975 = vpack.c.b16 %v3946, %v3945
          %v3976 = vpack.c.b16 %v3948, %v3947
          %v3977 = vpack.c.b16 %v3950, %v3949
          %v3978 = vpack.c.b16 %v3952, %v3951
          %v3979 = vpack.c.b16 %v3954, %v3953
          %v3980 = vpack.c.b16 %v3956, %v3955
          %4005 = vmatpush.bf16.msra.mxu0 %v3964
          %4006 = vmatpush.bf16.msra.mxu0 %v3963
          %4007 = vmatpush.bf16.msra.mxu0 %v3962
          %4008 = vmatpush.bf16.msra.mxu0 %v3961
          %4009 = vmatpush.bf16.msra.mxu0 %v3960
          %4010 = vmatpush.bf16.msra.mxu0 %v3959
          %4011 = vmatpush.bf16.msra.mxu0 %v3958
          %4012 = vmatpush.bf16.msra.mxu0 %v3957
          %4013 = vmatmul.bf16.gmra.mxu0 %v3813
          %v4014 = vpop.f32.mrf.mxu0
          %v4015 = vadd.f32 0.0, %v4014
          %v4016 = vpop.f32.mrf.mxu0
          %v4017 = vadd.f32 0.0, %v4016
          %4018 = vmatmul.bf16.gmra.mxu0 %v3816
          %v4019 = vpop.f32.mrf.mxu0
          %v4020 = vadd.f32 0.0, %v4019
          %v4021 = vpop.f32.mrf.mxu0
          %v4022 = vadd.f32 0.0, %v4021
          %4023 = vmatmul.bf16.gmra.mxu0 %v3819
          %v4024 = vpop.f32.mrf.mxu0
          %v4025 = vadd.f32 0.0, %v4024
          %v4026 = vpop.f32.mrf.mxu0
          %v4027 = vadd.f32 0.0, %v4026
          %4028 = vmatmul.bf16.gmra.mxu0 %v3822
          %v4029 = vpop.f32.mrf.mxu0
          %v4030 = vadd.f32 0.0, %v4029
          %v4031 = vpop.f32.mrf.mxu0
          %v4032 = vadd.f32 0.0, %v4031
          %4033 = vmatmul.bf16.gmra.mxu0 %v3825
          %v4034 = vpop.f32.mrf.mxu0
          %v4035 = vadd.f32 0.0, %v4034
          %v4036 = vpop.f32.mrf.mxu0
          %v4037 = vadd.f32 0.0, %v4036
          %4038 = vmatmul.bf16.gmra.mxu0 %v3828
          %v4039 = vpop.f32.mrf.mxu0
          %v4040 = vadd.f32 0.0, %v4039
          %v4041 = vpop.f32.mrf.mxu0
          %v4042 = vadd.f32 0.0, %v4041
          %4043 = vmatmul.bf16.gmra.mxu0 %v3831
          %v4044 = vpop.f32.mrf.mxu0
          %v4045 = vadd.f32 0.0, %v4044
          %v4046 = vpop.f32.mrf.mxu0
          %v4047 = vadd.f32 0.0, %v4046
          %4048 = vmatmul.bf16.gmra.mxu0 %v3834
          %v4049 = vpop.f32.mrf.mxu0
          %v4050 = vadd.f32 0.0, %v4049
          %v4051 = vpop.f32.mrf.mxu0
          %v4052 = vadd.f32 0.0, %v4051
          %4053 = vdwg.mxu0
          %4054 = vmatpush.bf16.msra.mxu0 %v3972
          %4055 = vmatpush.bf16.msra.mxu0 %v3971
          %4056 = vmatpush.bf16.msra.mxu0 %v3970
          %4057 = vmatpush.bf16.msra.mxu0 %v3969
          %4058 = vmatpush.bf16.msra.mxu0 %v3968
          %4059 = vmatpush.bf16.msra.mxu0 %v3967
          %4060 = vmatpush.bf16.msra.mxu0 %v3966
          %4061 = vmatpush.bf16.msra.mxu0 %v3965
          %4062 = vmatmul.bf16.gmra.mxu0 %v3814
          %v4063 = vpop.f32.mrf.mxu0
          %v4064 = vadd.f32 %v4015, %v4063
          %v4065 = vpop.f32.mrf.mxu0
          %v4066 = vadd.f32 %v4017, %v4065
          %4067 = vmatmul.bf16.gmra.mxu0 %v3817
          %v4068 = vpop.f32.mrf.mxu0
          %v4069 = vadd.f32 %v4020, %v4068
          %v4070 = vpop.f32.mrf.mxu0
          %v4071 = vadd.f32 %v4022, %v4070
          %4072 = vmatmul.bf16.gmra.mxu0 %v3820
          %v4073 = vpop.f32.mrf.mxu0
          %v4074 = vadd.f32 %v4025, %v4073
          %v4075 = vpop.f32.mrf.mxu0
          %v4076 = vadd.f32 %v4027, %v4075
          %4077 = vmatmul.bf16.gmra.mxu0 %v3823
          %v4078 = vpop.f32.mrf.mxu0
          %v4079 = vadd.f32 %v4030, %v4078
          %v4080 = vpop.f32.mrf.mxu0
          %v4081 = vadd.f32 %v4032, %v4080
          %4082 = vmatmul.bf16.gmra.mxu0 %v3826
          %v4083 = vpop.f32.mrf.mxu0
          %v4084 = vadd.f32 %v4035, %v4083
          %v4085 = vpop.f32.mrf.mxu0
          %v4086 = vadd.f32 %v4037, %v4085
          %4087 = vmatmul.bf16.gmra.mxu0 %v3829
          %v4088 = vpop.f32.mrf.mxu0
          %v4089 = vadd.f32 %v4040, %v4088
          %v4090 = vpop.f32.mrf.mxu0
          %v4091 = vadd.f32 %v4042, %v4090
          %4092 = vmatmul.bf16.gmra.mxu0 %v3832
          %v4093 = vpop.f32.mrf.mxu0
          %v4094 = vadd.f32 %v4045, %v4093
          %v4095 = vpop.f32.mrf.mxu0
          %v4096 = vadd.f32 %v4047, %v4095
          %4097 = vmatmul.bf16.gmra.mxu0 %v3835
          %v4098 = vpop.f32.mrf.mxu0
          %v4099 = vadd.f32 %v4050, %v4098
          %v4100 = vpop.f32.mrf.mxu0
          %v4101 = vadd.f32 %v4052, %v4100
          %4102 = vdwg.mxu0
          %4103 = vmatpush.bf16.msra.mxu0 %v3980
          %4104 = vmatpush.bf16.msra.mxu0 %v3979
          %4105 = vmatpush.bf16.msra.mxu0 %v3978
          %4106 = vmatpush.bf16.msra.mxu0 %v3977
          %4107 = vmatpush.bf16.msra.mxu0 %v3976
          %4108 = vmatpush.bf16.msra.mxu0 %v3975
          %4109 = vmatpush.bf16.msra.mxu0 %v3974
          %4110 = vmatpush.bf16.msra.mxu0 %v3973
          %4111 = vmatmul.bf16.gmra.mxu0 %v3815
          %v4112 = vpop.f32.mrf.mxu0
          %v4113 = vadd.f32 %v4064, %v4112
          %v4114 = vpop.f32.mrf.mxu0
          %v4115 = vadd.f32 %v4066, %v4114
          %4116 = vmatmul.bf16.gmra.mxu0 %v3818
          %v4117 = vpop.f32.mrf.mxu0
          %v4118 = vadd.f32 %v4069, %v4117
          %v4119 = vpop.f32.mrf.mxu0
          %v4120 = vadd.f32 %v4071, %v4119
          %4121 = vmatmul.bf16.gmra.mxu0 %v3821
          %v4122 = vpop.f32.mrf.mxu0
          %v4123 = vadd.f32 %v4074, %v4122
          %v4124 = vpop.f32.mrf.mxu0
          %v4125 = vadd.f32 %v4076, %v4124
          %4126 = vmatmul.bf16.gmra.mxu0 %v3824
          %v4127 = vpop.f32.mrf.mxu0
          %v4128 = vadd.f32 %v4079, %v4127
          %v4129 = vpop.f32.mrf.mxu0
          %v4130 = vadd.f32 %v4081, %v4129
          %4131 = vmatmul.bf16.gmra.mxu0 %v3827
          %v4132 = vpop.f32.mrf.mxu0
          %v4133 = vadd.f32 %v4084, %v4132
          %v4134 = vpop.f32.mrf.mxu0
          %v4135 = vadd.f32 %v4086, %v4134
          %4136 = vmatmul.bf16.gmra.mxu0 %v3830
          %v4137 = vpop.f32.mrf.mxu0
          %v4138 = vadd.f32 %v4089, %v4137
          %v4139 = vpop.f32.mrf.mxu0
          %v4140 = vadd.f32 %v4091, %v4139
          %4141 = vmatmul.bf16.gmra.mxu0 %v3833
          %v4142 = vpop.f32.mrf.mxu0
          %v4143 = vadd.f32 %v4094, %v4142
          %v4144 = vpop.f32.mrf.mxu0
          %v4145 = vadd.f32 %v4096, %v4144
          %4146 = vmatmul.bf16.gmra.mxu0 %v3836
          %v4147 = vpop.f32.mrf.mxu0
          %v4148 = vadd.f32 %v4099, %v4147
          %v4149 = vpop.f32.mrf.mxu0
          %v4150 = vadd.f32 %v4101, %v4149
          %4151 = vdwg.mxu0
          %v4152 = vadd.f32 %v3632, %v4113
          %v4153 = vadd.f32 %v3633, %v4115
          %v4154 = vadd.f32 %v3634, %v4118
          %v4155 = vadd.f32 %v3635, %v4120
          %v4156 = vadd.f32 %v3636, %v4123
          %v4157 = vadd.f32 %v3637, %v4125
          %v4158 = vadd.f32 %v3638, %v4128
          %v4159 = vadd.f32 %v3639, %v4130
          %v4160 = vadd.f32 %v3640, %v4133
          %v4161 = vadd.f32 %v3641, %v4135
          %v4162 = vadd.f32 %v3642, %v4138
          %v4163 = vadd.f32 %v3643, %v4140
          %v4164 = vadd.f32 %v3644, %v4143
          %v4165 = vadd.f32 %v3645, %v4145
          %v4166 = vadd.f32 %v3646, %v4148
          %v4167 = vadd.f32 %v3647, %v4150
          %s4168 = sadd.s32 3, %s3649
          %s4169 = smul.addr %s4168, 4
          %s4170 = scalar_lea.vmem [#allocation2], %s4169
          %v4171 = vld [vmem:[%s4170] sm:$0xff]
          %v4172 = vld [vmem:[%s4170 + $0x8] sm:$0xf]
          %v4173 = vld [vmem:[%s4170 + $0xc] sm:$0xff]
          %v4174 = vld [vmem:[%s4170 + $0x14] sm:$0xf]
          %v4175 = vld [vmem:[%s4170 + $0x18] sm:$0xff]
          %v4176 = vld [vmem:[%s4170 + $0x20] sm:$0xf]
          %v4177 = vld [vmem:[%s4170 + $0x24] sm:$0xff]
          %v4178 = vld [vmem:[%s4170 + $0x2c] sm:$0xf]
          %v4179 = vld [vmem:[%s4170 + $0x30] sm:$0xff]
          %v4180 = vld [vmem:[%s4170 + $0x38] sm:$0xf]
          %v4181 = vld [vmem:[%s4170 + $0x3c] sm:$0xff]
          %v4182 = vld [vmem:[%s4170 + $0x44] sm:$0xf]
          %v4183 = vld [vmem:[%s4170 + $0x48] sm:$0xff]
          %v4184 = vld [vmem:[%s4170 + $0x50] sm:$0xf]
          %v4185 = vld [vmem:[%s4170 + $0x54] sm:$0xff]
          %v4186 = vld [vmem:[%s4170 + $0x5c] sm:$0xf]
          %v4187 = vld [vmem:[%s4170 + $0x78] sm:$0xff]
          %v4188 = vld [vmem:[%s4170 + $0x80] sm:$0xf]
          %v4189 = vld [vmem:[%s4170 + $0x84] sm:$0xff]
          %v4190 = vld [vmem:[%s4170 + $0x8c] sm:$0xf]
          %v4191 = vld [vmem:[%s4170 + $0x90] sm:$0xff]
          %v4192 = vld [vmem:[%s4170 + $0x98] sm:$0xf]
          %v4193 = vld [vmem:[%s4170 + $0x9c] sm:$0xff]
          %v4194 = vld [vmem:[%s4170 + $0xa4] sm:$0xf]
          %v4195 = vld [vmem:[%s4170 + $0xa8] sm:$0xff]
          %v4196 = vld [vmem:[%s4170 + $0xb0] sm:$0xf]
          %v4197 = vld [vmem:[%s4170 + $0xb4] sm:$0xff]
          %v4198 = vld [vmem:[%s4170 + $0xbc] sm:$0xf]
          %v4199 = vld [vmem:[%s4170 + $0xc0] sm:$0xff]
          %v4200 = vld [vmem:[%s4170 + $0xc8] sm:$0xf]
          %v4201 = vld [vmem:[%s4170 + $0xcc] sm:$0xff]
          %v4202 = vld [vmem:[%s4170 + $0xd4] sm:$0xf]
          %s4203 = scalar_lea.vmem [#allocation6], 1344
          %v4204 = vld [vmem:[%s4203] sm:$0xf]
          %v4205 = vld [vmem:[%s4203 + $0x4] sm:$0xf]
          %v4206 = vld [vmem:[%s4203 + $0x8] sm:$0xf]
          %v4207 = vld [vmem:[%s4203 + $0xc] sm:$0xf]
          %v4208 = vld [vmem:[%s4203 + $0x10] sm:$0xf]
          %v4209 = vld [vmem:[%s4203 + $0x14] sm:$0xf]
          %v4210 = vld [vmem:[%s4203 + $0x18] sm:$0xf]
          %v4211 = vld [vmem:[%s4203 + $0x1c] sm:$0xf]
          %v4212 = vld [vmem:[%s4203 + $0x20] sm:$0xf]
          %v4213 = vld [vmem:[%s4203 + $0x24] sm:$0xf]
          %v4214 = vld [vmem:[%s4203 + $0x28] sm:$0xf]
          %v4215 = vld [vmem:[%s4203 + $0x2c] sm:$0xf]
          %v4216 = vld [vmem:[%s4203 + $0x30] sm:$0xf]
          %v4217 = vld [vmem:[%s4203 + $0x34] sm:$0xf]
          %v4218 = vld [vmem:[%s4203 + $0x38] sm:$0xf]
          %v4219 = vld [vmem:[%s4203 + $0x3c] sm:$0xf]
          %v4220 = vld [vmem:[%s4203 + $0x40] sm:$0xf]
          %v4221 = vld [vmem:[%s4203 + $0x44] sm:$0xf]
          %v4222 = vld [vmem:[%s4203 + $0x48] sm:$0xf]
          %v4223 = vld [vmem:[%s4203 + $0x4c] sm:$0xf]
          %v4224 = vld [vmem:[%s4203 + $0x50] sm:$0xf]
          %v4225 = vld [vmem:[%s4203 + $0x54] sm:$0xf]
          %v4226 = vld [vmem:[%s4203 + $0x58] sm:$0xf]
          %v4227 = vld [vmem:[%s4203 + $0x5c] sm:$0xf]
          %v4228 = vld [vmem:[%s4203 + $0x60] sm:$0xf]
          %v4229 = vld [vmem:[%s4203 + $0x64] sm:$0xf]
          %v4230 = vld [vmem:[%s4203 + $0x68] sm:$0xf]
          %v4231 = vld [vmem:[%s4203 + $0x6c] sm:$0xf]
          %v4232 = vld [vmem:[%s4203 + $0x70] sm:$0xf]
          %v4233 = vld [vmem:[%s4203 + $0x74] sm:$0xf]
          %v4234 = vld [vmem:[%s4203 + $0x78] sm:$0xf]
          %v4235 = vld [vmem:[%s4203 + $0x7c] sm:$0xf]
          %v4236 = vld [vmem:[%s4203 + $0x80] sm:$0xf]
          %v4237 = vld [vmem:[%s4203 + $0x84] sm:$0xf]
          %v4238 = vld [vmem:[%s4203 + $0x88] sm:$0xf]
          %v4239 = vld [vmem:[%s4203 + $0x8c] sm:$0xf]
          %v4240 = vld [vmem:[%s4203 + $0x90] sm:$0xf]
          %v4241 = vld [vmem:[%s4203 + $0x94] sm:$0xf]
          %v4242 = vld [vmem:[%s4203 + $0x98] sm:$0xf]
          %v4243 = vld [vmem:[%s4203 + $0x9c] sm:$0xf]
          %v4244 = vld [vmem:[%s4203 + $0xa0] sm:$0xf]
          %v4245 = vld [vmem:[%s4203 + $0xa4] sm:$0xf]
          %v4246 = vld [vmem:[%s4203 + $0xa8] sm:$0xf]
          %v4247 = vld [vmem:[%s4203 + $0xac] sm:$0xf]
          %v4248 = vld [vmem:[%s4203 + $0xb0] sm:$0xf]
          %v4249 = vld [vmem:[%s4203 + $0xb4] sm:$0xf]
          %v4250 = vld [vmem:[%s4203 + $0xb8] sm:$0xf]
          %v4251 = vld [vmem:[%s4203 + $0xbc] sm:$0xf]
          %v4284 = vunpack.c.l.b16 %v4171
          %v4285 = vunpack.c.h.b16 %v4171
          %v4286 = vunpack.c.l.b16 %v4172
          %v4287 = vunpack.c.l.b16 %v4173
          %v4288 = vunpack.c.h.b16 %v4173
          %v4289 = vunpack.c.l.b16 %v4174
          %v4290 = vunpack.c.l.b16 %v4175
          %v4291 = vunpack.c.h.b16 %v4175
          %v4292 = vunpack.c.l.b16 %v4176
          %v4293 = vunpack.c.l.b16 %v4177
          %v4294 = vunpack.c.h.b16 %v4177
          %v4295 = vunpack.c.l.b16 %v4178
          %v4296 = vunpack.c.l.b16 %v4179
          %v4297 = vunpack.c.h.b16 %v4179
          %v4298 = vunpack.c.l.b16 %v4180
          %v4299 = vunpack.c.l.b16 %v4181
          %v4300 = vunpack.c.h.b16 %v4181
          %v4301 = vunpack.c.l.b16 %v4182
          %v4302 = vunpack.c.l.b16 %v4183
          %v4303 = vunpack.c.h.b16 %v4183
          %v4304 = vunpack.c.l.b16 %v4184
          %v4305 = vunpack.c.l.b16 %v4185
          %v4306 = vunpack.c.h.b16 %v4185
          %v4307 = vunpack.c.l.b16 %v4186
          %v4308 = vunpack.c.l.b16 %v4187
          %v4309 = vunpack.c.h.b16 %v4187
          %v4310 = vunpack.c.l.b16 %v4188
          %v4311 = vunpack.c.l.b16 %v4189
          %v4312 = vunpack.c.h.b16 %v4189
          %v4313 = vunpack.c.l.b16 %v4190
          %v4314 = vunpack.c.l.b16 %v4191
          %v4315 = vunpack.c.h.b16 %v4191
          %v4316 = vunpack.c.l.b16 %v4192
          %v4317 = vunpack.c.l.b16 %v4193
          %v4318 = vunpack.c.h.b16 %v4193
          %v4319 = vunpack.c.l.b16 %v4194
          %v4320 = vunpack.c.l.b16 %v4195
          %v4321 = vunpack.c.h.b16 %v4195
          %v4322 = vunpack.c.l.b16 %v4196
          %v4323 = vunpack.c.l.b16 %v4197
          %v4324 = vunpack.c.h.b16 %v4197
          %v4325 = vunpack.c.l.b16 %v4198
          %v4326 = vunpack.c.l.b16 %v4199
          %v4327 = vunpack.c.h.b16 %v4199
          %v4328 = vunpack.c.l.b16 %v4200
          %v4329 = vunpack.c.l.b16 %v4201
          %v4330 = vunpack.c.h.b16 %v4201
          %v4331 = vunpack.c.l.b16 %v4202
          %v4332 = vpack.c.b16 %v4287, %v4284
          %v4333 = vpack.c.b16 %v4288, %v4285
          %v4334 = vpack.c.b16 %v4289, %v4286
          %v4335 = vpack.c.b16 %v4293, %v4290
          %v4336 = vpack.c.b16 %v4294, %v4291
          %v4337 = vpack.c.b16 %v4295, %v4292
          %v4338 = vpack.c.b16 %v4299, %v4296
          %v4339 = vpack.c.b16 %v4300, %v4297
          %v4340 = vpack.c.b16 %v4301, %v4298
          %v4341 = vpack.c.b16 %v4305, %v4302
          %v4342 = vpack.c.b16 %v4306, %v4303
          %v4343 = vpack.c.b16 %v4307, %v4304
          %v4344 = vpack.c.b16 %v4311, %v4308
          %v4345 = vpack.c.b16 %v4312, %v4309
          %v4346 = vpack.c.b16 %v4313, %v4310
          %v4347 = vpack.c.b16 %v4317, %v4314
          %v4348 = vpack.c.b16 %v4318, %v4315
          %v4349 = vpack.c.b16 %v4319, %v4316
          %v4350 = vpack.c.b16 %v4323, %v4320
          %v4351 = vpack.c.b16 %v4324, %v4321
          %v4352 = vpack.c.b16 %v4325, %v4322
          %v4353 = vpack.c.b16 %v4329, %v4326
          %v4354 = vpack.c.b16 %v4330, %v4327
          %v4355 = vpack.c.b16 %v4331, %v4328
          %v4428 = vunpack.c.l.b16 %v4204
          %v4429 = vunpack.c.l.b16 %v4205
          %v4430 = vunpack.c.l.b16 %v4206
          %v4431 = vunpack.c.l.b16 %v4207
          %v4432 = vunpack.c.l.b16 %v4208
          %v4433 = vunpack.c.l.b16 %v4209
          %v4434 = vunpack.c.l.b16 %v4210
          %v4435 = vunpack.c.l.b16 %v4211
          %v4436 = vunpack.c.l.b16 %v4212
          %v4437 = vunpack.c.l.b16 %v4213
          %v4438 = vunpack.c.l.b16 %v4214
          %v4439 = vunpack.c.l.b16 %v4215
          %v4440 = vunpack.c.l.b16 %v4216
          %v4441 = vunpack.c.l.b16 %v4217
          %v4442 = vunpack.c.l.b16 %v4218
          %v4443 = vunpack.c.l.b16 %v4219
          %v4444 = vunpack.c.l.b16 %v4220
          %v4445 = vunpack.c.l.b16 %v4221
          %v4446 = vunpack.c.l.b16 %v4222
          %v4447 = vunpack.c.l.b16 %v4223
          %v4448 = vunpack.c.l.b16 %v4224
          %v4449 = vunpack.c.l.b16 %v4225
          %v4450 = vunpack.c.l.b16 %v4226
          %v4451 = vunpack.c.l.b16 %v4227
          %v4452 = vunpack.c.l.b16 %v4228
          %v4453 = vunpack.c.l.b16 %v4229
          %v4454 = vunpack.c.l.b16 %v4230
          %v4455 = vunpack.c.l.b16 %v4231
          %v4456 = vunpack.c.l.b16 %v4232
          %v4457 = vunpack.c.l.b16 %v4233
          %v4458 = vunpack.c.l.b16 %v4234
          %v4459 = vunpack.c.l.b16 %v4235
          %v4460 = vunpack.c.l.b16 %v4236
          %v4461 = vunpack.c.l.b16 %v4237
          %v4462 = vunpack.c.l.b16 %v4238
          %v4463 = vunpack.c.l.b16 %v4239
          %v4464 = vunpack.c.l.b16 %v4240
          %v4465 = vunpack.c.l.b16 %v4241
          %v4466 = vunpack.c.l.b16 %v4242
          %v4467 = vunpack.c.l.b16 %v4243
          %v4468 = vunpack.c.l.b16 %v4244
          %v4469 = vunpack.c.l.b16 %v4245
          %v4470 = vunpack.c.l.b16 %v4246
          %v4471 = vunpack.c.l.b16 %v4247
          %v4472 = vunpack.c.l.b16 %v4248
          %v4473 = vunpack.c.l.b16 %v4249
          %v4474 = vunpack.c.l.b16 %v4250
          %v4475 = vunpack.c.l.b16 %v4251
          %v4476 = vpack.c.b16 %v4429, %v4428
          %v4477 = vpack.c.b16 %v4431, %v4430
          %v4478 = vpack.c.b16 %v4433, %v4432
          %v4479 = vpack.c.b16 %v4435, %v4434
          %v4480 = vpack.c.b16 %v4437, %v4436
          %v4481 = vpack.c.b16 %v4439, %v4438
          %v4482 = vpack.c.b16 %v4441, %v4440
          %v4483 = vpack.c.b16 %v4443, %v4442
          %v4484 = vpack.c.b16 %v4445, %v4444
          %v4485 = vpack.c.b16 %v4447, %v4446
          %v4486 = vpack.c.b16 %v4449, %v4448
          %v4487 = vpack.c.b16 %v4451, %v4450
          %v4488 = vpack.c.b16 %v4453, %v4452
          %v4489 = vpack.c.b16 %v4455, %v4454
          %v4490 = vpack.c.b16 %v4457, %v4456
          %v4491 = vpack.c.b16 %v4459, %v4458
          %v4492 = vpack.c.b16 %v4461, %v4460
          %v4493 = vpack.c.b16 %v4463, %v4462
          %v4494 = vpack.c.b16 %v4465, %v4464
          %v4495 = vpack.c.b16 %v4467, %v4466
          %v4496 = vpack.c.b16 %v4469, %v4468
          %v4497 = vpack.c.b16 %v4471, %v4470
          %v4498 = vpack.c.b16 %v4473, %v4472
          %v4499 = vpack.c.b16 %v4475, %v4474
          %4524 = vmatpush.bf16.msra.mxu0 %v4483
          %4525 = vmatpush.bf16.msra.mxu0 %v4482
          %4526 = vmatpush.bf16.msra.mxu0 %v4481
          %4527 = vmatpush.bf16.msra.mxu0 %v4480
          %4528 = vmatpush.bf16.msra.mxu0 %v4479
          %4529 = vmatpush.bf16.msra.mxu0 %v4478
          %4530 = vmatpush.bf16.msra.mxu0 %v4477
          %4531 = vmatpush.bf16.msra.mxu0 %v4476
          %4532 = vmatmul.bf16.gmra.mxu0 %v4332
          %v4533 = vpop.f32.mrf.mxu0
          %v4534 = vadd.f32 0.0, %v4533
          %v4535 = vpop.f32.mrf.mxu0
          %v4536 = vadd.f32 0.0, %v4535
          %4537 = vmatmul.bf16.gmra.mxu0 %v4335
          %v4538 = vpop.f32.mrf.mxu0
          %v4539 = vadd.f32 0.0, %v4538
          %v4540 = vpop.f32.mrf.mxu0
          %v4541 = vadd.f32 0.0, %v4540
          %4542 = vmatmul.bf16.gmra.mxu0 %v4338
          %v4543 = vpop.f32.mrf.mxu0
          %v4544 = vadd.f32 0.0, %v4543
          %v4545 = vpop.f32.mrf.mxu0
          %v4546 = vadd.f32 0.0, %v4545
          %4547 = vmatmul.bf16.gmra.mxu0 %v4341
          %v4548 = vpop.f32.mrf.mxu0
          %v4549 = vadd.f32 0.0, %v4548
          %v4550 = vpop.f32.mrf.mxu0
          %v4551 = vadd.f32 0.0, %v4550
          %4552 = vmatmul.bf16.gmra.mxu0 %v4344
          %v4553 = vpop.f32.mrf.mxu0
          %v4554 = vadd.f32 0.0, %v4553
          %v4555 = vpop.f32.mrf.mxu0
          %v4556 = vadd.f32 0.0, %v4555
          %4557 = vmatmul.bf16.gmra.mxu0 %v4347
          %v4558 = vpop.f32.mrf.mxu0
          %v4559 = vadd.f32 0.0, %v4558
          %v4560 = vpop.f32.mrf.mxu0
          %v4561 = vadd.f32 0.0, %v4560
          %4562 = vmatmul.bf16.gmra.mxu0 %v4350
          %v4563 = vpop.f32.mrf.mxu0
          %v4564 = vadd.f32 0.0, %v4563
          %v4565 = vpop.f32.mrf.mxu0
          %v4566 = vadd.f32 0.0, %v4565
          %4567 = vmatmul.bf16.gmra.mxu0 %v4353
          %v4568 = vpop.f32.mrf.mxu0
          %v4569 = vadd.f32 0.0, %v4568
          %v4570 = vpop.f32.mrf.mxu0
          %v4571 = vadd.f32 0.0, %v4570
          %4572 = vdwg.mxu0
          %4573 = vmatpush.bf16.msra.mxu0 %v4491
          %4574 = vmatpush.bf16.msra.mxu0 %v4490
          %4575 = vmatpush.bf16.msra.mxu0 %v4489
          %4576 = vmatpush.bf16.msra.mxu0 %v4488
          %4577 = vmatpush.bf16.msra.mxu0 %v4487
          %4578 = vmatpush.bf16.msra.mxu0 %v4486
          %4579 = vmatpush.bf16.msra.mxu0 %v4485
          %4580 = vmatpush.bf16.msra.mxu0 %v4484
          %4581 = vmatmul.bf16.gmra.mxu0 %v4333
          %v4582 = vpop.f32.mrf.mxu0
          %v4583 = vadd.f32 %v4534, %v4582
          %v4584 = vpop.f32.mrf.mxu0
          %v4585 = vadd.f32 %v4536, %v4584
          %4586 = vmatmul.bf16.gmra.mxu0 %v4336
          %v4587 = vpop.f32.mrf.mxu0
          %v4588 = vadd.f32 %v4539, %v4587
          %v4589 = vpop.f32.mrf.mxu0
          %v4590 = vadd.f32 %v4541, %v4589
          %4591 = vmatmul.bf16.gmra.mxu0 %v4339
          %v4592 = vpop.f32.mrf.mxu0
          %v4593 = vadd.f32 %v4544, %v4592
          %v4594 = vpop.f32.mrf.mxu0
          %v4595 = vadd.f32 %v4546, %v4594
          %4596 = vmatmul.bf16.gmra.mxu0 %v4342
          %v4597 = vpop.f32.mrf.mxu0
          %v4598 = vadd.f32 %v4549, %v4597
          %v4599 = vpop.f32.mrf.mxu0
          %v4600 = vadd.f32 %v4551, %v4599
          %4601 = vmatmul.bf16.gmra.mxu0 %v4345
          %v4602 = vpop.f32.mrf.mxu0
          %v4603 = vadd.f32 %v4554, %v4602
          %v4604 = vpop.f32.mrf.mxu0
          %v4605 = vadd.f32 %v4556, %v4604
          %4606 = vmatmul.bf16.gmra.mxu0 %v4348
          %v4607 = vpop.f32.mrf.mxu0
          %v4608 = vadd.f32 %v4559, %v4607
          %v4609 = vpop.f32.mrf.mxu0
          %v4610 = vadd.f32 %v4561, %v4609
          %4611 = vmatmul.bf16.gmra.mxu0 %v4351
          %v4612 = vpop.f32.mrf.mxu0
          %v4613 = vadd.f32 %v4564, %v4612
          %v4614 = vpop.f32.mrf.mxu0
          %v4615 = vadd.f32 %v4566, %v4614
          %4616 = vmatmul.bf16.gmra.mxu0 %v4354
          %v4617 = vpop.f32.mrf.mxu0
          %v4618 = vadd.f32 %v4569, %v4617
          %v4619 = vpop.f32.mrf.mxu0
          %v4620 = vadd.f32 %v4571, %v4619
          %4621 = vdwg.mxu0
          %4622 = vmatpush.bf16.msra.mxu0 %v4499
          %4623 = vmatpush.bf16.msra.mxu0 %v4498
          %4624 = vmatpush.bf16.msra.mxu0 %v4497
          %4625 = vmatpush.bf16.msra.mxu0 %v4496
          %4626 = vmatpush.bf16.msra.mxu0 %v4495
          %4627 = vmatpush.bf16.msra.mxu0 %v4494
          %4628 = vmatpush.bf16.msra.mxu0 %v4493
          %4629 = vmatpush.bf16.msra.mxu0 %v4492
          %4630 = vmatmul.bf16.gmra.mxu0 %v4334
          %v4631 = vpop.f32.mrf.mxu0
          %v4632 = vadd.f32 %v4583, %v4631
          %v4633 = vpop.f32.mrf.mxu0
          %v4634 = vadd.f32 %v4585, %v4633
          %4635 = vmatmul.bf16.gmra.mxu0 %v4337
          %v4636 = vpop.f32.mrf.mxu0
          %v4637 = vadd.f32 %v4588, %v4636
          %v4638 = vpop.f32.mrf.mxu0
          %v4639 = vadd.f32 %v4590, %v4638
          %4640 = vmatmul.bf16.gmra.mxu0 %v4340
          %v4641 = vpop.f32.mrf.mxu0
          %v4642 = vadd.f32 %v4593, %v4641
          %v4643 = vpop.f32.mrf.mxu0
          %v4644 = vadd.f32 %v4595, %v4643
          %4645 = vmatmul.bf16.gmra.mxu0 %v4343
          %v4646 = vpop.f32.mrf.mxu0
          %v4647 = vadd.f32 %v4598, %v4646
          %v4648 = vpop.f32.mrf.mxu0
          %v4649 = vadd.f32 %v4600, %v4648
          %4650 = vmatmul.bf16.gmra.mxu0 %v4346
          %v4651 = vpop.f32.mrf.mxu0
          %v4652 = vadd.f32 %v4603, %v4651
          %v4653 = vpop.f32.mrf.mxu0
          %v4654 = vadd.f32 %v4605, %v4653
          %4655 = vmatmul.bf16.gmra.mxu0 %v4349
          %v4656 = vpop.f32.mrf.mxu0
          %v4657 = vadd.f32 %v4608, %v4656
          %v4658 = vpop.f32.mrf.mxu0
          %v4659 = vadd.f32 %v4610, %v4658
          %4660 = vmatmul.bf16.gmra.mxu0 %v4352
          %v4661 = vpop.f32.mrf.mxu0
          %v4662 = vadd.f32 %v4613, %v4661
          %v4663 = vpop.f32.mrf.mxu0
          %v4664 = vadd.f32 %v4615, %v4663
          %4665 = vmatmul.bf16.gmra.mxu0 %v4355
          %v4666 = vpop.f32.mrf.mxu0
          %v4667 = vadd.f32 %v4618, %v4666
          %v4668 = vpop.f32.mrf.mxu0
          %v4669 = vadd.f32 %v4620, %v4668
          %4670 = vdwg.mxu0
          %v4671 = vadd.f32 %v4152, %v4632
          %v4672 = vadd.f32 %v4153, %v4634
          %v4673 = vadd.f32 %v4154, %v4637
          %v4674 = vadd.f32 %v4155, %v4639
          %v4675 = vadd.f32 %v4156, %v4642
          %v4676 = vadd.f32 %v4157, %v4644
          %v4677 = vadd.f32 %v4158, %v4647
          %v4678 = vadd.f32 %v4159, %v4649
          %v4679 = vadd.f32 %v4160, %v4652
          %v4680 = vadd.f32 %v4161, %v4654
          %v4681 = vadd.f32 %v4162, %v4657
          %v4682 = vadd.f32 %v4163, %v4659
          %v4683 = vadd.f32 %v4164, %v4662
          %v4684 = vadd.f32 %v4165, %v4664
          %v4685 = vadd.f32 %v4166, %v4667
          %v4686 = vadd.f32 %v4167, %v4669
          %s4687 = sadd.s32 6, %s3649
          %s4688 = smul.addr %s4687, 4
          %s4689 = scalar_lea.vmem [#allocation2], %s4688
          %v4690 = vld [vmem:[%s4689] sm:$0xff]
          %v4691 = vld [vmem:[%s4689 + $0x8] sm:$0xf]
          %v4692 = vld [vmem:[%s4689 + $0xc] sm:$0xff]
          %v4693 = vld [vmem:[%s4689 + $0x14] sm:$0xf]
          %v4694 = vld [vmem:[%s4689 + $0x18] sm:$0xff]
          %v4695 = vld [vmem:[%s4689 + $0x20] sm:$0xf]
          %v4696 = vld [vmem:[%s4689 + $0x24] sm:$0xff]
          %v4697 = vld [vmem:[%s4689 + $0x2c] sm:$0xf]
          %v4698 = vld [vmem:[%s4689 + $0x30] sm:$0xff]
          %v4699 = vld [vmem:[%s4689 + $0x38] sm:$0xf]
          %v4700 = vld [vmem:[%s4689 + $0x3c] sm:$0xff]
          %v4701 = vld [vmem:[%s4689 + $0x44] sm:$0xf]
          %v4702 = vld [vmem:[%s4689 + $0x48] sm:$0xff]
          %v4703 = vld [vmem:[%s4689 + $0x50] sm:$0xf]
          %v4704 = vld [vmem:[%s4689 + $0x54] sm:$0xff]
          %v4705 = vld [vmem:[%s4689 + $0x5c] sm:$0xf]
          %v4706 = vld [vmem:[%s4689 + $0x78] sm:$0xff]
          %v4707 = vld [vmem:[%s4689 + $0x80] sm:$0xf]
          %v4708 = vld [vmem:[%s4689 + $0x84] sm:$0xff]
          %v4709 = vld [vmem:[%s4689 + $0x8c] sm:$0xf]
          %v4710 = vld [vmem:[%s4689 + $0x90] sm:$0xff]
          %v4711 = vld [vmem:[%s4689 + $0x98] sm:$0xf]
          %v4712 = vld [vmem:[%s4689 + $0x9c] sm:$0xff]
          %v4713 = vld [vmem:[%s4689 + $0xa4] sm:$0xf]
          %v4714 = vld [vmem:[%s4689 + $0xa8] sm:$0xff]
          %v4715 = vld [vmem:[%s4689 + $0xb0] sm:$0xf]
          %v4716 = vld [vmem:[%s4689 + $0xb4] sm:$0xff]
          %v4717 = vld [vmem:[%s4689 + $0xbc] sm:$0xf]
          %v4718 = vld [vmem:[%s4689 + $0xc0] sm:$0xff]
          %v4719 = vld [vmem:[%s4689 + $0xc8] sm:$0xf]
          %v4720 = vld [vmem:[%s4689 + $0xcc] sm:$0xff]
          %v4721 = vld [vmem:[%s4689 + $0xd4] sm:$0xf]
          %s4722 = scalar_lea.vmem [#allocation6], 1536
          %v4723 = vld [vmem:[%s4722] sm:$0xf]
          %v4724 = vld [vmem:[%s4722 + $0x4] sm:$0xf]
          %v4725 = vld [vmem:[%s4722 + $0x8] sm:$0xf]
          %v4726 = vld [vmem:[%s4722 + $0xc] sm:$0xf]
          %v4727 = vld [vmem:[%s4722 + $0x10] sm:$0xf]
          %v4728 = vld [vmem:[%s4722 + $0x14] sm:$0xf]
          %v4729 = vld [vmem:[%s4722 + $0x18] sm:$0xf]
          %v4730 = vld [vmem:[%s4722 + $0x1c] sm:$0xf]
          %v4731 = vld [vmem:[%s4722 + $0x20] sm:$0xf]
          %v4732 = vld [vmem:[%s4722 + $0x24] sm:$0xf]
          %v4733 = vld [vmem:[%s4722 + $0x28] sm:$0xf]
          %v4734 = vld [vmem:[%s4722 + $0x2c] sm:$0xf]
          %v4735 = vld [vmem:[%s4722 + $0x30] sm:$0xf]
          %v4736 = vld [vmem:[%s4722 + $0x34] sm:$0xf]
          %v4737 = vld [vmem:[%s4722 + $0x38] sm:$0xf]
          %v4738 = vld [vmem:[%s4722 + $0x3c] sm:$0xf]
          %v4739 = vld [vmem:[%s4722 + $0x40] sm:$0xf]
          %v4740 = vld [vmem:[%s4722 + $0x44] sm:$0xf]
          %v4741 = vld [vmem:[%s4722 + $0x48] sm:$0xf]
          %v4742 = vld [vmem:[%s4722 + $0x4c] sm:$0xf]
          %v4743 = vld [vmem:[%s4722 + $0x50] sm:$0xf]
          %v4744 = vld [vmem:[%s4722 + $0x54] sm:$0xf]
          %v4745 = vld [vmem:[%s4722 + $0x58] sm:$0xf]
          %v4746 = vld [vmem:[%s4722 + $0x5c] sm:$0xf]
          %v4747 = vld [vmem:[%s4722 + $0x60] sm:$0xf]
          %v4748 = vld [vmem:[%s4722 + $0x64] sm:$0xf]
          %v4749 = vld [vmem:[%s4722 + $0x68] sm:$0xf]
          %v4750 = vld [vmem:[%s4722 + $0x6c] sm:$0xf]
          %v4751 = vld [vmem:[%s4722 + $0x70] sm:$0xf]
          %v4752 = vld [vmem:[%s4722 + $0x74] sm:$0xf]
          %v4753 = vld [vmem:[%s4722 + $0x78] sm:$0xf]
          %v4754 = vld [vmem:[%s4722 + $0x7c] sm:$0xf]
          %v4755 = vld [vmem:[%s4722 + $0x80] sm:$0xf]
          %v4756 = vld [vmem:[%s4722 + $0x84] sm:$0xf]
          %v4757 = vld [vmem:[%s4722 + $0x88] sm:$0xf]
          %v4758 = vld [vmem:[%s4722 + $0x8c] sm:$0xf]
          %v4759 = vld [vmem:[%s4722 + $0x90] sm:$0xf]
          %v4760 = vld [vmem:[%s4722 + $0x94] sm:$0xf]
          %v4761 = vld [vmem:[%s4722 + $0x98] sm:$0xf]
          %v4762 = vld [vmem:[%s4722 + $0x9c] sm:$0xf]
          %v4763 = vld [vmem:[%s4722 + $0xa0] sm:$0xf]
          %v4764 = vld [vmem:[%s4722 + $0xa4] sm:$0xf]
          %v4765 = vld [vmem:[%s4722 + $0xa8] sm:$0xf]
          %v4766 = vld [vmem:[%s4722 + $0xac] sm:$0xf]
          %v4767 = vld [vmem:[%s4722 + $0xb0] sm:$0xf]
          %v4768 = vld [vmem:[%s4722 + $0xb4] sm:$0xf]
          %v4769 = vld [vmem:[%s4722 + $0xb8] sm:$0xf]
          %v4770 = vld [vmem:[%s4722 + $0xbc] sm:$0xf]
          %v4803 = vunpack.c.l.b16 %v4690
          %v4804 = vunpack.c.h.b16 %v4690
          %v4805 = vunpack.c.l.b16 %v4691
          %v4806 = vunpack.c.l.b16 %v4692
          %v4807 = vunpack.c.h.b16 %v4692
          %v4808 = vunpack.c.l.b16 %v4693
          %v4809 = vunpack.c.l.b16 %v4694
          %v4810 = vunpack.c.h.b16 %v4694
          %v4811 = vunpack.c.l.b16 %v4695
          %v4812 = vunpack.c.l.b16 %v4696
          %v4813 = vunpack.c.h.b16 %v4696
          %v4814 = vunpack.c.l.b16 %v4697
          %v4815 = vunpack.c.l.b16 %v4698
          %v4816 = vunpack.c.h.b16 %v4698
          %v4817 = vunpack.c.l.b16 %v4699
          %v4818 = vunpack.c.l.b16 %v4700
          %v4819 = vunpack.c.h.b16 %v4700
          %v4820 = vunpack.c.l.b16 %v4701
          %v4821 = vunpack.c.l.b16 %v4702
          %v4822 = vunpack.c.h.b16 %v4702
          %v4823 = vunpack.c.l.b16 %v4703
          %v4824 = vunpack.c.l.b16 %v4704
          %v4825 = vunpack.c.h.b16 %v4704
          %v4826 = vunpack.c.l.b16 %v4705
          %v4827 = vunpack.c.l.b16 %v4706
          %v4828 = vunpack.c.h.b16 %v4706
          %v4829 = vunpack.c.l.b16 %v4707
          %v4830 = vunpack.c.l.b16 %v4708
          %v4831 = vunpack.c.h.b16 %v4708
          %v4832 = vunpack.c.l.b16 %v4709
          %v4833 = vunpack.c.l.b16 %v4710
          %v4834 = vunpack.c.h.b16 %v4710
          %v4835 = vunpack.c.l.b16 %v4711
          %v4836 = vunpack.c.l.b16 %v4712
          %v4837 = vunpack.c.h.b16 %v4712
          %v4838 = vunpack.c.l.b16 %v4713
          %v4839 = vunpack.c.l.b16 %v4714
          %v4840 = vunpack.c.h.b16 %v4714
          %v4841 = vunpack.c.l.b16 %v4715
          %v4842 = vunpack.c.l.b16 %v4716
          %v4843 = vunpack.c.h.b16 %v4716
          %v4844 = vunpack.c.l.b16 %v4717
          %v4845 = vunpack.c.l.b16 %v4718
          %v4846 = vunpack.c.h.b16 %v4718
          %v4847 = vunpack.c.l.b16 %v4719
          %v4848 = vunpack.c.l.b16 %v4720
          %v4849 = vunpack.c.h.b16 %v4720
          %v4850 = vunpack.c.l.b16 %v4721
          %v4851 = vpack.c.b16 %v4806, %v4803
          %v4852 = vpack.c.b16 %v4807, %v4804
          %v4853 = vpack.c.b16 %v4808, %v4805
          %v4854 = vpack.c.b16 %v4812, %v4809
          %v4855 = vpack.c.b16 %v4813, %v4810
          %v4856 = vpack.c.b16 %v4814, %v4811
          %v4857 = vpack.c.b16 %v4818, %v4815
          %v4858 = vpack.c.b16 %v4819, %v4816
          %v4859 = vpack.c.b16 %v4820, %v4817
          %v4860 = vpack.c.b16 %v4824, %v4821
          %v4861 = vpack.c.b16 %v4825, %v4822
          %v4862 = vpack.c.b16 %v4826, %v4823
          %v4863 = vpack.c.b16 %v4830, %v4827
          %v4864 = vpack.c.b16 %v4831, %v4828
          %v4865 = vpack.c.b16 %v4832, %v4829
          %v4866 = vpack.c.b16 %v4836, %v4833
          %v4867 = vpack.c.b16 %v4837, %v4834
          %v4868 = vpack.c.b16 %v4838, %v4835
          %v4869 = vpack.c.b16 %v4842, %v4839
          %v4870 = vpack.c.b16 %v4843, %v4840
          %v4871 = vpack.c.b16 %v4844, %v4841
          %v4872 = vpack.c.b16 %v4848, %v4845
          %v4873 = vpack.c.b16 %v4849, %v4846
          %v4874 = vpack.c.b16 %v4850, %v4847
          %v4947 = vunpack.c.l.b16 %v4723
          %v4948 = vunpack.c.l.b16 %v4724
          %v4949 = vunpack.c.l.b16 %v4725
          %v4950 = vunpack.c.l.b16 %v4726
          %v4951 = vunpack.c.l.b16 %v4727
          %v4952 = vunpack.c.l.b16 %v4728
          %v4953 = vunpack.c.l.b16 %v4729
          %v4954 = vunpack.c.l.b16 %v4730
          %v4955 = vunpack.c.l.b16 %v4731
          %v4956 = vunpack.c.l.b16 %v4732
          %v4957 = vunpack.c.l.b16 %v4733
          %v4958 = vunpack.c.l.b16 %v4734
          %v4959 = vunpack.c.l.b16 %v4735
          %v4960 = vunpack.c.l.b16 %v4736
          %v4961 = vunpack.c.l.b16 %v4737
          %v4962 = vunpack.c.l.b16 %v4738
          %v4963 = vunpack.c.l.b16 %v4739
          %v4964 = vunpack.c.l.b16 %v4740
          %v4965 = vunpack.c.l.b16 %v4741
          %v4966 = vunpack.c.l.b16 %v4742
          %v4967 = vunpack.c.l.b16 %v4743
          %v4968 = vunpack.c.l.b16 %v4744
          %v4969 = vunpack.c.l.b16 %v4745
          %v4970 = vunpack.c.l.b16 %v4746
          %v4971 = vunpack.c.l.b16 %v4747
          %v4972 = vunpack.c.l.b16 %v4748
          %v4973 = vunpack.c.l.b16 %v4749
          %v4974 = vunpack.c.l.b16 %v4750
          %v4975 = vunpack.c.l.b16 %v4751
          %v4976 = vunpack.c.l.b16 %v4752
          %v4977 = vunpack.c.l.b16 %v4753
          %v4978 = vunpack.c.l.b16 %v4754
          %v4979 = vunpack.c.l.b16 %v4755
          %v4980 = vunpack.c.l.b16 %v4756
          %v4981 = vunpack.c.l.b16 %v4757
          %v4982 = vunpack.c.l.b16 %v4758
          %v4983 = vunpack.c.l.b16 %v4759
          %v4984 = vunpack.c.l.b16 %v4760
          %v4985 = vunpack.c.l.b16 %v4761
          %v4986 = vunpack.c.l.b16 %v4762
          %v4987 = vunpack.c.l.b16 %v4763
          %v4988 = vunpack.c.l.b16 %v4764
          %v4989 = vunpack.c.l.b16 %v4765
          %v4990 = vunpack.c.l.b16 %v4766
          %v4991 = vunpack.c.l.b16 %v4767
          %v4992 = vunpack.c.l.b16 %v4768
          %v4993 = vunpack.c.l.b16 %v4769
          %v4994 = vunpack.c.l.b16 %v4770
          %v4995 = vpack.c.b16 %v4948, %v4947
          %v4996 = vpack.c.b16 %v4950, %v4949
          %v4997 = vpack.c.b16 %v4952, %v4951
          %v4998 = vpack.c.b16 %v4954, %v4953
          %v4999 = vpack.c.b16 %v4956, %v4955
          %v5000 = vpack.c.b16 %v4958, %v4957
          %v5001 = vpack.c.b16 %v4960, %v4959
          %v5002 = vpack.c.b16 %v4962, %v4961
          %v5003 = vpack.c.b16 %v4964, %v4963
          %v5004 = vpack.c.b16 %v4966, %v4965
          %v5005 = vpack.c.b16 %v4968, %v4967
          %v5006 = vpack.c.b16 %v4970, %v4969
          %v5007 = vpack.c.b16 %v4972, %v4971
          %v5008 = vpack.c.b16 %v4974, %v4973
          %v5009 = vpack.c.b16 %v4976, %v4975
          %v5010 = vpack.c.b16 %v4978, %v4977
          %v5011 = vpack.c.b16 %v4980, %v4979
          %v5012 = vpack.c.b16 %v4982, %v4981
          %v5013 = vpack.c.b16 %v4984, %v4983
          %v5014 = vpack.c.b16 %v4986, %v4985
          %v5015 = vpack.c.b16 %v4988, %v4987
          %v5016 = vpack.c.b16 %v4990, %v4989
          %v5017 = vpack.c.b16 %v4992, %v4991
          %v5018 = vpack.c.b16 %v4994, %v4993
          %5043 = vmatpush.bf16.msra.mxu0 %v5002
          %5044 = vmatpush.bf16.msra.mxu0 %v5001
          %5045 = vmatpush.bf16.msra.mxu0 %v5000
          %5046 = vmatpush.bf16.msra.mxu0 %v4999
          %5047 = vmatpush.bf16.msra.mxu0 %v4998
          %5048 = vmatpush.bf16.msra.mxu0 %v4997
          %5049 = vmatpush.bf16.msra.mxu0 %v4996
          %5050 = vmatpush.bf16.msra.mxu0 %v4995
          %5051 = vmatmul.bf16.gmra.mxu0 %v4851
          %v5052 = vpop.f32.mrf.mxu0
          %v5053 = vadd.f32 0.0, %v5052
          %v5054 = vpop.f32.mrf.mxu0
          %v5055 = vadd.f32 0.0, %v5054
          %5056 = vmatmul.bf16.gmra.mxu0 %v4854
          %v5057 = vpop.f32.mrf.mxu0
          %v5058 = vadd.f32 0.0, %v5057
          %v5059 = vpop.f32.mrf.mxu0
          %v5060 = vadd.f32 0.0, %v5059
          %5061 = vmatmul.bf16.gmra.mxu0 %v4857
          %v5062 = vpop.f32.mrf.mxu0
          %v5063 = vadd.f32 0.0, %v5062
          %v5064 = vpop.f32.mrf.mxu0
          %v5065 = vadd.f32 0.0, %v5064
          %5066 = vmatmul.bf16.gmra.mxu0 %v4860
          %v5067 = vpop.f32.mrf.mxu0
          %v5068 = vadd.f32 0.0, %v5067
          %v5069 = vpop.f32.mrf.mxu0
          %v5070 = vadd.f32 0.0, %v5069
          %5071 = vmatmul.bf16.gmra.mxu0 %v4863
          %v5072 = vpop.f32.mrf.mxu0
          %v5073 = vadd.f32 0.0, %v5072
          %v5074 = vpop.f32.mrf.mxu0
          %v5075 = vadd.f32 0.0, %v5074
          %5076 = vmatmul.bf16.gmra.mxu0 %v4866
          %v5077 = vpop.f32.mrf.mxu0
          %v5078 = vadd.f32 0.0, %v5077
          %v5079 = vpop.f32.mrf.mxu0
          %v5080 = vadd.f32 0.0, %v5079
          %5081 = vmatmul.bf16.gmra.mxu0 %v4869
          %v5082 = vpop.f32.mrf.mxu0
          %v5083 = vadd.f32 0.0, %v5082
          %v5084 = vpop.f32.mrf.mxu0
          %v5085 = vadd.f32 0.0, %v5084
          %5086 = vmatmul.bf16.gmra.mxu0 %v4872
          %v5087 = vpop.f32.mrf.mxu0
          %v5088 = vadd.f32 0.0, %v5087
          %v5089 = vpop.f32.mrf.mxu0
          %v5090 = vadd.f32 0.0, %v5089
          %5091 = vdwg.mxu0
          %5092 = vmatpush.bf16.msra.mxu0 %v5010
          %5093 = vmatpush.bf16.msra.mxu0 %v5009
          %5094 = vmatpush.bf16.msra.mxu0 %v5008
          %5095 = vmatpush.bf16.msra.mxu0 %v5007
          %5096 = vmatpush.bf16.msra.mxu0 %v5006
          %5097 = vmatpush.bf16.msra.mxu0 %v5005
          %5098 = vmatpush.bf16.msra.mxu0 %v5004
          %5099 = vmatpush.bf16.msra.mxu0 %v5003
          %5100 = vmatmul.bf16.gmra.mxu0 %v4852
          %v5101 = vpop.f32.mrf.mxu0
          %v5102 = vadd.f32 %v5053, %v5101
          %v5103 = vpop.f32.mrf.mxu0
          %v5104 = vadd.f32 %v5055, %v5103
          %5105 = vmatmul.bf16.gmra.mxu0 %v4855
          %v5106 = vpop.f32.mrf.mxu0
          %v5107 = vadd.f32 %v5058, %v5106
          %v5108 = vpop.f32.mrf.mxu0
          %v5109 = vadd.f32 %v5060, %v5108
          %5110 = vmatmul.bf16.gmra.mxu0 %v4858
          %v5111 = vpop.f32.mrf.mxu0
          %v5112 = vadd.f32 %v5063, %v5111
          %v5113 = vpop.f32.mrf.mxu0
          %v5114 = vadd.f32 %v5065, %v5113
          %5115 = vmatmul.bf16.gmra.mxu0 %v4861
          %v5116 = vpop.f32.mrf.mxu0
          %v5117 = vadd.f32 %v5068, %v5116
          %v5118 = vpop.f32.mrf.mxu0
          %v5119 = vadd.f32 %v5070, %v5118
          %5120 = vmatmul.bf16.gmra.mxu0 %v4864
          %v5121 = vpop.f32.mrf.mxu0
          %v5122 = vadd.f32 %v5073, %v5121
          %v5123 = vpop.f32.mrf.mxu0
          %v5124 = vadd.f32 %v5075, %v5123
          %5125 = vmatmul.bf16.gmra.mxu0 %v4867
          %v5126 = vpop.f32.mrf.mxu0
          %v5127 = vadd.f32 %v5078, %v5126
          %v5128 = vpop.f32.mrf.mxu0
          %v5129 = vadd.f32 %v5080, %v5128
          %5130 = vmatmul.bf16.gmra.mxu0 %v4870
          %v5131 = vpop.f32.mrf.mxu0
          %v5132 = vadd.f32 %v5083, %v5131
          %v5133 = vpop.f32.mrf.mxu0
          %v5134 = vadd.f32 %v5085, %v5133
          %5135 = vmatmul.bf16.gmra.mxu0 %v4873
          %v5136 = vpop.f32.mrf.mxu0
          %v5137 = vadd.f32 %v5088, %v5136
          %v5138 = vpop.f32.mrf.mxu0
          %v5139 = vadd.f32 %v5090, %v5138
          %5140 = vdwg.mxu0
          %5141 = vmatpush.bf16.msra.mxu0 %v5018
          %5142 = vmatpush.bf16.msra.mxu0 %v5017
          %5143 = vmatpush.bf16.msra.mxu0 %v5016
          %5144 = vmatpush.bf16.msra.mxu0 %v5015
          %5145 = vmatpush.bf16.msra.mxu0 %v5014
          %5146 = vmatpush.bf16.msra.mxu0 %v5013
          %5147 = vmatpush.bf16.msra.mxu0 %v5012
          %5148 = vmatpush.bf16.msra.mxu0 %v5011
          %5149 = vmatmul.bf16.gmra.mxu0 %v4853
          %v5150 = vpop.f32.mrf.mxu0
          %v5151 = vadd.f32 %v5102, %v5150
          %v5152 = vpop.f32.mrf.mxu0
          %v5153 = vadd.f32 %v5104, %v5152
          %5154 = vmatmul.bf16.gmra.mxu0 %v4856
          %v5155 = vpop.f32.mrf.mxu0
          %v5156 = vadd.f32 %v5107, %v5155
          %v5157 = vpop.f32.mrf.mxu0
          %v5158 = vadd.f32 %v5109, %v5157
          %5159 = vmatmul.bf16.gmra.mxu0 %v4859
          %v5160 = vpop.f32.mrf.mxu0
          %v5161 = vadd.f32 %v5112, %v5160
          %v5162 = vpop.f32.mrf.mxu0
          %v5163 = vadd.f32 %v5114, %v5162
          %5164 = vmatmul.bf16.gmra.mxu0 %v4862
          %v5165 = vpop.f32.mrf.mxu0
          %v5166 = vadd.f32 %v5117, %v5165
          %v5167 = vpop.f32.mrf.mxu0
          %v5168 = vadd.f32 %v5119, %v5167
          %5169 = vmatmul.bf16.gmra.mxu0 %v4865
          %v5170 = vpop.f32.mrf.mxu0
          %v5171 = vadd.f32 %v5122, %v5170
          %v5172 = vpop.f32.mrf.mxu0
          %v5173 = vadd.f32 %v5124, %v5172
          %5174 = vmatmul.bf16.gmra.mxu0 %v4868
          %v5175 = vpop.f32.mrf.mxu0
          %v5176 = vadd.f32 %v5127, %v5175
          %v5177 = vpop.f32.mrf.mxu0
          %v5178 = vadd.f32 %v5129, %v5177
          %5179 = vmatmul.bf16.gmra.mxu0 %v4871
          %v5180 = vpop.f32.mrf.mxu0
          %v5181 = vadd.f32 %v5132, %v5180
          %v5182 = vpop.f32.mrf.mxu0
          %v5183 = vadd.f32 %v5134, %v5182
          %5184 = vmatmul.bf16.gmra.mxu0 %v4874
          %v5185 = vpop.f32.mrf.mxu0
          %v5186 = vadd.f32 %v5137, %v5185
          %v5187 = vpop.f32.mrf.mxu0
          %v5188 = vadd.f32 %v5139, %v5187
          %5189 = vdwg.mxu0
          %v5190 = vadd.f32 %v4671, %v5151
          %v5191 = vadd.f32 %v4672, %v5153
          %v5192 = vadd.f32 %v4673, %v5156
          %v5193 = vadd.f32 %v4674, %v5158
          %v5194 = vadd.f32 %v4675, %v5161
          %v5195 = vadd.f32 %v4676, %v5163
          %v5196 = vadd.f32 %v4677, %v5166
          %v5197 = vadd.f32 %v4678, %v5168
          %v5198 = vadd.f32 %v4679, %v5171
          %v5199 = vadd.f32 %v4680, %v5173
          %v5200 = vadd.f32 %v4681, %v5176
          %v5201 = vadd.f32 %v4682, %v5178
          %v5202 = vadd.f32 %v4683, %v5181
          %v5203 = vadd.f32 %v4684, %v5183
          %v5204 = vadd.f32 %v4685, %v5186
          %v5205 = vadd.f32 %v4686, %v5188
          %s5206 = smul.u32 %s565, 64
          %s5207 = scalar_lea.vmem %s204, %s5206 [#allocation3]
          %v5208 = vld [vmem:[%s5207] sm:$0xff]
          %v5209 = vld [vmem:[%s5207 + $0x8] sm:$0xff]
          %v5210 = vld [vmem:[%s5207 + $0x10] sm:$0xff]
          %v5211 = vld [vmem:[%s5207 + $0x18] sm:$0xff]
          %v5212 = vld [vmem:[%s5207 + $0x20] sm:$0xff]
          %v5213 = vld [vmem:[%s5207 + $0x28] sm:$0xff]
          %v5214 = vld [vmem:[%s5207 + $0x30] sm:$0xff]
          %v5215 = vld [vmem:[%s5207 + $0x38] sm:$0xff]
          %v5216 = vld [vmem:[%s5207 + $0x40] sm:$0xff]
          %v5217 = vld [vmem:[%s5207 + $0x48] sm:$0xff]
          %v5218 = vld [vmem:[%s5207 + $0x50] sm:$0xff]
          %v5219 = vld [vmem:[%s5207 + $0x58] sm:$0xff]
          %v5220 = vld [vmem:[%s5207 + $0x60] sm:$0xff]
          %v5221 = vld [vmem:[%s5207 + $0x68] sm:$0xff]
          %v5222 = vld [vmem:[%s5207 + $0x70] sm:$0xff]
          %v5223 = vld [vmem:[%s5207 + $0x78] sm:$0xff]
          %v5224 = vadd.f32 %v5190, %v5208
          %v5225 = vadd.f32 %v5191, %v5209
          %v5226 = vadd.f32 %v5192, %v5210
          %v5227 = vadd.f32 %v5193, %v5211
          %v5228 = vadd.f32 %v5194, %v5212
          %v5229 = vadd.f32 %v5195, %v5213
          %v5230 = vadd.f32 %v5196, %v5214
          %v5231 = vadd.f32 %v5197, %v5215
          %v5232 = vadd.f32 %v5198, %v5216
          %v5233 = vadd.f32 %v5199, %v5217
          %v5234 = vadd.f32 %v5200, %v5218
          %v5235 = vadd.f32 %v5201, %v5219
          %v5236 = vadd.f32 %v5202, %v5220
          %v5237 = vadd.f32 %v5203, %v5221
          %v5238 = vadd.f32 %v5204, %v5222
          %v5239 = vadd.f32 %v5205, %v5223
          %s5240 = scalar_lea.vmem %s234, %s5206 [#allocation8]
          %5241 = vst [vmem:[%s5240] sm:$0xff] %v5224
          %5242 = vst [vmem:[%s5240 + $0x8] sm:$0xff] %v5225
          %5243 = vst [vmem:[%s5240 + $0x10] sm:$0xff] %v5226
          %5244 = vst [vmem:[%s5240 + $0x18] sm:$0xff] %v5227
          %5245 = vst [vmem:[%s5240 + $0x20] sm:$0xff] %v5228
          %5246 = vst [vmem:[%s5240 + $0x28] sm:$0xff] %v5229
          %5247 = vst [vmem:[%s5240 + $0x30] sm:$0xff] %v5230
          %5248 = vst [vmem:[%s5240 + $0x38] sm:$0xff] %v5231
          %5249 = vst [vmem:[%s5240 + $0x40] sm:$0xff] %v5232
          %5250 = vst [vmem:[%s5240 + $0x48] sm:$0xff] %v5233
          %5251 = vst [vmem:[%s5240 + $0x50] sm:$0xff] %v5234
          %5252 = vst [vmem:[%s5240 + $0x58] sm:$0xff] %v5235
          %5253 = vst [vmem:[%s5240 + $0x60] sm:$0xff] %v5236
          %5254 = vst [vmem:[%s5240 + $0x68] sm:$0xff] %v5237
          %5255 = vst [vmem:[%s5240 + $0x70] sm:$0xff] %v5238
          %5256 = vst [vmem:[%s5240 + $0x78] sm:$0xff] %v5239
        $region56: #{tpu_custom_call.1} parent=35 // loop_footer
          %s564 = sadd.s32 1, %s560
        $region57: #{tpu_custom_call.1} parent=35 // loop_footer_branch
          %559 = sbr.rel target = $region53
        $region58: #{tpu_custom_call.1} parent=35 // loop_exit
          _
        %s5257 = sand.u32 %s119, 1
        %s5258 = scalar_lea.sflag [#allocation5], %s5257
        %s5259 = sand.u32 %s119, 1
        %s5260 = smul.addr %s5259, 512
        %s5261 = scalar_lea.vmem [#allocation8], %s5260
        // Predicated region
        $region59: #{tpu_custom_call.1} parent=35 // pred_check
          %p5262 = pneg %p129
        $region60: #{tpu_custom_call.1} parent=35 // pred_check_branch
          %5264 = sbr.rel (%p5262) target = $region62
        $region61: #{tpu_custom_call.1} parent=35 // pred_region
          %5266 = vsyncadd %s5258, 0
          %s5267 = smul.addr %s22, 64
          %s5268 = smul.addr %s5267, 8
          %s5269 = scalar_lea.hbm %s4, %s5268
          %s5270 = sshll.u32 %s5261, 4
          %s5271 = int_to_ptr.vmem [resolvable:$true] %s5270
          %s5272 = sshll.u32 %s5269, 4
          %s5273 = int_to_ptr.hbm [resolvable:$true] %s5272
          %5278 = dma.vmem_to_hbm [thread:$0]  %s5271, 8192, %s5273, %s5258, 128, 128, 8
        $region62: #{tpu_custom_call.1} parent=35 // pred_fallthru
          _
      $region36: #{tpu_custom_call.1} parent=5 // pred_fallthru
        _
      %p5279 = scmp.le.s32.totalorder 2, %s17
      // Predicated region
      $region63: #{tpu_custom_call.1} parent=5 // pred_check
        %p5280 = pneg %p5279
      $region64: #{tpu_custom_call.1} parent=5 // pred_check_branch
        %5282 = sbr.rel (%p5280) target = $region66
      $region65: #{tpu_custom_call.1} parent=5 // pred_region
        %s5283 = ssub.s32 %s17, 2
        // Predicated region
        $region67: #{tpu_custom_call.1} parent=65 // pred_check
          %p5284 = pneg %p135
        $region68: #{tpu_custom_call.1} parent=65 // pred_check_branch
          %5286 = sbr.rel (%p5284) target = $region70
        $region69: #{tpu_custom_call.1} parent=65 // pred_region
          %s5287 = sand.u32 %s120, 1
          %s5288 = scalar_lea.sflag [#allocation5], %s5287
          %s5289 = sand.u32 %s120, 1
          %s5290 = smul.addr %s5289, 512
          %s5291 = scalar_lea.vmem [#allocation8], %s5290
          %5293 = dma.done %s5288, 8192
        $region70: #{tpu_custom_call.1} parent=65 // pred_fallthru
          _
      $region66: #{tpu_custom_call.1} parent=5 // pred_fallthru
        _
    $region6: #{tpu_custom_call.1} parent=1 // loop_footer
      %s21 = sadd.s32 1, %s17
    $region7: #{tpu_custom_call.1} parent=1 // loop_footer_branch
      %16 = sbr.rel target = $region3
    $region8: #{tpu_custom_call.1} parent=1 // loop_exit
      _
    %5294 = vsyncpa [#allocation4], 1
    %s5295 = scalar_lea.sflag [#allocation4], 1
    %5296 = vsyncpa %s5295, 1
    %5297 = vsyncpa [#allocation7], 1
    %5298 = vsyncpa [#allocation5], 1
    %s5299 = scalar_lea.sflag [#allocation5], 1
    %5300 = vsyncpa %s5299, 1

</llo_original>
